<compile_context>
chip_gen: v5e
topology: v5e:2x2
jax: 0.10.0
libtpu: 0.0.40
codegen_flags: <defaults>
</compile_context>

<pallas_src>
import functools

import jax
import jax.numpy as jnp
from jax import lax
from jax.experimental import pallas as pl
from jax.experimental.pallas import tpu as pltpu


def _round_up(x, m):
    return ((x + m - 1) // m) * m


# ---------------------------------------------------------------------------
# T-chunk-streamed bidirectional LSTM recurrence kernel
# (optionally fused with mean pooling + linear head on the last layer)
# ---------------------------------------------------------------------------
def _make_bilstm_kernel(*, T_pad, B, H, chunk, fuse_head):
    n_chunks = T_pad // chunk

    def kernel(pre_f_ref, pre_b_ref, whh_f_ref, whh_b_ref, len_ref, *rest):
        if fuse_head:
            (wout_f_ref, wout_b_ref, bout_ref, logits_ref,
             h_f, c_f, h_b, c_b, sum_f, sum_b) = rest
        else:
            (out_f_ref, out_b_ref, h_f, c_f, h_b, c_b) = rest

        chunk_id = pl.program_id(0)

        @pl.when(chunk_id == 0)
        def _init():
            h_f[...] = jnp.zeros_like(h_f)
            c_f[...] = jnp.zeros_like(c_f)
            h_b[...] = jnp.zeros_like(h_b)
            c_b[...] = jnp.zeros_like(c_b)
            if fuse_head:
                sum_f[...] = jnp.zeros_like(sum_f)
                sum_b[...] = jnp.zeros_like(sum_b)

        # ---- loop invariants hoisted out of the recurrence ----
        lens = len_ref[...]                      # (B, 1) int32
        w_hh_f = whh_f_ref[...]                  # (H, 4H) bf16 (MXU operand only)
        w_hh_b = whh_b_ref[...]
        t_base = chunk_id * chunk

        def cell(gates, c_prev):
            # gate column order is (i, f, o, g): sigmoids contiguous, tanh last slice.
            sig = jax.nn.sigmoid(gates[:, 0:3 * H])
            g = jnp.tanh(gates[:, 3 * H:4 * H])
            c_new = sig[:, H:2 * H] * c_prev + sig[:, 0:H] * g
            h_new = sig[:, 2 * H:3 * H] * jnp.tanh(c_new)
            return h_new, c_new

        def step(s, carry):
            t_f = t_base + s                      # global forward timestep
            t_b = (T_pad - 1) - t_f               # global backward timestep
            row_f = pl.multiple_of(s * B, B)
            row_b = pl.multiple_of((chunk - 1 - s) * B, B)

            hf_prev = h_f[...]
            cf_prev = c_f[...]
            hb_prev = h_b[...]
            cb_prev = c_b[...]

            gates_f = (jnp.dot(hf_prev.astype(jnp.bfloat16), w_hh_f,
                               preferred_element_type=jnp.float32)
                       + pre_f_ref[pl.ds(row_f, B), :])
            gates_b = (jnp.dot(hb_prev.astype(jnp.bfloat16), w_hh_b,
                               preferred_element_type=jnp.float32)
                       + pre_b_ref[pl.ds(row_b, B), :])

            hf_new, cf_new = cell(gates_f, cf_prev)
            hb_new, cb_new = cell(gates_b, cb_prev)

            valid_f = t_f < lens                  # (B, 1) bool
            valid_b = t_b < lens

            h_f[...] = jnp.where(valid_f, hf_new, hf_prev)
            c_f[...] = jnp.where(valid_f, cf_new, cf_prev)
            h_b[...] = jnp.where(valid_b, hb_new, hb_prev)
            c_b[...] = jnp.where(valid_b, cb_new, cb_prev)

            hf_out = jnp.where(valid_f, hf_new, 0.0)
            hb_out = jnp.where(valid_b, hb_new, 0.0)

            if fuse_head:
                # running masked sums for mean pooling (no (T,B,2H) HBM writeback)
                sum_f[...] = sum_f[...] + hf_out
                sum_b[...] = sum_b[...] + hb_out
            else:
                out_f_ref[pl.ds(row_f, B), :] = hf_out
                out_b_ref[pl.ds(row_b, B), :] = hb_out
            return carry

        lax.fori_loop(0, chunk, step, 0, unroll=4)

        if fuse_head:
            @pl.when(chunk_id == n_chunks - 1)
            def _finish():
                denom = jnp.maximum(lens.astype(jnp.float32), 1.0)   # padded rows: len 0
                pooled_f = sum_f[...] / denom
                pooled_b = sum_b[...] / denom
                logits_ref[...] = (
                    jnp.dot(pooled_f, wout_f_ref[...],
                            preferred_element_type=jnp.float32)
                    + jnp.dot(pooled_b, wout_b_ref[...],
                              preferred_element_type=jnp.float32)
                    + bout_ref[...])

    return kernel


# ---------------------------------------------------------------------------
# pallas_call wrappers
# ---------------------------------------------------------------------------
def _common_specs(T_pad, B_pad, H, chunk):
    n_chunks = T_pad // chunk
    CB = chunk * B_pad
    in_specs = [
        pl.BlockSpec((CB, 4 * H), lambda t: (t, 0)),                  # fwd pre chunk
        pl.BlockSpec((CB, 4 * H), lambda t: (n_chunks - 1 - t, 1)),   # bwd pre chunk
        pl.BlockSpec((H, 4 * H), lambda t: (0, 0)),                   # W_hh fwd (bf16)
        pl.BlockSpec((H, 4 * H), lambda t: (0, 0)),                   # W_hh bwd (bf16)
        pl.BlockSpec((B_pad, 1), lambda t: (0, 0)),                   # lengths
    ]
    scratch = [pltpu.VMEM((B_pad, H), jnp.float32) for _ in range(4)]  # h_f c_f h_b c_b
    return n_chunks, CB, in_specs, scratch


def _cost_estimate(T_pad, B_pad, H, L=0):
    flops = 16 * T_pad * B_pad * H * H + (4 * B_pad * H * L if L else 0)
    transc = 10 * T_pad * B_pad * H
    bytes_acc = 4 * T_pad * B_pad * (8 * H + 2 * H) + 2 * (2 * H * 4 * H)
    return pl.CostEstimate(flops=int(flops), transcendentals=int(transc),
                           bytes_accessed=int(bytes_acc))


def _compiler_params(block_bytes):
    # >= the 32 MiB scoped default (raises v5e's 16 MiB), capped at v7x's 64 MiB physical.
    limit = int(min(max(2 * block_bytes + (8 << 20), 32 << 20), 64 << 20))
    return pltpu.CompilerParams(dimension_semantics=("arbitrary",),
                                vmem_limit_bytes=limit)


def _bilstm_layer(pre, whh_f_bf, whh_b_bf, len2d, *, T_pad, B_pad, H, chunk):
    n_chunks, CB, in_specs, scratch = _common_specs(T_pad, B_pad, H, chunk)
    out_specs = [
        pl.BlockSpec((CB, H), lambda t: (t, 0)),                      # fwd hidden chunk
        pl.BlockSpec((CB, H), lambda t: (n_chunks - 1 - t, 0)),       # bwd hidden chunk
    ]
    out_shape = [jax.ShapeDtypeStruct((T_pad * B_pad, H), jnp.float32)] * 2
    block_bytes = (2 * CB * 4 * H * 4 + 2 * H * 4 * H * 2 + B_pad * 4
                   + 2 * CB * H * 4 + 4 * B_pad * H * 4)
    return pl.pallas_call(
        _make_bilstm_kernel(T_pad=T_pad, B=B_pad, H=H, chunk=chunk, fuse_head=False),
        grid=(n_chunks,),
        in_specs=in_specs,
        out_specs=out_specs,
        out_shape=out_shape,
        scratch_shapes=scratch,
        compiler_params=_compiler_params(block_bytes),
        cost_estimate=_cost_estimate(T_pad, B_pad, H),
    )(pre, pre, whh_f_bf, whh_b_bf, len2d)


def _bilstm_final(pre, whh_f_bf, whh_b_bf, len2d, w_out_f, w_out_b, b_out, *,
                  T_pad, B_pad, H, chunk):
    n_chunks, CB, in_specs, scratch = _common_specs(T_pad, B_pad, H, chunk)
    L = w_out_f.shape[1]
    in_specs = in_specs + [
        pl.BlockSpec((H, L), lambda t: (0, 0)),                       # w_out fwd half
        pl.BlockSpec((H, L), lambda t: (0, 0)),                       # w_out bwd half
        pl.BlockSpec((1, L), lambda t: (0, 0)),                       # b_out
    ]
    scratch = scratch + [pltpu.VMEM((B_pad, H), jnp.float32) for _ in range(2)]
    block_bytes = (2 * CB * 4 * H * 4 + 2 * H * 4 * H * 2 + B_pad * 4
                   + 2 * H * L * 4 + L * 4 + B_pad * L * 4 + 6 * B_pad * H * 4)
    return pl.pallas_call(
        _make_bilstm_kernel(T_pad=T_pad, B=B_pad, H=H, chunk=chunk, fuse_head=True),
        grid=(n_chunks,),
        in_specs=in_specs,
        out_specs=pl.BlockSpec((B_pad, L), lambda t: (0, 0)),
        out_shape=jax.ShapeDtypeStruct((B_pad, L), jnp.float32),
        scratch_shapes=scratch,
        compiler_params=_compiler_params(block_bytes),
        cost_estimate=_cost_estimate(T_pad, B_pad, H, L=L),
    )(pre, pre, whh_f_bf, whh_b_bf, len2d, w_out_f, w_out_b, b_out)


# ---------------------------------------------------------------------------
# Forward pass (mean pooling, targets=None)
# ---------------------------------------------------------------------------
@functools.partial(jax.jit, static_argnames=("chunk_size",))
def bilstm_forward(params, sequence_batch, sequence_lengths, chunk_size=64):
    """Pallas implementation of BiLSTM.forward (pooling='mean', targets=None).

    sequence_batch  : (B, T) int32 token ids
    sequence_lengths: (B,)   int32 valid lengths
    returns (predictions, logits)
    """
    B, T = sequence_batch.shape
    num_layers = len(params["lstm"])                   # static (Python list length)
    H = params["lstm"][0]["whh_f"].shape[0]
    assert (4 * H) % 128 == 0, "hidden_size must be a multiple of 32 (f32 lane tiling)"

    chunk = max(1, min(chunk_size, T))
    B_pad = _round_up(B, 8)                            # f32 sublane multiple
    T_pad = _round_up(T, chunk)

    # Embedding gather produced directly time-major: (T, B, E). input_dropout p=0 -> id.
    emb_t = params["embeddings"][sequence_batch.T].astype(jnp.float32)
    x = jnp.pad(emb_t, ((0, T_pad - T), (0, B_pad - B), (0, 0)))
    len2d = jnp.pad(sequence_lengths.astype(jnp.int32),
                    (0, B_pad - B)).reshape(B_pad, 1)  # padded rows get length 0

    xf = x.reshape(T_pad * B_pad, -1)                  # layer 0 input (T*B, E)
    xb = None
    logits_padded = None

    for li, lw in enumerate(params["lstm"]):
        # Single fused input-projection matmul per layer (review opt #1):
        # wih_cat (Din, 8H): columns [0:4H] fwd gates, [4H:8H] bwd gates, order (i,f,o,g).
        wih_cat = jnp.concatenate([lw["wih_f"], lw["wih_b"]], axis=1)
        b_cat = jnp.concatenate([lw["b_f"], lw["b_b"]], axis=1)
        if li == 0:
            pre = jnp.dot(xf, wih_cat, preferred_element_type=jnp.float32) + b_cat
        else:
            # previous layer delivered fwd/bwd features as two lane-dense arrays
            pre = (jnp.dot(xf, wih_cat[:H], preferred_element_type=jnp.float32)
                   + jnp.dot(xb, wih_cat[H:], preferred_element_type=jnp.float32)
                   + b_cat)

        whh_f_bf = lw["whh_f"].astype(jnp.bfloat16)
        whh_b_bf = lw["whh_b"].astype(jnp.bfloat16)

        if li < num_layers - 1:
            xf, xb = _bilstm_layer(pre, whh_f_bf, whh_b_bf, len2d,
                                   T_pad=T_pad, B_pad=B_pad, H=H, chunk=chunk)
        else:
            logits_padded = _bilstm_final(pre, whh_f_bf, whh_b_bf, len2d,
                                          params["w_out"][:H], params["w_out"][H:],
                                          params["b_out"],
                                          T_pad=T_pad, B_pad=B_pad, H=H, chunk=chunk)

    logits = logits_padded[:B]                         # (B, L)
    predictions = jnp.argmax(logits, axis=1)
    # output_dropout p=0 -> identity; targets is None -> loss is None.
    return predictions, logits


# ---------------------------------------------------------------------------
# Deterministic parameter construction (PyTorch-like uniform init)
# ---------------------------------------------------------------------------
def _reorder_gates(w, H):
    """Permute gate blocks along the last (4H) axis: PyTorch (i,f,g,o) -> kernel (i,f,o,g)."""
    return jnp.concatenate([w[..., 0:2 * H], w[..., 3 * H:4 * H], w[..., 2 * H:3 * H]],
                           axis=-1)


def make_params(key, vocab_size, embed_dim, hidden_size, num_labels, num_layers):
    keys = jax.random.split(key, 64)
    ki = iter(range(64))
    bound = 1.0 / (hidden_size ** 0.5)
    H = hidden_size

    def uni(k, shape):
        return jax.random.uniform(k, shape, jnp.float32, -bound, bound)

    params = {
        "embeddings": jax.random.normal(keys[next(ki)], (vocab_size, embed_dim),
                                        jnp.float32),
        "lstm": [],
    }
    for layer in range(num_layers):
        d_in = embed_dim if layer == 0 else 2 * hidden_size
        lw = {}
        for d in ("f", "b"):
            w_ih = uni(keys[next(ki)], (d_in, 4 * H))      # built in torch (i,f,g,o) order
            w_hh = uni(keys[next(ki)], (H, 4 * H))
            b_ih = uni(keys[next(ki)], (1, 4 * H))
            b_hh = uni(keys[next(ki)], (1, 4 * H))
            # consistent gate permutation of W_ih, W_hh AND bias -> kernel (i,f,o,g) layout
            lw[f"wih_{d}"] = _reorder_gates(w_ih, H)
            lw[f"whh_{d}"] = _reorder_gates(w_hh, H)
            lw[f"b_{d}"] = _reorder_gates(b_ih + b_hh, H)
        params["lstm"].append(lw)

    params["w_out"] = uni(keys[next(ki)], (2 * H, num_labels))
    params["b_out"] = uni(keys[next(ki)], (1, num_labels))
    return params


# ---------------------------------------------------------------------------
if __name__ == "__main__":
    VOCAB = 20
    EMBED_DIM = 16
    HIDDEN = 32
    NUM_LABELS = 4
    NUM_LAYERS = 2
    B, T = 2, 8

    key = jax.random.PRNGKey(0)
    k_param, k_seq = jax.random.split(key)

    params = make_params(k_param, VOCAB, EMBED_DIM, HIDDEN, NUM_LABELS, NUM_LAYERS)

    sequence_batch = jax.random.randint(k_seq, (B, T), 0, VOCAB, dtype=jnp.int32)
    sequence_lengths = jnp.array([T, 5], dtype=jnp.int32)   # variable lengths

    # chunk_size=4 -> 2 T-chunks, exercising the streamed (pipelined) recurrence path.
    predictions, logits = bilstm_forward(params, sequence_batch, sequence_lengths,
                                         chunk_size=4)
    jax.block_until_ready((predictions, logits))

    assert logits.shape == (B, NUM_LABELS)
    assert predictions.shape == (B,)
    assert bool(jnp.all(jnp.isfinite(logits)))
    print("KERNEL_OK")
</pallas_src>

<mosaic_0001>
module attributes {stable_mosaic.version = 11 : i64} {
  func.func @kernel(%arg0: i32, %arg1: memref<32x128xf32, #tpu.memory_space<vmem>>, %arg2: memref<32x128xf32, #tpu.memory_space<vmem>>, %arg3: memref<32x128xbf16, #tpu.memory_space<vmem>>, %arg4: memref<32x128xbf16, #tpu.memory_space<vmem>>, %arg5: memref<8x1xi32, #tpu.memory_space<vmem>>, %arg6: memref<32x32xf32, #tpu.memory_space<vmem>>, %arg7: memref<32x32xf32, #tpu.memory_space<vmem>>, %arg8: memref<8x32xf32, #tpu.memory_space<vmem>>, %arg9: memref<8x32xf32, #tpu.memory_space<vmem>>, %arg10: memref<8x32xf32, #tpu.memory_space<vmem>>, %arg11: memref<8x32xf32, #tpu.memory_space<vmem>>) attributes {dimension_semantics = [#tpu.dimension_semantics<arbitrary>], iteration_bounds = array<i64: 2>, scalar_prefetch = 0 : i64, scratch_operands = 4 : i64, tpu.core_type = #tpu.core_type<tc>, window_params = [{transform_indices = @transform_0, window_bounds = array<i64: 32, 128>}, {transform_indices = @transform_1, window_bounds = array<i64: 32, 128>}, {pipeline_mode = #tpu.pipeline_mode<synchronous>, transform_indices = @transform_2, window_bounds = array<i64: 32, 128>}, {pipeline_mode = #tpu.pipeline_mode<synchronous>, transform_indices = @transform_3, window_bounds = array<i64: 32, 128>}, {pipeline_mode = #tpu.pipeline_mode<synchronous>, transform_indices = @transform_4, window_bounds = array<i64: 8, 1>}, {transform_indices = @transform_5, window_bounds = array<i64: 32, 32>}, {transform_indices = @transform_6, window_bounds = array<i64: 32, 32>}]} {
    %c0_i32 = arith.constant 0 : i32
    %0 = arith.cmpi eq, %arg0, %c0_i32 : i32
    %1 = arith.extui %0 : i1 to i32
    %c0_i32_0 = arith.constant 0 : i32
    %2 = arith.cmpi ne, %1, %c0_i32_0 : i32
    scf.if %2 {
      %cst_125 = arith.constant 0.000000e+00 : f32
      %347 = vector.broadcast %cst_125 : f32 to vector<8x32xf32>
      %c0_126 = arith.constant 0 : index
      %c0_127 = arith.constant 0 : index
      %348 = vector.load %arg8[%c0_126, %c0_127] : memref<8x32xf32, #tpu.memory_space<vmem>>, vector<8x32xf32>
      tpu.vector_store %arg8[%c0_126, %c0_127], %347 {strides = array<i32>} : memref<8x32xf32, #tpu.memory_space<vmem>>, vector<8x32xf32>,
      %cst_128 = arith.constant 0.000000e+00 : f32
      %349 = vector.broadcast %cst_128 : f32 to vector<8x32xf32>
      %c0_129 = arith.constant 0 : index
      %c0_130 = arith.constant 0 : index
      %350 = vector.load %arg9[%c0_129, %c0_130] : memref<8x32xf32, #tpu.memory_space<vmem>>, vector<8x32xf32>
      tpu.vector_store %arg9[%c0_129, %c0_130], %349 {strides = array<i32>} : memref<8x32xf32, #tpu.memory_space<vmem>>, vector<8x32xf32>,
      %cst_131 = arith.constant 0.000000e+00 : f32
      %351 = vector.broadcast %cst_131 : f32 to vector<8x32xf32>
      %c0_132 = arith.constant 0 : index
      %c0_133 = arith.constant 0 : index
      %352 = vector.load %arg10[%c0_132, %c0_133] : memref<8x32xf32, #tpu.memory_space<vmem>>, vector<8x32xf32>
      tpu.vector_store %arg10[%c0_132, %c0_133], %351 {strides = array<i32>} : memref<8x32xf32, #tpu.memory_space<vmem>>, vector<8x32xf32>,
      %cst_134 = arith.constant 0.000000e+00 : f32
      %353 = vector.broadcast %cst_134 : f32 to vector<8x32xf32>
      %c0_135 = arith.constant 0 : index
      %c0_136 = arith.constant 0 : index
      %354 = vector.load %arg11[%c0_135, %c0_136] : memref<8x32xf32, #tpu.memory_space<vmem>>, vector<8x32xf32>
      tpu.vector_store %arg11[%c0_135, %c0_136], %353 {strides = array<i32>} : memref<8x32xf32, #tpu.memory_space<vmem>>, vector<8x32xf32>,
    } else {
    }
    %c0 = arith.constant 0 : index
    %c0_1 = arith.constant 0 : index
    %3 = vector.load %arg5[%c0, %c0_1] : memref<8x1xi32, #tpu.memory_space<vmem>>, vector<8x1xi32>
    %c0_2 = arith.constant 0 : index
    %c0_3 = arith.constant 0 : index
    %4 = vector.load %arg3[%c0_2, %c0_3] : memref<32x128xbf16, #tpu.memory_space<vmem>>, vector<32x128xbf16>
    %c0_4 = arith.constant 0 : index
    %c0_5 = arith.constant 0 : index
    %5 = vector.load %arg4[%c0_4, %c0_5] : memref<32x128xbf16, #tpu.memory_space<vmem>>, vector<32x128xbf16>
    %c4_i32 = arith.constant 4 : i32
    %6 = arith.muli %arg0, %c4_i32 : i32
    %c0_i32_6 = arith.constant 0 : i32
    %7 = arith.addi %6, %c0_i32_6 : i32
    %c7_i32 = arith.constant 7 : i32
    %8 = arith.subi %c7_i32, %7 : i32
    %c8_i32 = arith.constant 8 : i32
    %9 = arith.muli %c0_i32_6, %c8_i32 : i32
    %10 = tpu.assume_multiple %9, 8 : i32
    %c3_i32 = arith.constant 3 : i32
    %11 = arith.subi %c3_i32, %c0_i32_6 : i32
    %c8_i32_7 = arith.constant 8 : i32
    %12 = arith.muli %11, %c8_i32_7 : i32
    %13 = tpu.assume_multiple %12, 8 : i32
    %c0_8 = arith.constant 0 : index
    %c0_9 = arith.constant 0 : index
    %14 = vector.load %arg8[%c0_8, %c0_9] : memref<8x32xf32, #tpu.memory_space<vmem>>, vector<8x32xf32>
    %c0_10 = arith.constant 0 : index
    %c0_11 = arith.constant 0 : index
    %15 = vector.load %arg9[%c0_10, %c0_11] : memref<8x32xf32, #tpu.memory_space<vmem>>, vector<8x32xf32>
    %c0_12 = arith.constant 0 : index
    %c0_13 = arith.constant 0 : index
    %16 = vector.load %arg10[%c0_12, %c0_13] : memref<8x32xf32, #tpu.memory_space<vmem>>, vector<8x32xf32>
    %c0_14 = arith.constant 0 : index
    %c0_15 = arith.constant 0 : index
    %17 = vector.load %arg11[%c0_14, %c0_15] : memref<8x32xf32, #tpu.memory_space<vmem>>, vector<8x32xf32>
    %18 = arith.truncf %14 : vector<8x32xf32> to vector<8x32xbf16>
    %cst = arith.constant dense<0.000000e+00> : vector<8x128xf32>
    %19 = tpu.matmul %18, %4, %cst {dimension_numbers = #tpu.dot_dimension_numbers<[1], [0], [0], [1], [0, 0, 1, 1], [], []>} : vector<8x32xbf16>, vector<32x128xbf16>, vector<8x128xf32> -> vector<8x128xf32>
    %20 = arith.index_cast %10 : i32 to index
    %c0_16 = arith.constant 0 : index
    %21 = vector.load %arg1[%20, %c0_16] : memref<32x128xf32, #tpu.memory_space<vmem>>, vector<8x128xf32>
    %22 = arith.addf %19, %21 : vector<8x128xf32>
    %23 = arith.truncf %16 : vector<8x32xf32> to vector<8x32xbf16>
    %cst_17 = arith.constant dense<0.000000e+00> : vector<8x128xf32>
    %24 = tpu.matmul %23, %5, %cst_17 {dimension_numbers = #tpu.dot_dimension_numbers<[1], [0], [0], [1], [0, 0, 1, 1], [], []>} : vector<8x32xbf16>, vector<32x128xbf16>, vector<8x128xf32> -> vector<8x128xf32>
    %25 = arith.index_cast %13 : i32 to index
    %c0_18 = arith.constant 0 : index
    %26 = vector.load %arg2[%25, %c0_18] : memref<32x128xf32, #tpu.memory_space<vmem>>, vector<8x128xf32>
    %27 = arith.addf %24, %26 : vector<8x128xf32>
    %28 = vector.extract_strided_slice %22 {offsets = [0, 0], sizes = [8, 96], strides = [1, 1]} : vector<8x128xf32> to vector<8x96xf32>
    %29 = arith.negf %28 : vector<8x96xf32>
    %30 = math.exp %29 : vector<8x96xf32>
    %cst_19 = arith.constant 1.000000e+00 : f32
    %31 = vector.broadcast %cst_19 : f32 to vector<8x96xf32>
    %32 = arith.addf %31, %30 : vector<8x96xf32>
    %33 = arith.divf %31, %32 : vector<8x96xf32>
    %34 = vector.extract_strided_slice %22 {offsets = [0, 96], sizes = [8, 32], strides = [1, 1]} : vector<8x128xf32> to vector<8x32xf32>
    %35 = math.tanh %34 : vector<8x32xf32>
    %36 = vector.extract_strided_slice %33 {offsets = [0, 32], sizes = [8, 32], strides = [1, 1]} : vector<8x96xf32> to vector<8x32xf32>
    %37 = arith.mulf %36, %15 : vector<8x32xf32>
    %38 = vector.extract_strided_slice %33 {offsets = [0, 0], sizes = [8, 32], strides = [1, 1]} : vector<8x96xf32> to vector<8x32xf32>
    %39 = arith.mulf %38, %35 : vector<8x32xf32>
    %40 = arith.addf %37, %39 : vector<8x32xf32>
    %41 = vector.extract_strided_slice %33 {offsets = [0, 64], sizes = [8, 32], strides = [1, 1]} : vector<8x96xf32> to vector<8x32xf32>
    %42 = math.tanh %40 : vector<8x32xf32>
    %43 = arith.mulf %41, %42 : vector<8x32xf32>
    %44 = vector.extract_strided_slice %27 {offsets = [0, 0], sizes = [8, 96], strides = [1, 1]} : vector<8x128xf32> to vector<8x96xf32>
    %45 = arith.negf %44 : vector<8x96xf32>
    %46 = math.exp %45 : vector<8x96xf32>
    %cst_20 = arith.constant 1.000000e+00 : f32
    %47 = vector.broadcast %cst_20 : f32 to vector<8x96xf32>
    %48 = arith.addf %47, %46 : vector<8x96xf32>
    %49 = arith.divf %47, %48 : vector<8x96xf32>
    %50 = vector.extract_strided_slice %27 {offsets = [0, 96], sizes = [8, 32], strides = [1, 1]} : vector<8x128xf32> to vector<8x32xf32>
    %51 = math.tanh %50 : vector<8x32xf32>
    %52 = vector.extract_strided_slice %49 {offsets = [0, 32], sizes = [8, 32], strides = [1, 1]} : vector<8x96xf32> to vector<8x32xf32>
    %53 = arith.mulf %52, %17 : vector<8x32xf32>
    %54 = vector.extract_strided_slice %49 {offsets = [0, 0], sizes = [8, 32], strides = [1, 1]} : vector<8x96xf32> to vector<8x32xf32>
    %55 = arith.mulf %54, %51 : vector<8x32xf32>
    %56 = arith.addf %53, %55 : vector<8x32xf32>
    %57 = vector.extract_strided_slice %49 {offsets = [0, 64], sizes = [8, 32], strides = [1, 1]} : vector<8x96xf32> to vector<8x32xf32>
    %58 = math.tanh %56 : vector<8x32xf32>
    %59 = arith.mulf %57, %58 : vector<8x32xf32>
    %60 = vector.broadcast %7 : i32 to vector<8x1xi32>
    %61 = arith.cmpi slt, %60, %3 : vector<8x1xi32>
    %62 = vector.broadcast %8 : i32 to vector<8x1xi32>
    %63 = arith.cmpi slt, %62, %3 : vector<8x1xi32>
    %64 = vector.shape_cast %61 : vector<8x1xi1> to vector<8x1xi1>
    %65 = vector.broadcast %64 : vector<8x1xi1> to vector<8x32xi1>
    %66 = arith.select %65, %43, %14 : vector<8x32xi1>, vector<8x32xf32>
    %c0_21 = arith.constant 0 : index
    %c0_22 = arith.constant 0 : index
    %67 = vector.load %arg8[%c0_21, %c0_22] : memref<8x32xf32, #tpu.memory_space<vmem>>, vector<8x32xf32>
    tpu.vector_store %arg8[%c0_21, %c0_22], %66 {strides = array<i32>} : memref<8x32xf32, #tpu.memory_space<vmem>>, vector<8x32xf32>,
    %68 = vector.shape_cast %61 : vector<8x1xi1> to vector<8x1xi1>
    %69 = vector.broadcast %68 : vector<8x1xi1> to vector<8x32xi1>
    %70 = arith.select %69, %40, %15 : vector<8x32xi1>, vector<8x32xf32>
    %c0_23 = arith.constant 0 : index
    %c0_24 = arith.constant 0 : index
    %71 = vector.load %arg9[%c0_23, %c0_24] : memref<8x32xf32, #tpu.memory_space<vmem>>, vector<8x32xf32>
    tpu.vector_store %arg9[%c0_23, %c0_24], %70 {strides = array<i32>} : memref<8x32xf32, #tpu.memory_space<vmem>>, vector<8x32xf32>,
    %72 = vector.shape_cast %63 : vector<8x1xi1> to vector<8x1xi1>
    %73 = vector.broadcast %72 : vector<8x1xi1> to vector<8x32xi1>
    %74 = arith.select %73, %59, %16 : vector<8x32xi1>, vector<8x32xf32>
    %c0_25 = arith.constant 0 : index
    %c0_26 = arith.constant 0 : index
    %75 = vector.load %arg10[%c0_25, %c0_26] : memref<8x32xf32, #tpu.memory_space<vmem>>, vector<8x32xf32>
    tpu.vector_store %arg10[%c0_25, %c0_26], %74 {strides = array<i32>} : memref<8x32xf32, #tpu.memory_space<vmem>>, vector<8x32xf32>,
    %76 = vector.shape_cast %63 : vector<8x1xi1> to vector<8x1xi1>
    %77 = vector.broadcast %76 : vector<8x1xi1> to vector<8x32xi1>
    %78 = arith.select %77, %56, %17 : vector<8x32xi1>, vector<8x32xf32>
    %c0_27 = arith.constant 0 : index
    %c0_28 = arith.constant 0 : index
    %79 = vector.load %arg11[%c0_27, %c0_28] : memref<8x32xf32, #tpu.memory_space<vmem>>, vector<8x32xf32>
    tpu.vector_store %arg11[%c0_27, %c0_28], %78 {strides = array<i32>} : memref<8x32xf32, #tpu.memory_space<vmem>>, vector<8x32xf32>,
    %cst_29 = arith.constant 0.000000e+00 : f32
    %80 = vector.shape_cast %61 : vector<8x1xi1> to vector<8x1xi1>
    %81 = vector.broadcast %80 : vector<8x1xi1> to vector<8x32xi1>
    %82 = vector.broadcast %cst_29 : f32 to vector<8x32xf32>
    %83 = arith.select %81, %43, %82 : vector<8x32xi1>, vector<8x32xf32>
    %cst_30 = arith.constant 0.000000e+00 : f32
    %84 = vector.shape_cast %63 : vector<8x1xi1> to vector<8x1xi1>
    %85 = vector.broadcast %84 : vector<8x1xi1> to vector<8x32xi1>
    %86 = vector.broadcast %cst_30 : f32 to vector<8x32xf32>
    %87 = arith.select %85, %59, %86 : vector<8x32xi1>, vector<8x32xf32>
    %88 = arith.index_cast %10 : i32 to index
    %c0_31 = arith.constant 0 : index
    %89 = vector.load %arg6[%88, %c0_31] : memref<32x32xf32, #tpu.memory_space<vmem>>, vector<8x32xf32>
    tpu.vector_store %arg6[%88, %c0_31], %83 {strides = array<i32>} : memref<32x32xf32, #tpu.memory_space<vmem>>, vector<8x32xf32>,
    %90 = arith.index_cast %13 : i32 to index
    %c0_32 = arith.constant 0 : index
    %91 = vector.load %arg7[%90, %c0_32] : memref<32x32xf32, #tpu.memory_space<vmem>>, vector<8x32xf32>
    tpu.vector_store %arg7[%90, %c0_32], %87 {strides = array<i32>} : memref<32x32xf32, #tpu.memory_space<vmem>>, vector<8x32xf32>,
    %c1_i32 = arith.constant 1 : i32
    %92 = arith.addi %6, %c1_i32 : i32
    %c7_i32_33 = arith.constant 7 : i32
    %93 = arith.subi %c7_i32_33, %92 : i32
    %c8_i32_34 = arith.constant 8 : i32
    %94 = arith.muli %c1_i32, %c8_i32_34 : i32
    %95 = tpu.assume_multiple %94, 8 : i32
    %c3_i32_35 = arith.constant 3 : i32
    %96 = arith.subi %c3_i32_35, %c1_i32 : i32
    %c8_i32_36 = arith.constant 8 : i32
    %97 = arith.muli %96, %c8_i32_36 : i32
    %98 = tpu.assume_multiple %97, 8 : i32
    %c0_37 = arith.constant 0 : index
    %c0_38 = arith.constant 0 : index
    %99 = vector.load %arg8[%c0_37, %c0_38] : memref<8x32xf32, #tpu.memory_space<vmem>>, vector<8x32xf32>
    %c0_39 = arith.constant 0 : index
    %c0_40 = arith.constant 0 : index
    %100 = vector.load %arg9[%c0_39, %c0_40] : memref<8x32xf32, #tpu.memory_space<vmem>>, vector<8x32xf32>
    %c0_41 = arith.constant 0 : index
    %c0_42 = arith.constant 0 : index
    %101 = vector.load %arg10[%c0_41, %c0_42] : memref<8x32xf32, #tpu.memory_space<vmem>>, vector<8x32xf32>
    %c0_43 = arith.constant 0 : index
    %c0_44 = arith.constant 0 : index
    %102 = vector.load %arg11[%c0_43, %c0_44] : memref<8x32xf32, #tpu.memory_space<vmem>>, vector<8x32xf32>
    %103 = arith.truncf %99 : vector<8x32xf32> to vector<8x32xbf16>
    %cst_45 = arith.constant dense<0.000000e+00> : vector<8x128xf32>
    %104 = tpu.matmul %103, %4, %cst_45 {dimension_numbers = #tpu.dot_dimension_numbers<[1], [0], [0], [1], [0, 0, 1, 1], [], []>} : vector<8x32xbf16>, vector<32x128xbf16>, vector<8x128xf32> -> vector<8x128xf32>
    %105 = arith.index_cast %95 : i32 to index
    %c0_46 = arith.constant 0 : index
    %106 = vector.load %arg1[%105, %c0_46] : memref<32x128xf32, #tpu.memory_space<vmem>>, vector<8x128xf32>
    %107 = arith.addf %104, %106 : vector<8x128xf32>
    %108 = arith.truncf %101 : vector<8x32xf32> to vector<8x32xbf16>
    %cst_47 = arith.constant dense<0.000000e+00> : vector<8x128xf32>
    %109 = tpu.matmul %108, %5, %cst_47 {dimension_numbers = #tpu.dot_dimension_numbers<[1], [0], [0], [1], [0, 0, 1, 1], [], []>} : vector<8x32xbf16>, vector<32x128xbf16>, vector<8x128xf32> -> vector<8x128xf32>
    %110 = arith.index_cast %98 : i32 to index
    %c0_48 = arith.constant 0 : index
    %111 = vector.load %arg2[%110, %c0_48] : memref<32x128xf32, #tpu.memory_space<vmem>>, vector<8x128xf32>
    %112 = arith.addf %109, %111 : vector<8x128xf32>
    %113 = vector.extract_strided_slice %107 {offsets = [0, 0], sizes = [8, 96], strides = [1, 1]} : vector<8x128xf32> to vector<8x96xf32>
    %114 = arith.negf %113 : vector<8x96xf32>
    %115 = math.exp %114 : vector<8x96xf32>
    %cst_49 = arith.constant 1.000000e+00 : f32
    %116 = vector.broadcast %cst_49 : f32 to vector<8x96xf32>
    %117 = arith.addf %116, %115 : vector<8x96xf32>
    %118 = arith.divf %116, %117 : vector<8x96xf32>
    %119 = vector.extract_strided_slice %107 {offsets = [0, 96], sizes = [8, 32], strides = [1, 1]} : vector<8x128xf32> to vector<8x32xf32>
    %120 = math.tanh %119 : vector<8x32xf32>
    %121 = vector.extract_strided_slice %118 {offsets = [0, 32], sizes = [8, 32], strides = [1, 1]} : vector<8x96xf32> to vector<8x32xf32>
    %122 = arith.mulf %121, %100 : vector<8x32xf32>
    %123 = vector.extract_strided_slice %118 {offsets = [0, 0], sizes = [8, 32], strides = [1, 1]} : vector<8x96xf32> to vector<8x32xf32>
    %124 = arith.mulf %123, %120 : vector<8x32xf32>
    %125 = arith.addf %122, %124 : vector<8x32xf32>
    %126 = vector.extract_strided_slice %118 {offsets = [0, 64], sizes = [8, 32], strides = [1, 1]} : vector<8x96xf32> to vector<8x32xf32>
    %127 = math.tanh %125 : vector<8x32xf32>
    %128 = arith.mulf %126, %127 : vector<8x32xf32>
    %129 = vector.extract_strided_slice %112 {offsets = [0, 0], sizes = [8, 96], strides = [1, 1]} : vector<8x128xf32> to vector<8x96xf32>
    %130 = arith.negf %129 : vector<8x96xf32>
    %131 = math.exp %130 : vector<8x96xf32>
    %cst_50 = arith.constant 1.000000e+00 : f32
    %132 = vector.broadcast %cst_50 : f32 to vector<8x96xf32>
    %133 = arith.addf %132, %131 : vector<8x96xf32>
    %134 = arith.divf %132, %133 : vector<8x96xf32>
    %135 = vector.extract_strided_slice %112 {offsets = [0, 96], sizes = [8, 32], strides = [1, 1]} : vector<8x128xf32> to vector<8x32xf32>
    %136 = math.tanh %135 : vector<8x32xf32>
    %137 = vector.extract_strided_slice %134 {offsets = [0, 32], sizes = [8, 32], strides = [1, 1]} : vector<8x96xf32> to vector<8x32xf32>
    %138 = arith.mulf %137, %102 : vector<8x32xf32>
    %139 = vector.extract_strided_slice %134 {offsets = [0, 0], sizes = [8, 32], strides = [1, 1]} : vector<8x96xf32> to vector<8x32xf32>
    %140 = arith.mulf %139, %136 : vector<8x32xf32>
    %141 = arith.addf %138, %140 : vector<8x32xf32>
    %142 = vector.extract_strided_slice %134 {offsets = [0, 64], sizes = [8, 32], strides = [1, 1]} : vector<8x96xf32> to vector<8x32xf32>
    %143 = math.tanh %141 : vector<8x32xf32>
    %144 = arith.mulf %142, %143 : vector<8x32xf32>
    %145 = vector.broadcast %92 : i32 to vector<8x1xi32>
    %146 = arith.cmpi slt, %145, %3 : vector<8x1xi32>
    %147 = vector.broadcast %93 : i32 to vector<8x1xi32>
    %148 = arith.cmpi slt, %147, %3 : vector<8x1xi32>
    %149 = vector.shape_cast %146 : vector<8x1xi1> to vector<8x1xi1>
    %150 = vector.broadcast %149 : vector<8x1xi1> to vector<8x32xi1>
    %151 = arith.select %150, %128, %99 : vector<8x32xi1>, vector<8x32xf32>
    %c0_51 = arith.constant 0 : index
    %c0_52 = arith.constant 0 : index
    %152 = vector.load %arg8[%c0_51, %c0_52] : memref<8x32xf32, #tpu.memory_space<vmem>>, vector<8x32xf32>
    tpu.vector_store %arg8[%c0_51, %c0_52], %151 {strides = array<i32>} : memref<8x32xf32, #tpu.memory_space<vmem>>, vector<8x32xf32>,
    %153 = vector.shape_cast %146 : vector<8x1xi1> to vector<8x1xi1>
    %154 = vector.broadcast %153 : vector<8x1xi1> to vector<8x32xi1>
    %155 = arith.select %154, %125, %100 : vector<8x32xi1>, vector<8x32xf32>
    %c0_53 = arith.constant 0 : index
    %c0_54 = arith.constant 0 : index
    %156 = vector.load %arg9[%c0_53, %c0_54] : memref<8x32xf32, #tpu.memory_space<vmem>>, vector<8x32xf32>
    tpu.vector_store %arg9[%c0_53, %c0_54], %155 {strides = array<i32>} : memref<8x32xf32, #tpu.memory_space<vmem>>, vector<8x32xf32>,
    %157 = vector.shape_cast %148 : vector<8x1xi1> to vector<8x1xi1>
    %158 = vector.broadcast %157 : vector<8x1xi1> to vector<8x32xi1>
    %159 = arith.select %158, %144, %101 : vector<8x32xi1>, vector<8x32xf32>
    %c0_55 = arith.constant 0 : index
    %c0_56 = arith.constant 0 : index
    %160 = vector.load %arg10[%c0_55, %c0_56] : memref<8x32xf32, #tpu.memory_space<vmem>>, vector<8x32xf32>
    tpu.vector_store %arg10[%c0_55, %c0_56], %159 {strides = array<i32>} : memref<8x32xf32, #tpu.memory_space<vmem>>, vector<8x32xf32>,
    %161 = vector.shape_cast %148 : vector<8x1xi1> to vector<8x1xi1>
    %162 = vector.broadcast %161 : vector<8x1xi1> to vector<8x32xi1>
    %163 = arith.select %162, %141, %102 : vector<8x32xi1>, vector<8x32xf32>
    %c0_57 = arith.constant 0 : index
    %c0_58 = arith.constant 0 : index
    %164 = vector.load %arg11[%c0_57, %c0_58] : memref<8x32xf32, #tpu.memory_space<vmem>>, vector<8x32xf32>
    tpu.vector_store %arg11[%c0_57, %c0_58], %163 {strides = array<i32>} : memref<8x32xf32, #tpu.memory_space<vmem>>, vector<8x32xf32>,
    %cst_59 = arith.constant 0.000000e+00 : f32
    %165 = vector.shape_cast %146 : vector<8x1xi1> to vector<8x1xi1>
    %166 = vector.broadcast %165 : vector<8x1xi1> to vector<8x32xi1>
    %167 = vector.broadcast %cst_59 : f32 to vector<8x32xf32>
    %168 = arith.select %166, %128, %167 : vector<8x32xi1>, vector<8x32xf32>
    %cst_60 = arith.constant 0.000000e+00 : f32
    %169 = vector.shape_cast %148 : vector<8x1xi1> to vector<8x1xi1>
    %170 = vector.broadcast %169 : vector<8x1xi1> to vector<8x32xi1>
    %171 = vector.broadcast %cst_60 : f32 to vector<8x32xf32>
    %172 = arith.select %170, %144, %171 : vector<8x32xi1>, vector<8x32xf32>
    %173 = arith.index_cast %95 : i32 to index
    %c0_61 = arith.constant 0 : index
    %174 = vector.load %arg6[%173, %c0_61] : memref<32x32xf32, #tpu.memory_space<vmem>>, vector<8x32xf32>
    tpu.vector_store %arg6[%173, %c0_61], %168 {strides = array<i32>} : memref<32x32xf32, #tpu.memory_space<vmem>>, vector<8x32xf32>,
    %175 = arith.index_cast %98 : i32 to index
    %c0_62 = arith.constant 0 : index
    %176 = vector.load %arg7[%175, %c0_62] : memref<32x32xf32, #tpu.memory_space<vmem>>, vector<8x32xf32>
    tpu.vector_store %arg7[%175, %c0_62], %172 {strides = array<i32>} : memref<32x32xf32, #tpu.memory_space<vmem>>, vector<8x32xf32>,
    %c2_i32 = arith.constant 2 : i32
    %177 = arith.addi %6, %c2_i32 : i32
    %c7_i32_63 = arith.constant 7 : i32
    %178 = arith.subi %c7_i32_63, %177 : i32
    %c8_i32_64 = arith.constant 8 : i32
    %179 = arith.muli %c2_i32, %c8_i32_64 : i32
    %180 = tpu.assume_multiple %179, 8 : i32
    %c3_i32_65 = arith.constant 3 : i32
    %181 = arith.subi %c3_i32_65, %c2_i32 : i32
    %c8_i32_66 = arith.constant 8 : i32
    %182 = arith.muli %181, %c8_i32_66 : i32
    %183 = tpu.assume_multiple %182, 8 : i32
    %c0_67 = arith.constant 0 : index
    %c0_68 = arith.constant 0 : index
    %184 = vector.load %arg8[%c0_67, %c0_68] : memref<8x32xf32, #tpu.memory_space<vmem>>, vector<8x32xf32>
    %c0_69 = arith.constant 0 : index
    %c0_70 = arith.constant 0 : index
    %185 = vector.load %arg9[%c0_69, %c0_70] : memref<8x32xf32, #tpu.memory_space<vmem>>, vector<8x32xf32>
    %c0_71 = arith.constant 0 : index
    %c0_72 = arith.constant 0 : index
    %186 = vector.load %arg10[%c0_71, %c0_72] : memref<8x32xf32, #tpu.memory_space<vmem>>, vector<8x32xf32>
    %c0_73 = arith.constant 0 : index
    %c0_74 = arith.constant 0 : index
    %187 = vector.load %arg11[%c0_73, %c0_74] : memref<8x32xf32, #tpu.memory_space<vmem>>, vector<8x32xf32>
    %188 = arith.truncf %184 : vector<8x32xf32> to vector<8x32xbf16>
    %cst_75 = arith.constant dense<0.000000e+00> : vector<8x128xf32>
    %189 = tpu.matmul %188, %4, %cst_75 {dimension_numbers = #tpu.dot_dimension_numbers<[1], [0], [0], [1], [0, 0, 1, 1], [], []>} : vector<8x32xbf16>, vector<32x128xbf16>, vector<8x128xf32> -> vector<8x128xf32>
    %190 = arith.index_cast %180 : i32 to index
    %c0_76 = arith.constant 0 : index
    %191 = vector.load %arg1[%190, %c0_76] : memref<32x128xf32, #tpu.memory_space<vmem>>, vector<8x128xf32>
    %192 = arith.addf %189, %191 : vector<8x128xf32>
    %193 = arith.truncf %186 : vector<8x32xf32> to vector<8x32xbf16>
    %cst_77 = arith.constant dense<0.000000e+00> : vector<8x128xf32>
    %194 = tpu.matmul %193, %5, %cst_77 {dimension_numbers = #tpu.dot_dimension_numbers<[1], [0], [0], [1], [0, 0, 1, 1], [], []>} : vector<8x32xbf16>, vector<32x128xbf16>, vector<8x128xf32> -> vector<8x128xf32>
    %195 = arith.index_cast %183 : i32 to index
    %c0_78 = arith.constant 0 : index
    %196 = vector.load %arg2[%195, %c0_78] : memref<32x128xf32, #tpu.memory_space<vmem>>, vector<8x128xf32>
    %197 = arith.addf %194, %196 : vector<8x128xf32>
    %198 = vector.extract_strided_slice %192 {offsets = [0, 0], sizes = [8, 96], strides = [1, 1]} : vector<8x128xf32> to vector<8x96xf32>
    %199 = arith.negf %198 : vector<8x96xf32>
    %200 = math.exp %199 : vector<8x96xf32>
    %cst_79 = arith.constant 1.000000e+00 : f32
    %201 = vector.broadcast %cst_79 : f32 to vector<8x96xf32>
    %202 = arith.addf %201, %200 : vector<8x96xf32>
    %203 = arith.divf %201, %202 : vector<8x96xf32>
    %204 = vector.extract_strided_slice %192 {offsets = [0, 96], sizes = [8, 32], strides = [1, 1]} : vector<8x128xf32> to vector<8x32xf32>
    %205 = math.tanh %204 : vector<8x32xf32>
    %206 = vector.extract_strided_slice %203 {offsets = [0, 32], sizes = [8, 32], strides = [1, 1]} : vector<8x96xf32> to vector<8x32xf32>
    %207 = arith.mulf %206, %185 : vector<8x32xf32>
    %208 = vector.extract_strided_slice %203 {offsets = [0, 0], sizes = [8, 32], strides = [1, 1]} : vector<8x96xf32> to vector<8x32xf32>
    %209 = arith.mulf %208, %205 : vector<8x32xf32>
    %210 = arith.addf %207, %209 : vector<8x32xf32>
    %211 = vector.extract_strided_slice %203 {offsets = [0, 64], sizes = [8, 32], strides = [1, 1]} : vector<8x96xf32> to vector<8x32xf32>
    %212 = math.tanh %210 : vector<8x32xf32>
    %213 = arith.mulf %211, %212 : vector<8x32xf32>
    %214 = vector.extract_strided_slice %197 {offsets = [0, 0], sizes = [8, 96], strides = [1, 1]} : vector<8x128xf32> to vector<8x96xf32>
    %215 = arith.negf %214 : vector<8x96xf32>
    %216 = math.exp %215 : vector<8x96xf32>
    %cst_80 = arith.constant 1.000000e+00 : f32
    %217 = vector.broadcast %cst_80 : f32 to vector<8x96xf32>
    %218 = arith.addf %217, %216 : vector<8x96xf32>
    %219 = arith.divf %217, %218 : vector<8x96xf32>
    %220 = vector.extract_strided_slice %197 {offsets = [0, 96], sizes = [8, 32], strides = [1, 1]} : vector<8x128xf32> to vector<8x32xf32>
    %221 = math.tanh %220 : vector<8x32xf32>
    %222 = vector.extract_strided_slice %219 {offsets = [0, 32], sizes = [8, 32], strides = [1, 1]} : vector<8x96xf32> to vector<8x32xf32>
    %223 = arith.mulf %222, %187 : vector<8x32xf32>
    %224 = vector.extract_strided_slice %219 {offsets = [0, 0], sizes = [8, 32], strides = [1, 1]} : vector<8x96xf32> to vector<8x32xf32>
    %225 = arith.mulf %224, %221 : vector<8x32xf32>
    %226 = arith.addf %223, %225 : vector<8x32xf32>
    %227 = vector.extract_strided_slice %219 {offsets = [0, 64], sizes = [8, 32], strides = [1, 1]} : vector<8x96xf32> to vector<8x32xf32>
    %228 = math.tanh %226 : vector<8x32xf32>
    %229 = arith.mulf %227, %228 : vector<8x32xf32>
    %230 = vector.broadcast %177 : i32 to vector<8x1xi32>
    %231 = arith.cmpi slt, %230, %3 : vector<8x1xi32>
    %232 = vector.broadcast %178 : i32 to vector<8x1xi32>
    %233 = arith.cmpi slt, %232, %3 : vector<8x1xi32>
    %234 = vector.shape_cast %231 : vector<8x1xi1> to vector<8x1xi1>
    %235 = vector.broadcast %234 : vector<8x1xi1> to vector<8x32xi1>
    %236 = arith.select %235, %213, %184 : vector<8x32xi1>, vector<8x32xf32>
    %c0_81 = arith.constant 0 : index
    %c0_82 = arith.constant 0 : index
    %237 = vector.load %arg8[%c0_81, %c0_82] : memref<8x32xf32, #tpu.memory_space<vmem>>, vector<8x32xf32>
    tpu.vector_store %arg8[%c0_81, %c0_82], %236 {strides = array<i32>} : memref<8x32xf32, #tpu.memory_space<vmem>>, vector<8x32xf32>,
    %238 = vector.shape_cast %231 : vector<8x1xi1> to vector<8x1xi1>
    %239 = vector.broadcast %238 : vector<8x1xi1> to vector<8x32xi1>
    %240 = arith.select %239, %210, %185 : vector<8x32xi1>, vector<8x32xf32>
    %c0_83 = arith.constant 0 : index
    %c0_84 = arith.constant 0 : index
    %241 = vector.load %arg9[%c0_83, %c0_84] : memref<8x32xf32, #tpu.memory_space<vmem>>, vector<8x32xf32>
    tpu.vector_store %arg9[%c0_83, %c0_84], %240 {strides = array<i32>} : memref<8x32xf32, #tpu.memory_space<vmem>>, vector<8x32xf32>,
    %242 = vector.shape_cast %233 : vector<8x1xi1> to vector<8x1xi1>
    %243 = vector.broadcast %242 : vector<8x1xi1> to vector<8x32xi1>
    %244 = arith.select %243, %229, %186 : vector<8x32xi1>, vector<8x32xf32>
    %c0_85 = arith.constant 0 : index
    %c0_86 = arith.constant 0 : index
    %245 = vector.load %arg10[%c0_85, %c0_86] : memref<8x32xf32, #tpu.memory_space<vmem>>, vector<8x32xf32>
    tpu.vector_store %arg10[%c0_85, %c0_86], %244 {strides = array<i32>} : memref<8x32xf32, #tpu.memory_space<vmem>>, vector<8x32xf32>,
    %246 = vector.shape_cast %233 : vector<8x1xi1> to vector<8x1xi1>
    %247 = vector.broadcast %246 : vector<8x1xi1> to vector<8x32xi1>
    %248 = arith.select %247, %226, %187 : vector<8x32xi1>, vector<8x32xf32>
    %c0_87 = arith.constant 0 : index
    %c0_88 = arith.constant 0 : index
    %249 = vector.load %arg11[%c0_87, %c0_88] : memref<8x32xf32, #tpu.memory_space<vmem>>, vector<8x32xf32>
    tpu.vector_store %arg11[%c0_87, %c0_88], %248 {strides = array<i32>} : memref<8x32xf32, #tpu.memory_space<vmem>>, vector<8x32xf32>,
    %cst_89 = arith.constant 0.000000e+00 : f32
    %250 = vector.shape_cast %231 : vector<8x1xi1> to vector<8x1xi1>
    %251 = vector.broadcast %250 : vector<8x1xi1> to vector<8x32xi1>
    %252 = vector.broadcast %cst_89 : f32 to vector<8x32xf32>
    %253 = arith.select %251, %213, %252 : vector<8x32xi1>, vector<8x32xf32>
    %cst_90 = arith.constant 0.000000e+00 : f32
    %254 = vector.shape_cast %233 : vector<8x1xi1> to vector<8x1xi1>
    %255 = vector.broadcast %254 : vector<8x1xi1> to vector<8x32xi1>
    %256 = vector.broadcast %cst_90 : f32 to vector<8x32xf32>
    %257 = arith.select %255, %229, %256 : vector<8x32xi1>, vector<8x32xf32>
    %258 = arith.index_cast %180 : i32 to index
    %c0_91 = arith.constant 0 : index
    %259 = vector.load %arg6[%258, %c0_91] : memref<32x32xf32, #tpu.memory_space<vmem>>, vector<8x32xf32>
    tpu.vector_store %arg6[%258, %c0_91], %253 {strides = array<i32>} : memref<32x32xf32, #tpu.memory_space<vmem>>, vector<8x32xf32>,
    %260 = arith.index_cast %183 : i32 to index
    %c0_92 = arith.constant 0 : index
    %261 = vector.load %arg7[%260, %c0_92] : memref<32x32xf32, #tpu.memory_space<vmem>>, vector<8x32xf32>
    tpu.vector_store %arg7[%260, %c0_92], %257 {strides = array<i32>} : memref<32x32xf32, #tpu.memory_space<vmem>>, vector<8x32xf32>,
    %c3_i32_93 = arith.constant 3 : i32
    %262 = arith.addi %6, %c3_i32_93 : i32
    %c7_i32_94 = arith.constant 7 : i32
    %263 = arith.subi %c7_i32_94, %262 : i32
    %c8_i32_95 = arith.constant 8 : i32
    %264 = arith.muli %c3_i32_93, %c8_i32_95 : i32
    %265 = tpu.assume_multiple %264, 8 : i32
    %c3_i32_96 = arith.constant 3 : i32
    %266 = arith.subi %c3_i32_96, %c3_i32_93 : i32
    %c8_i32_97 = arith.constant 8 : i32
    %267 = arith.muli %266, %c8_i32_97 : i32
    %268 = tpu.assume_multiple %267, 8 : i32
    %c0_98 = arith.constant 0 : index
    %c0_99 = arith.constant 0 : index
    %269 = vector.load %arg8[%c0_98, %c0_99] : memref<8x32xf32, #tpu.memory_space<vmem>>, vector<8x32xf32>
    %c0_100 = arith.constant 0 : index
    %c0_101 = arith.constant 0 : index
    %270 = vector.load %arg9[%c0_100, %c0_101] : memref<8x32xf32, #tpu.memory_space<vmem>>, vector<8x32xf32>
    %c0_102 = arith.constant 0 : index
    %c0_103 = arith.constant 0 : index
    %271 = vector.load %arg10[%c0_102, %c0_103] : memref<8x32xf32, #tpu.memory_space<vmem>>, vector<8x32xf32>
    %c0_104 = arith.constant 0 : index
    %c0_105 = arith.constant 0 : index
    %272 = vector.load %arg11[%c0_104, %c0_105] : memref<8x32xf32, #tpu.memory_space<vmem>>, vector<8x32xf32>
    %273 = arith.truncf %269 : vector<8x32xf32> to vector<8x32xbf16>
    %cst_106 = arith.constant dense<0.000000e+00> : vector<8x128xf32>
    %274 = tpu.matmul %273, %4, %cst_106 {dimension_numbers = #tpu.dot_dimension_numbers<[1], [0], [0], [1], [0, 0, 1, 1], [], []>} : vector<8x32xbf16>, vector<32x128xbf16>, vector<8x128xf32> -> vector<8x128xf32>
    %275 = arith.index_cast %265 : i32 to index
    %c0_107 = arith.constant 0 : index
    %276 = vector.load %arg1[%275, %c0_107] : memref<32x128xf32, #tpu.memory_space<vmem>>, vector<8x128xf32>
    %277 = arith.addf %274, %276 : vector<8x128xf32>
    %278 = arith.truncf %271 : vector<8x32xf32> to vector<8x32xbf16>
    %cst_108 = arith.constant dense<0.000000e+00> : vector<8x128xf32>
    %279 = tpu.matmul %278, %5, %cst_108 {dimension_numbers = #tpu.dot_dimension_numbers<[1], [0], [0], [1], [0, 0, 1, 1], [], []>} : vector<8x32xbf16>, vector<32x128xbf16>, vector<8x128xf32> -> vector<8x128xf32>
    %280 = arith.index_cast %268 : i32 to index
    %c0_109 = arith.constant 0 : index
    %281 = vector.load %arg2[%280, %c0_109] : memref<32x128xf32, #tpu.memory_space<vmem>>, vector<8x128xf32>
    %282 = arith.addf %279, %281 : vector<8x128xf32>
    %283 = vector.extract_strided_slice %277 {offsets = [0, 0], sizes = [8, 96], strides = [1, 1]} : vector<8x128xf32> to vector<8x96xf32>
    %284 = arith.negf %283 : vector<8x96xf32>
    %285 = math.exp %284 : vector<8x96xf32>
    %cst_110 = arith.constant 1.000000e+00 : f32
    %286 = vector.broadcast %cst_110 : f32 to vector<8x96xf32>
    %287 = arith.addf %286, %285 : vector<8x96xf32>
    %288 = arith.divf %286, %287 : vector<8x96xf32>
    %289 = vector.extract_strided_slice %277 {offsets = [0, 96], sizes = [8, 32], strides = [1, 1]} : vector<8x128xf32> to vector<8x32xf32>
    %290 = math.tanh %289 : vector<8x32xf32>
    %291 = vector.extract_strided_slice %288 {offsets = [0, 32], sizes = [8, 32], strides = [1, 1]} : vector<8x96xf32> to vector<8x32xf32>
    %292 = arith.mulf %291, %270 : vector<8x32xf32>
    %293 = vector.extract_strided_slice %288 {offsets = [0, 0], sizes = [8, 32], strides = [1, 1]} : vector<8x96xf32> to vector<8x32xf32>
    %294 = arith.mulf %293, %290 : vector<8x32xf32>
    %295 = arith.addf %292, %294 : vector<8x32xf32>
    %296 = vector.extract_strided_slice %288 {offsets = [0, 64], sizes = [8, 32], strides = [1, 1]} : vector<8x96xf32> to vector<8x32xf32>
    %297 = math.tanh %295 : vector<8x32xf32>
    %298 = arith.mulf %296, %297 : vector<8x32xf32>
    %299 = vector.extract_strided_slice %282 {offsets = [0, 0], sizes = [8, 96], strides = [1, 1]} : vector<8x128xf32> to vector<8x96xf32>
    %300 = arith.negf %299 : vector<8x96xf32>
    %301 = math.exp %300 : vector<8x96xf32>
    %cst_111 = arith.constant 1.000000e+00 : f32
    %302 = vector.broadcast %cst_111 : f32 to vector<8x96xf32>
    %303 = arith.addf %302, %301 : vector<8x96xf32>
    %304 = arith.divf %302, %303 : vector<8x96xf32>
    %305 = vector.extract_strided_slice %282 {offsets = [0, 96], sizes = [8, 32], strides = [1, 1]} : vector<8x128xf32> to vector<8x32xf32>
    %306 = math.tanh %305 : vector<8x32xf32>
    %307 = vector.extract_strided_slice %304 {offsets = [0, 32], sizes = [8, 32], strides = [1, 1]} : vector<8x96xf32> to vector<8x32xf32>
    %308 = arith.mulf %307, %272 : vector<8x32xf32>
    %309 = vector.extract_strided_slice %304 {offsets = [0, 0], sizes = [8, 32], strides = [1, 1]} : vector<8x96xf32> to vector<8x32xf32>
    %310 = arith.mulf %309, %306 : vector<8x32xf32>
    %311 = arith.addf %308, %310 : vector<8x32xf32>
    %312 = vector.extract_strided_slice %304 {offsets = [0, 64], sizes = [8, 32], strides = [1, 1]} : vector<8x96xf32> to vector<8x32xf32>
    %313 = math.tanh %311 : vector<8x32xf32>
    %314 = arith.mulf %312, %313 : vector<8x32xf32>
    %315 = vector.broadcast %262 : i32 to vector<8x1xi32>
    %316 = arith.cmpi slt, %315, %3 : vector<8x1xi32>
    %317 = vector.broadcast %263 : i32 to vector<8x1xi32>
    %318 = arith.cmpi slt, %317, %3 : vector<8x1xi32>
    %319 = vector.shape_cast %316 : vector<8x1xi1> to vector<8x1xi1>
    %320 = vector.broadcast %319 : vector<8x1xi1> to vector<8x32xi1>
    %321 = arith.select %320, %298, %269 : vector<8x32xi1>, vector<8x32xf32>
    %c0_112 = arith.constant 0 : index
    %c0_113 = arith.constant 0 : index
    %322 = vector.load %arg8[%c0_112, %c0_113] : memref<8x32xf32, #tpu.memory_space<vmem>>, vector<8x32xf32>
    tpu.vector_store %arg8[%c0_112, %c0_113], %321 {strides = array<i32>} : memref<8x32xf32, #tpu.memory_space<vmem>>, vector<8x32xf32>,
    %323 = vector.shape_cast %316 : vector<8x1xi1> to vector<8x1xi1>
    %324 = vector.broadcast %323 : vector<8x1xi1> to vector<8x32xi1>
    %325 = arith.select %324, %295, %270 : vector<8x32xi1>, vector<8x32xf32>
    %c0_114 = arith.constant 0 : index
    %c0_115 = arith.constant 0 : index
    %326 = vector.load %arg9[%c0_114, %c0_115] : memref<8x32xf32, #tpu.memory_space<vmem>>, vector<8x32xf32>
    tpu.vector_store %arg9[%c0_114, %c0_115], %325 {strides = array<i32>} : memref<8x32xf32, #tpu.memory_space<vmem>>, vector<8x32xf32>,
    %327 = vector.shape_cast %318 : vector<8x1xi1> to vector<8x1xi1>
    %328 = vector.broadcast %327 : vector<8x1xi1> to vector<8x32xi1>
    %329 = arith.select %328, %314, %271 : vector<8x32xi1>, vector<8x32xf32>
    %c0_116 = arith.constant 0 : index
    %c0_117 = arith.constant 0 : index
    %330 = vector.load %arg10[%c0_116, %c0_117] : memref<8x32xf32, #tpu.memory_space<vmem>>, vector<8x32xf32>
    tpu.vector_store %arg10[%c0_116, %c0_117], %329 {strides = array<i32>} : memref<8x32xf32, #tpu.memory_space<vmem>>, vector<8x32xf32>,
    %331 = vector.shape_cast %318 : vector<8x1xi1> to vector<8x1xi1>
    %332 = vector.broadcast %331 : vector<8x1xi1> to vector<8x32xi1>
    %333 = arith.select %332, %311, %272 : vector<8x32xi1>, vector<8x32xf32>
    %c0_118 = arith.constant 0 : index
    %c0_119 = arith.constant 0 : index
    %334 = vector.load %arg11[%c0_118, %c0_119] : memref<8x32xf32, #tpu.memory_space<vmem>>, vector<8x32xf32>
    tpu.vector_store %arg11[%c0_118, %c0_119], %333 {strides = array<i32>} : memref<8x32xf32, #tpu.memory_space<vmem>>, vector<8x32xf32>,
    %cst_120 = arith.constant 0.000000e+00 : f32
    %335 = vector.shape_cast %316 : vector<8x1xi1> to vector<8x1xi1>
    %336 = vector.broadcast %335 : vector<8x1xi1> to vector<8x32xi1>
    %337 = vector.broadcast %cst_120 : f32 to vector<8x32xf32>
    %338 = arith.select %336, %298, %337 : vector<8x32xi1>, vector<8x32xf32>
    %cst_121 = arith.constant 0.000000e+00 : f32
    %339 = vector.shape_cast %318 : vector<8x1xi1> to vector<8x1xi1>
    %340 = vector.broadcast %339 : vector<8x1xi1> to vector<8x32xi1>
    %341 = vector.broadcast %cst_121 : f32 to vector<8x32xf32>
    %342 = arith.select %340, %314, %341 : vector<8x32xi1>, vector<8x32xf32>
    %343 = arith.index_cast %265 : i32 to index
    %c0_122 = arith.constant 0 : index
    %344 = vector.load %arg6[%343, %c0_122] : memref<32x32xf32, #tpu.memory_space<vmem>>, vector<8x32xf32>
    tpu.vector_store %arg6[%343, %c0_122], %338 {strides = array<i32>} : memref<32x32xf32, #tpu.memory_space<vmem>>, vector<8x32xf32>,
    %345 = arith.index_cast %268 : i32 to index
    %c0_123 = arith.constant 0 : index
    %346 = vector.load %arg7[%345, %c0_123] : memref<32x32xf32, #tpu.memory_space<vmem>>, vector<8x32xf32>
    tpu.vector_store %arg7[%345, %c0_123], %342 {strides = array<i32>} : memref<32x32xf32, #tpu.memory_space<vmem>>, vector<8x32xf32>,
    %c4_i32_124 = arith.constant 4 : i32
    return
  }
  func.func @transform_0(%arg0: i32) -> (i32, i32) {
    %c0_i32 = arith.constant 0 : i32
    %c0_i32_0 = arith.constant 0 : i32
    return %arg0, %c0_i32 : i32, i32
  }
  func.func @transform_1(%arg0: i32) -> (i32, i32) {
    %c1_i32 = arith.constant 1 : i32
    %0 = arith.subi %c1_i32, %arg0 : i32
    %c1_i32_0 = arith.constant 1 : i32
    %c0_i32 = arith.constant 0 : i32
    return %0, %c1_i32_0 : i32, i32
  }
  func.func @transform_2(%arg0: i32) -> (i32, i32) {
    %c0_i32 = arith.constant 0 : i32
    %c0_i32_0 = arith.constant 0 : i32
    %c0_i32_1 = arith.constant 0 : i32
    return %c0_i32, %c0_i32_0 : i32, i32
  }
  func.func @transform_3(%arg0: i32) -> (i32, i32) {
    %c0_i32 = arith.constant 0 : i32
    %c0_i32_0 = arith.constant 0 : i32
    %c0_i32_1 = arith.constant 0 : i32
    return %c0_i32, %c0_i32_0 : i32, i32
  }
  func.func @transform_4(%arg0: i32) -> (i32, i32) {
    %c0_i32 = arith.constant 0 : i32
    %c0_i32_0 = arith.constant 0 : i32
    %c0_i32_1 = arith.constant 0 : i32
    return %c0_i32, %c0_i32_0 : i32, i32
  }
  func.func @transform_5(%arg0: i32) -> (i32, i32) {
    %c0_i32 = arith.constant 0 : i32
    %c0_i32_0 = arith.constant 0 : i32
    return %arg0, %c0_i32 : i32, i32
  }
  func.func @transform_6(%arg0: i32) -> (i32, i32) {
    %c1_i32 = arith.constant 1 : i32
    %0 = arith.subi %c1_i32, %arg0 : i32
    %c0_i32 = arith.constant 0 : i32
    %c0_i32_0 = arith.constant 0 : i32
    return %0, %c0_i32 : i32, i32
  }
}

module attributes {stable_mosaic.version = 11 : i64} {
  func.func @kernel(%arg0: i32, %arg1: memref<32x128xf32, #tpu.memory_space<vmem>>, %arg2: memref<32x128xf32, #tpu.memory_space<vmem>>, %arg3: memref<32x128xbf16, #tpu.memory_space<vmem>>, %arg4: memref<32x128xbf16, #tpu.memory_space<vmem>>, %arg5: memref<8x1xi32, #tpu.memory_space<vmem>>, %arg6: memref<32x4xf32, #tpu.memory_space<vmem>>, %arg7: memref<32x4xf32, #tpu.memory_space<vmem>>, %arg8: memref<1x4xf32, #tpu.memory_space<vmem>>, %arg9: memref<8x4xf32, #tpu.memory_space<vmem>>, %arg10: memref<8x32xf32, #tpu.memory_space<vmem>>, %arg11: memref<8x32xf32, #tpu.memory_space<vmem>>, %arg12: memref<8x32xf32, #tpu.memory_space<vmem>>, %arg13: memref<8x32xf32, #tpu.memory_space<vmem>>, %arg14: memref<8x32xf32, #tpu.memory_space<vmem>>, %arg15: memref<8x32xf32, #tpu.memory_space<vmem>>) attributes {dimension_semantics = [#tpu.dimension_semantics<arbitrary>], iteration_bounds = array<i64: 2>, scalar_prefetch = 0 : i64, scratch_operands = 6 : i64, tpu.core_type = #tpu.core_type<tc>, window_params = [{transform_indices = @transform_0, window_bounds = array<i64: 32, 128>}, {transform_indices = @transform_1, window_bounds = array<i64: 32, 128>}, {pipeline_mode = #tpu.pipeline_mode<synchronous>, transform_indices = @transform_2, window_bounds = array<i64: 32, 128>}, {pipeline_mode = #tpu.pipeline_mode<synchronous>, transform_indices = @transform_3, window_bounds = array<i64: 32, 128>}, {pipeline_mode = #tpu.pipeline_mode<synchronous>, transform_indices = @transform_4, window_bounds = array<i64: 8, 1>}, {pipeline_mode = #tpu.pipeline_mode<synchronous>, transform_indices = @transform_5, window_bounds = array<i64: 32, 4>}, {pipeline_mode = #tpu.pipeline_mode<synchronous>, transform_indices = @transform_6, window_bounds = array<i64: 32, 4>}, {pipeline_mode = #tpu.pipeline_mode<synchronous>, transform_indices = @transform_7, window_bounds = array<i64: 1, 4>}, {pipeline_mode = #tpu.pipeline_mode<synchronous>, transform_indices = @transform_8, window_bounds = array<i64: 8, 4>}]} {
    %c0_i32 = arith.constant 0 : i32
    %0 = arith.cmpi eq, %arg0, %c0_i32 : i32
    %1 = arith.extui %0 : i1 to i32
    %c0_i32_0 = arith.constant 0 : i32
    %2 = arith.cmpi ne, %1, %c0_i32_0 : i32
    scf.if %2 {
      %cst_151 = arith.constant 0.000000e+00 : f32
      %358 = vector.broadcast %cst_151 : f32 to vector<8x32xf32>
      %c0_152 = arith.constant 0 : index
      %c0_153 = arith.constant 0 : index
      %359 = vector.load %arg10[%c0_152, %c0_153] : memref<8x32xf32, #tpu.memory_space<vmem>>, vector<8x32xf32>
      tpu.vector_store %arg10[%c0_152, %c0_153], %358 {strides = array<i32>} : memref<8x32xf32, #tpu.memory_space<vmem>>, vector<8x32xf32>,
      %cst_154 = arith.constant 0.000000e+00 : f32
      %360 = vector.broadcast %cst_154 : f32 to vector<8x32xf32>
      %c0_155 = arith.constant 0 : index
      %c0_156 = arith.constant 0 : index
      %361 = vector.load %arg11[%c0_155, %c0_156] : memref<8x32xf32, #tpu.memory_space<vmem>>, vector<8x32xf32>
      tpu.vector_store %arg11[%c0_155, %c0_156], %360 {strides = array<i32>} : memref<8x32xf32, #tpu.memory_space<vmem>>, vector<8x32xf32>,
      %cst_157 = arith.constant 0.000000e+00 : f32
      %362 = vector.broadcast %cst_157 : f32 to vector<8x32xf32>
      %c0_158 = arith.constant 0 : index
      %c0_159 = arith.constant 0 : index
      %363 = vector.load %arg12[%c0_158, %c0_159] : memref<8x32xf32, #tpu.memory_space<vmem>>, vector<8x32xf32>
      tpu.vector_store %arg12[%c0_158, %c0_159], %362 {strides = array<i32>} : memref<8x32xf32, #tpu.memory_space<vmem>>, vector<8x32xf32>,
      %cst_160 = arith.constant 0.000000e+00 : f32
      %364 = vector.broadcast %cst_160 : f32 to vector<8x32xf32>
      %c0_161 = arith.constant 0 : index
      %c0_162 = arith.constant 0 : index
      %365 = vector.load %arg13[%c0_161, %c0_162] : memref<8x32xf32, #tpu.memory_space<vmem>>, vector<8x32xf32>
      tpu.vector_store %arg13[%c0_161, %c0_162], %364 {strides = array<i32>} : memref<8x32xf32, #tpu.memory_space<vmem>>, vector<8x32xf32>,
      %cst_163 = arith.constant 0.000000e+00 : f32
      %366 = vector.broadcast %cst_163 : f32 to vector<8x32xf32>
      %c0_164 = arith.constant 0 : index
      %c0_165 = arith.constant 0 : index
      %367 = vector.load %arg14[%c0_164, %c0_165] : memref<8x32xf32, #tpu.memory_space<vmem>>, vector<8x32xf32>
      tpu.vector_store %arg14[%c0_164, %c0_165], %366 {strides = array<i32>} : memref<8x32xf32, #tpu.memory_space<vmem>>, vector<8x32xf32>,
      %cst_166 = arith.constant 0.000000e+00 : f32
      %368 = vector.broadcast %cst_166 : f32 to vector<8x32xf32>
      %c0_167 = arith.constant 0 : index
      %c0_168 = arith.constant 0 : index
      %369 = vector.load %arg15[%c0_167, %c0_168] : memref<8x32xf32, #tpu.memory_space<vmem>>, vector<8x32xf32>
      tpu.vector_store %arg15[%c0_167, %c0_168], %368 {strides = array<i32>} : memref<8x32xf32, #tpu.memory_space<vmem>>, vector<8x32xf32>,
    } else {
    }
    %c0 = arith.constant 0 : index
    %c0_1 = arith.constant 0 : index
    %3 = vector.load %arg5[%c0, %c0_1] : memref<8x1xi32, #tpu.memory_space<vmem>>, vector<8x1xi32>
    %c0_2 = arith.constant 0 : index
    %c0_3 = arith.constant 0 : index
    %4 = vector.load %arg3[%c0_2, %c0_3] : memref<32x128xbf16, #tpu.memory_space<vmem>>, vector<32x128xbf16>
    %c0_4 = arith.constant 0 : index
    %c0_5 = arith.constant 0 : index
    %5 = vector.load %arg4[%c0_4, %c0_5] : memref<32x128xbf16, #tpu.memory_space<vmem>>, vector<32x128xbf16>
    %c4_i32 = arith.constant 4 : i32
    %6 = arith.muli %arg0, %c4_i32 : i32
    %c0_i32_6 = arith.constant 0 : i32
    %7 = arith.addi %6, %c0_i32_6 : i32
    %c7_i32 = arith.constant 7 : i32
    %8 = arith.subi %c7_i32, %7 : i32
    %c8_i32 = arith.constant 8 : i32
    %9 = arith.muli %c0_i32_6, %c8_i32 : i32
    %10 = tpu.assume_multiple %9, 8 : i32
    %c3_i32 = arith.constant 3 : i32
    %11 = arith.subi %c3_i32, %c0_i32_6 : i32
    %c8_i32_7 = arith.constant 8 : i32
    %12 = arith.muli %11, %c8_i32_7 : i32
    %13 = tpu.assume_multiple %12, 8 : i32
    %c0_8 = arith.constant 0 : index
    %c0_9 = arith.constant 0 : index
    %14 = vector.load %arg10[%c0_8, %c0_9] : memref<8x32xf32, #tpu.memory_space<vmem>>, vector<8x32xf32>
    %c0_10 = arith.constant 0 : index
    %c0_11 = arith.constant 0 : index
    %15 = vector.load %arg11[%c0_10, %c0_11] : memref<8x32xf32, #tpu.memory_space<vmem>>, vector<8x32xf32>
    %c0_12 = arith.constant 0 : index
    %c0_13 = arith.constant 0 : index
    %16 = vector.load %arg12[%c0_12, %c0_13] : memref<8x32xf32, #tpu.memory_space<vmem>>, vector<8x32xf32>
    %c0_14 = arith.constant 0 : index
    %c0_15 = arith.constant 0 : index
    %17 = vector.load %arg13[%c0_14, %c0_15] : memref<8x32xf32, #tpu.memory_space<vmem>>, vector<8x32xf32>
    %18 = arith.truncf %14 : vector<8x32xf32> to vector<8x32xbf16>
    %cst = arith.constant dense<0.000000e+00> : vector<8x128xf32>
    %19 = tpu.matmul %18, %4, %cst {dimension_numbers = #tpu.dot_dimension_numbers<[1], [0], [0], [1], [0, 0, 1, 1], [], []>} : vector<8x32xbf16>, vector<32x128xbf16>, vector<8x128xf32> -> vector<8x128xf32>
    %20 = arith.index_cast %10 : i32 to index
    %c0_16 = arith.constant 0 : index
    %21 = vector.load %arg1[%20, %c0_16] : memref<32x128xf32, #tpu.memory_space<vmem>>, vector<8x128xf32>
    %22 = arith.addf %19, %21 : vector<8x128xf32>
    %23 = arith.truncf %16 : vector<8x32xf32> to vector<8x32xbf16>
    %cst_17 = arith.constant dense<0.000000e+00> : vector<8x128xf32>
    %24 = tpu.matmul %23, %5, %cst_17 {dimension_numbers = #tpu.dot_dimension_numbers<[1], [0], [0], [1], [0, 0, 1, 1], [], []>} : vector<8x32xbf16>, vector<32x128xbf16>, vector<8x128xf32> -> vector<8x128xf32>
    %25 = arith.index_cast %13 : i32 to index
    %c0_18 = arith.constant 0 : index
    %26 = vector.load %arg2[%25, %c0_18] : memref<32x128xf32, #tpu.memory_space<vmem>>, vector<8x128xf32>
    %27 = arith.addf %24, %26 : vector<8x128xf32>
    %28 = vector.extract_strided_slice %22 {offsets = [0, 0], sizes = [8, 96], strides = [1, 1]} : vector<8x128xf32> to vector<8x96xf32>
    %29 = arith.negf %28 : vector<8x96xf32>
    %30 = math.exp %29 : vector<8x96xf32>
    %cst_19 = arith.constant 1.000000e+00 : f32
    %31 = vector.broadcast %cst_19 : f32 to vector<8x96xf32>
    %32 = arith.addf %31, %30 : vector<8x96xf32>
    %33 = arith.divf %31, %32 : vector<8x96xf32>
    %34 = vector.extract_strided_slice %22 {offsets = [0, 96], sizes = [8, 32], strides = [1, 1]} : vector<8x128xf32> to vector<8x32xf32>
    %35 = math.tanh %34 : vector<8x32xf32>
    %36 = vector.extract_strided_slice %33 {offsets = [0, 32], sizes = [8, 32], strides = [1, 1]} : vector<8x96xf32> to vector<8x32xf32>
    %37 = arith.mulf %36, %15 : vector<8x32xf32>
    %38 = vector.extract_strided_slice %33 {offsets = [0, 0], sizes = [8, 32], strides = [1, 1]} : vector<8x96xf32> to vector<8x32xf32>
    %39 = arith.mulf %38, %35 : vector<8x32xf32>
    %40 = arith.addf %37, %39 : vector<8x32xf32>
    %41 = vector.extract_strided_slice %33 {offsets = [0, 64], sizes = [8, 32], strides = [1, 1]} : vector<8x96xf32> to vector<8x32xf32>
    %42 = math.tanh %40 : vector<8x32xf32>
    %43 = arith.mulf %41, %42 : vector<8x32xf32>
    %44 = vector.extract_strided_slice %27 {offsets = [0, 0], sizes = [8, 96], strides = [1, 1]} : vector<8x128xf32> to vector<8x96xf32>
    %45 = arith.negf %44 : vector<8x96xf32>
    %46 = math.exp %45 : vector<8x96xf32>
    %cst_20 = arith.constant 1.000000e+00 : f32
    %47 = vector.broadcast %cst_20 : f32 to vector<8x96xf32>
    %48 = arith.addf %47, %46 : vector<8x96xf32>
    %49 = arith.divf %47, %48 : vector<8x96xf32>
    %50 = vector.extract_strided_slice %27 {offsets = [0, 96], sizes = [8, 32], strides = [1, 1]} : vector<8x128xf32> to vector<8x32xf32>
    %51 = math.tanh %50 : vector<8x32xf32>
    %52 = vector.extract_strided_slice %49 {offsets = [0, 32], sizes = [8, 32], strides = [1, 1]} : vector<8x96xf32> to vector<8x32xf32>
    %53 = arith.mulf %52, %17 : vector<8x32xf32>
    %54 = vector.extract_strided_slice %49 {offsets = [0, 0], sizes = [8, 32], strides = [1, 1]} : vector<8x96xf32> to vector<8x32xf32>
    %55 = arith.mulf %54, %51 : vector<8x32xf32>
    %56 = arith.addf %53, %55 : vector<8x32xf32>
    %57 = vector.extract_strided_slice %49 {offsets = [0, 64], sizes = [8, 32], strides = [1, 1]} : vector<8x96xf32> to vector<8x32xf32>
    %58 = math.tanh %56 : vector<8x32xf32>
    %59 = arith.mulf %57, %58 : vector<8x32xf32>
    %60 = vector.broadcast %7 : i32 to vector<8x1xi32>
    %61 = arith.cmpi slt, %60, %3 : vector<8x1xi32>
    %62 = vector.broadcast %8 : i32 to vector<8x1xi32>
    %63 = arith.cmpi slt, %62, %3 : vector<8x1xi32>
    %64 = vector.shape_cast %61 : vector<8x1xi1> to vector<8x1xi1>
    %65 = vector.broadcast %64 : vector<8x1xi1> to vector<8x32xi1>
    %66 = arith.select %65, %43, %14 : vector<8x32xi1>, vector<8x32xf32>
    %c0_21 = arith.constant 0 : index
    %c0_22 = arith.constant 0 : index
    %67 = vector.load %arg10[%c0_21, %c0_22] : memref<8x32xf32, #tpu.memory_space<vmem>>, vector<8x32xf32>
    tpu.vector_store %arg10[%c0_21, %c0_22], %66 {strides = array<i32>} : memref<8x32xf32, #tpu.memory_space<vmem>>, vector<8x32xf32>,
    %68 = vector.shape_cast %61 : vector<8x1xi1> to vector<8x1xi1>
    %69 = vector.broadcast %68 : vector<8x1xi1> to vector<8x32xi1>
    %70 = arith.select %69, %40, %15 : vector<8x32xi1>, vector<8x32xf32>
    %c0_23 = arith.constant 0 : index
    %c0_24 = arith.constant 0 : index
    %71 = vector.load %arg11[%c0_23, %c0_24] : memref<8x32xf32, #tpu.memory_space<vmem>>, vector<8x32xf32>
    tpu.vector_store %arg11[%c0_23, %c0_24], %70 {strides = array<i32>} : memref<8x32xf32, #tpu.memory_space<vmem>>, vector<8x32xf32>,
    %72 = vector.shape_cast %63 : vector<8x1xi1> to vector<8x1xi1>
    %73 = vector.broadcast %72 : vector<8x1xi1> to vector<8x32xi1>
    %74 = arith.select %73, %59, %16 : vector<8x32xi1>, vector<8x32xf32>
    %c0_25 = arith.constant 0 : index
    %c0_26 = arith.constant 0 : index
    %75 = vector.load %arg12[%c0_25, %c0_26] : memref<8x32xf32, #tpu.memory_space<vmem>>, vector<8x32xf32>
    tpu.vector_store %arg12[%c0_25, %c0_26], %74 {strides = array<i32>} : memref<8x32xf32, #tpu.memory_space<vmem>>, vector<8x32xf32>,
    %76 = vector.shape_cast %63 : vector<8x1xi1> to vector<8x1xi1>
    %77 = vector.broadcast %76 : vector<8x1xi1> to vector<8x32xi1>
    %78 = arith.select %77, %56, %17 : vector<8x32xi1>, vector<8x32xf32>
    %c0_27 = arith.constant 0 : index
    %c0_28 = arith.constant 0 : index
    %79 = vector.load %arg13[%c0_27, %c0_28] : memref<8x32xf32, #tpu.memory_space<vmem>>, vector<8x32xf32>
    tpu.vector_store %arg13[%c0_27, %c0_28], %78 {strides = array<i32>} : memref<8x32xf32, #tpu.memory_space<vmem>>, vector<8x32xf32>,
    %cst_29 = arith.constant 0.000000e+00 : f32
    %80 = vector.shape_cast %61 : vector<8x1xi1> to vector<8x1xi1>
    %81 = vector.broadcast %80 : vector<8x1xi1> to vector<8x32xi1>
    %82 = vector.broadcast %cst_29 : f32 to vector<8x32xf32>
    %83 = arith.select %81, %43, %82 : vector<8x32xi1>, vector<8x32xf32>
    %cst_30 = arith.constant 0.000000e+00 : f32
    %84 = vector.shape_cast %63 : vector<8x1xi1> to vector<8x1xi1>
    %85 = vector.broadcast %84 : vector<8x1xi1> to vector<8x32xi1>
    %86 = vector.broadcast %cst_30 : f32 to vector<8x32xf32>
    %87 = arith.select %85, %59, %86 : vector<8x32xi1>, vector<8x32xf32>
    %c0_31 = arith.constant 0 : index
    %c0_32 = arith.constant 0 : index
    %88 = vector.load %arg14[%c0_31, %c0_32] : memref<8x32xf32, #tpu.memory_space<vmem>>, vector<8x32xf32>
    %89 = arith.addf %88, %83 : vector<8x32xf32>
    %c0_33 = arith.constant 0 : index
    %c0_34 = arith.constant 0 : index
    %90 = vector.load %arg14[%c0_33, %c0_34] : memref<8x32xf32, #tpu.memory_space<vmem>>, vector<8x32xf32>
    tpu.vector_store %arg14[%c0_33, %c0_34], %89 {strides = array<i32>} : memref<8x32xf32, #tpu.memory_space<vmem>>, vector<8x32xf32>,
    %c0_35 = arith.constant 0 : index
    %c0_36 = arith.constant 0 : index
    %91 = vector.load %arg15[%c0_35, %c0_36] : memref<8x32xf32, #tpu.memory_space<vmem>>, vector<8x32xf32>
    %92 = arith.addf %91, %87 : vector<8x32xf32>
    %c0_37 = arith.constant 0 : index
    %c0_38 = arith.constant 0 : index
    %93 = vector.load %arg15[%c0_37, %c0_38] : memref<8x32xf32, #tpu.memory_space<vmem>>, vector<8x32xf32>
    tpu.vector_store %arg15[%c0_37, %c0_38], %92 {strides = array<i32>} : memref<8x32xf32, #tpu.memory_space<vmem>>, vector<8x32xf32>,
    %c1_i32 = arith.constant 1 : i32
    %94 = arith.addi %6, %c1_i32 : i32
    %c7_i32_39 = arith.constant 7 : i32
    %95 = arith.subi %c7_i32_39, %94 : i32
    %c8_i32_40 = arith.constant 8 : i32
    %96 = arith.muli %c1_i32, %c8_i32_40 : i32
    %97 = tpu.assume_multiple %96, 8 : i32
    %c3_i32_41 = arith.constant 3 : i32
    %98 = arith.subi %c3_i32_41, %c1_i32 : i32
    %c8_i32_42 = arith.constant 8 : i32
    %99 = arith.muli %98, %c8_i32_42 : i32
    %100 = tpu.assume_multiple %99, 8 : i32
    %c0_43 = arith.constant 0 : index
    %c0_44 = arith.constant 0 : index
    %101 = vector.load %arg10[%c0_43, %c0_44] : memref<8x32xf32, #tpu.memory_space<vmem>>, vector<8x32xf32>
    %c0_45 = arith.constant 0 : index
    %c0_46 = arith.constant 0 : index
    %102 = vector.load %arg11[%c0_45, %c0_46] : memref<8x32xf32, #tpu.memory_space<vmem>>, vector<8x32xf32>
    %c0_47 = arith.constant 0 : index
    %c0_48 = arith.constant 0 : index
    %103 = vector.load %arg12[%c0_47, %c0_48] : memref<8x32xf32, #tpu.memory_space<vmem>>, vector<8x32xf32>
    %c0_49 = arith.constant 0 : index
    %c0_50 = arith.constant 0 : index
    %104 = vector.load %arg13[%c0_49, %c0_50] : memref<8x32xf32, #tpu.memory_space<vmem>>, vector<8x32xf32>
    %105 = arith.truncf %101 : vector<8x32xf32> to vector<8x32xbf16>
    %cst_51 = arith.constant dense<0.000000e+00> : vector<8x128xf32>
    %106 = tpu.matmul %105, %4, %cst_51 {dimension_numbers = #tpu.dot_dimension_numbers<[1], [0], [0], [1], [0, 0, 1, 1], [], []>} : vector<8x32xbf16>, vector<32x128xbf16>, vector<8x128xf32> -> vector<8x128xf32>
    %107 = arith.index_cast %97 : i32 to index
    %c0_52 = arith.constant 0 : index
    %108 = vector.load %arg1[%107, %c0_52] : memref<32x128xf32, #tpu.memory_space<vmem>>, vector<8x128xf32>
    %109 = arith.addf %106, %108 : vector<8x128xf32>
    %110 = arith.truncf %103 : vector<8x32xf32> to vector<8x32xbf16>
    %cst_53 = arith.constant dense<0.000000e+00> : vector<8x128xf32>
    %111 = tpu.matmul %110, %5, %cst_53 {dimension_numbers = #tpu.dot_dimension_numbers<[1], [0], [0], [1], [0, 0, 1, 1], [], []>} : vector<8x32xbf16>, vector<32x128xbf16>, vector<8x128xf32> -> vector<8x128xf32>
    %112 = arith.index_cast %100 : i32 to index
    %c0_54 = arith.constant 0 : index
    %113 = vector.load %arg2[%112, %c0_54] : memref<32x128xf32, #tpu.memory_space<vmem>>, vector<8x128xf32>
    %114 = arith.addf %111, %113 : vector<8x128xf32>
    %115 = vector.extract_strided_slice %109 {offsets = [0, 0], sizes = [8, 96], strides = [1, 1]} : vector<8x128xf32> to vector<8x96xf32>
    %116 = arith.negf %115 : vector<8x96xf32>
    %117 = math.exp %116 : vector<8x96xf32>
    %cst_55 = arith.constant 1.000000e+00 : f32
    %118 = vector.broadcast %cst_55 : f32 to vector<8x96xf32>
    %119 = arith.addf %118, %117 : vector<8x96xf32>
    %120 = arith.divf %118, %119 : vector<8x96xf32>
    %121 = vector.extract_strided_slice %109 {offsets = [0, 96], sizes = [8, 32], strides = [1, 1]} : vector<8x128xf32> to vector<8x32xf32>
    %122 = math.tanh %121 : vector<8x32xf32>
    %123 = vector.extract_strided_slice %120 {offsets = [0, 32], sizes = [8, 32], strides = [1, 1]} : vector<8x96xf32> to vector<8x32xf32>
    %124 = arith.mulf %123, %102 : vector<8x32xf32>
    %125 = vector.extract_strided_slice %120 {offsets = [0, 0], sizes = [8, 32], strides = [1, 1]} : vector<8x96xf32> to vector<8x32xf32>
    %126 = arith.mulf %125, %122 : vector<8x32xf32>
    %127 = arith.addf %124, %126 : vector<8x32xf32>
    %128 = vector.extract_strided_slice %120 {offsets = [0, 64], sizes = [8, 32], strides = [1, 1]} : vector<8x96xf32> to vector<8x32xf32>
    %129 = math.tanh %127 : vector<8x32xf32>
    %130 = arith.mulf %128, %129 : vector<8x32xf32>
    %131 = vector.extract_strided_slice %114 {offsets = [0, 0], sizes = [8, 96], strides = [1, 1]} : vector<8x128xf32> to vector<8x96xf32>
    %132 = arith.negf %131 : vector<8x96xf32>
    %133 = math.exp %132 : vector<8x96xf32>
    %cst_56 = arith.constant 1.000000e+00 : f32
    %134 = vector.broadcast %cst_56 : f32 to vector<8x96xf32>
    %135 = arith.addf %134, %133 : vector<8x96xf32>
    %136 = arith.divf %134, %135 : vector<8x96xf32>
    %137 = vector.extract_strided_slice %114 {offsets = [0, 96], sizes = [8, 32], strides = [1, 1]} : vector<8x128xf32> to vector<8x32xf32>
    %138 = math.tanh %137 : vector<8x32xf32>
    %139 = vector.extract_strided_slice %136 {offsets = [0, 32], sizes = [8, 32], strides = [1, 1]} : vector<8x96xf32> to vector<8x32xf32>
    %140 = arith.mulf %139, %104 : vector<8x32xf32>
    %141 = vector.extract_strided_slice %136 {offsets = [0, 0], sizes = [8, 32], strides = [1, 1]} : vector<8x96xf32> to vector<8x32xf32>
    %142 = arith.mulf %141, %138 : vector<8x32xf32>
    %143 = arith.addf %140, %142 : vector<8x32xf32>
    %144 = vector.extract_strided_slice %136 {offsets = [0, 64], sizes = [8, 32], strides = [1, 1]} : vector<8x96xf32> to vector<8x32xf32>
    %145 = math.tanh %143 : vector<8x32xf32>
    %146 = arith.mulf %144, %145 : vector<8x32xf32>
    %147 = vector.broadcast %94 : i32 to vector<8x1xi32>
    %148 = arith.cmpi slt, %147, %3 : vector<8x1xi32>
    %149 = vector.broadcast %95 : i32 to vector<8x1xi32>
    %150 = arith.cmpi slt, %149, %3 : vector<8x1xi32>
    %151 = vector.shape_cast %148 : vector<8x1xi1> to vector<8x1xi1>
    %152 = vector.broadcast %151 : vector<8x1xi1> to vector<8x32xi1>
    %153 = arith.select %152, %130, %101 : vector<8x32xi1>, vector<8x32xf32>
    %c0_57 = arith.constant 0 : index
    %c0_58 = arith.constant 0 : index
    %154 = vector.load %arg10[%c0_57, %c0_58] : memref<8x32xf32, #tpu.memory_space<vmem>>, vector<8x32xf32>
    tpu.vector_store %arg10[%c0_57, %c0_58], %153 {strides = array<i32>} : memref<8x32xf32, #tpu.memory_space<vmem>>, vector<8x32xf32>,
    %155 = vector.shape_cast %148 : vector<8x1xi1> to vector<8x1xi1>
    %156 = vector.broadcast %155 : vector<8x1xi1> to vector<8x32xi1>
    %157 = arith.select %156, %127, %102 : vector<8x32xi1>, vector<8x32xf32>
    %c0_59 = arith.constant 0 : index
    %c0_60 = arith.constant 0 : index
    %158 = vector.load %arg11[%c0_59, %c0_60] : memref<8x32xf32, #tpu.memory_space<vmem>>, vector<8x32xf32>
    tpu.vector_store %arg11[%c0_59, %c0_60], %157 {strides = array<i32>} : memref<8x32xf32, #tpu.memory_space<vmem>>, vector<8x32xf32>,
    %159 = vector.shape_cast %150 : vector<8x1xi1> to vector<8x1xi1>
    %160 = vector.broadcast %159 : vector<8x1xi1> to vector<8x32xi1>
    %161 = arith.select %160, %146, %103 : vector<8x32xi1>, vector<8x32xf32>
    %c0_61 = arith.constant 0 : index
    %c0_62 = arith.constant 0 : index
    %162 = vector.load %arg12[%c0_61, %c0_62] : memref<8x32xf32, #tpu.memory_space<vmem>>, vector<8x32xf32>
    tpu.vector_store %arg12[%c0_61, %c0_62], %161 {strides = array<i32>} : memref<8x32xf32, #tpu.memory_space<vmem>>, vector<8x32xf32>,
    %163 = vector.shape_cast %150 : vector<8x1xi1> to vector<8x1xi1>
    %164 = vector.broadcast %163 : vector<8x1xi1> to vector<8x32xi1>
    %165 = arith.select %164, %143, %104 : vector<8x32xi1>, vector<8x32xf32>
    %c0_63 = arith.constant 0 : index
    %c0_64 = arith.constant 0 : index
    %166 = vector.load %arg13[%c0_63, %c0_64] : memref<8x32xf32, #tpu.memory_space<vmem>>, vector<8x32xf32>
    tpu.vector_store %arg13[%c0_63, %c0_64], %165 {strides = array<i32>} : memref<8x32xf32, #tpu.memory_space<vmem>>, vector<8x32xf32>,
    %cst_65 = arith.constant 0.000000e+00 : f32
    %167 = vector.shape_cast %148 : vector<8x1xi1> to vector<8x1xi1>
    %168 = vector.broadcast %167 : vector<8x1xi1> to vector<8x32xi1>
    %169 = vector.broadcast %cst_65 : f32 to vector<8x32xf32>
    %170 = arith.select %168, %130, %169 : vector<8x32xi1>, vector<8x32xf32>
    %cst_66 = arith.constant 0.000000e+00 : f32
    %171 = vector.shape_cast %150 : vector<8x1xi1> to vector<8x1xi1>
    %172 = vector.broadcast %171 : vector<8x1xi1> to vector<8x32xi1>
    %173 = vector.broadcast %cst_66 : f32 to vector<8x32xf32>
    %174 = arith.select %172, %146, %173 : vector<8x32xi1>, vector<8x32xf32>
    %c0_67 = arith.constant 0 : index
    %c0_68 = arith.constant 0 : index
    %175 = vector.load %arg14[%c0_67, %c0_68] : memref<8x32xf32, #tpu.memory_space<vmem>>, vector<8x32xf32>
    %176 = arith.addf %175, %170 : vector<8x32xf32>
    %c0_69 = arith.constant 0 : index
    %c0_70 = arith.constant 0 : index
    %177 = vector.load %arg14[%c0_69, %c0_70] : memref<8x32xf32, #tpu.memory_space<vmem>>, vector<8x32xf32>
    tpu.vector_store %arg14[%c0_69, %c0_70], %176 {strides = array<i32>} : memref<8x32xf32, #tpu.memory_space<vmem>>, vector<8x32xf32>,
    %c0_71 = arith.constant 0 : index
    %c0_72 = arith.constant 0 : index
    %178 = vector.load %arg15[%c0_71, %c0_72] : memref<8x32xf32, #tpu.memory_space<vmem>>, vector<8x32xf32>
    %179 = arith.addf %178, %174 : vector<8x32xf32>
    %c0_73 = arith.constant 0 : index
    %c0_74 = arith.constant 0 : index
    %180 = vector.load %arg15[%c0_73, %c0_74] : memref<8x32xf32, #tpu.memory_space<vmem>>, vector<8x32xf32>
    tpu.vector_store %arg15[%c0_73, %c0_74], %179 {strides = array<i32>} : memref<8x32xf32, #tpu.memory_space<vmem>>, vector<8x32xf32>,
    %c2_i32 = arith.constant 2 : i32
    %181 = arith.addi %6, %c2_i32 : i32
    %c7_i32_75 = arith.constant 7 : i32
    %182 = arith.subi %c7_i32_75, %181 : i32
    %c8_i32_76 = arith.constant 8 : i32
    %183 = arith.muli %c2_i32, %c8_i32_76 : i32
    %184 = tpu.assume_multiple %183, 8 : i32
    %c3_i32_77 = arith.constant 3 : i32
    %185 = arith.subi %c3_i32_77, %c2_i32 : i32
    %c8_i32_78 = arith.constant 8 : i32
    %186 = arith.muli %185, %c8_i32_78 : i32
    %187 = tpu.assume_multiple %186, 8 : i32
    %c0_79 = arith.constant 0 : index
    %c0_80 = arith.constant 0 : index
    %188 = vector.load %arg10[%c0_79, %c0_80] : memref<8x32xf32, #tpu.memory_space<vmem>>, vector<8x32xf32>
    %c0_81 = arith.constant 0 : index
    %c0_82 = arith.constant 0 : index
    %189 = vector.load %arg11[%c0_81, %c0_82] : memref<8x32xf32, #tpu.memory_space<vmem>>, vector<8x32xf32>
    %c0_83 = arith.constant 0 : index
    %c0_84 = arith.constant 0 : index
    %190 = vector.load %arg12[%c0_83, %c0_84] : memref<8x32xf32, #tpu.memory_space<vmem>>, vector<8x32xf32>
    %c0_85 = arith.constant 0 : index
    %c0_86 = arith.constant 0 : index
    %191 = vector.load %arg13[%c0_85, %c0_86] : memref<8x32xf32, #tpu.memory_space<vmem>>, vector<8x32xf32>
    %192 = arith.truncf %188 : vector<8x32xf32> to vector<8x32xbf16>
    %cst_87 = arith.constant dense<0.000000e+00> : vector<8x128xf32>
    %193 = tpu.matmul %192, %4, %cst_87 {dimension_numbers = #tpu.dot_dimension_numbers<[1], [0], [0], [1], [0, 0, 1, 1], [], []>} : vector<8x32xbf16>, vector<32x128xbf16>, vector<8x128xf32> -> vector<8x128xf32>
    %194 = arith.index_cast %184 : i32 to index
    %c0_88 = arith.constant 0 : index
    %195 = vector.load %arg1[%194, %c0_88] : memref<32x128xf32, #tpu.memory_space<vmem>>, vector<8x128xf32>
    %196 = arith.addf %193, %195 : vector<8x128xf32>
    %197 = arith.truncf %190 : vector<8x32xf32> to vector<8x32xbf16>
    %cst_89 = arith.constant dense<0.000000e+00> : vector<8x128xf32>
    %198 = tpu.matmul %197, %5, %cst_89 {dimension_numbers = #tpu.dot_dimension_numbers<[1], [0], [0], [1], [0, 0, 1, 1], [], []>} : vector<8x32xbf16>, vector<32x128xbf16>, vector<8x128xf32> -> vector<8x128xf32>
    %199 = arith.index_cast %187 : i32 to index
    %c0_90 = arith.constant 0 : index
    %200 = vector.load %arg2[%199, %c0_90] : memref<32x128xf32, #tpu.memory_space<vmem>>, vector<8x128xf32>
    %201 = arith.addf %198, %200 : vector<8x128xf32>
    %202 = vector.extract_strided_slice %196 {offsets = [0, 0], sizes = [8, 96], strides = [1, 1]} : vector<8x128xf32> to vector<8x96xf32>
    %203 = arith.negf %202 : vector<8x96xf32>
    %204 = math.exp %203 : vector<8x96xf32>
    %cst_91 = arith.constant 1.000000e+00 : f32
    %205 = vector.broadcast %cst_91 : f32 to vector<8x96xf32>
    %206 = arith.addf %205, %204 : vector<8x96xf32>
    %207 = arith.divf %205, %206 : vector<8x96xf32>
    %208 = vector.extract_strided_slice %196 {offsets = [0, 96], sizes = [8, 32], strides = [1, 1]} : vector<8x128xf32> to vector<8x32xf32>
    %209 = math.tanh %208 : vector<8x32xf32>
    %210 = vector.extract_strided_slice %207 {offsets = [0, 32], sizes = [8, 32], strides = [1, 1]} : vector<8x96xf32> to vector<8x32xf32>
    %211 = arith.mulf %210, %189 : vector<8x32xf32>
    %212 = vector.extract_strided_slice %207 {offsets = [0, 0], sizes = [8, 32], strides = [1, 1]} : vector<8x96xf32> to vector<8x32xf32>
    %213 = arith.mulf %212, %209 : vector<8x32xf32>
    %214 = arith.addf %211, %213 : vector<8x32xf32>
    %215 = vector.extract_strided_slice %207 {offsets = [0, 64], sizes = [8, 32], strides = [1, 1]} : vector<8x96xf32> to vector<8x32xf32>
    %216 = math.tanh %214 : vector<8x32xf32>
    %217 = arith.mulf %215, %216 : vector<8x32xf32>
    %218 = vector.extract_strided_slice %201 {offsets = [0, 0], sizes = [8, 96], strides = [1, 1]} : vector<8x128xf32> to vector<8x96xf32>
    %219 = arith.negf %218 : vector<8x96xf32>
    %220 = math.exp %219 : vector<8x96xf32>
    %cst_92 = arith.constant 1.000000e+00 : f32
    %221 = vector.broadcast %cst_92 : f32 to vector<8x96xf32>
    %222 = arith.addf %221, %220 : vector<8x96xf32>
    %223 = arith.divf %221, %222 : vector<8x96xf32>
    %224 = vector.extract_strided_slice %201 {offsets = [0, 96], sizes = [8, 32], strides = [1, 1]} : vector<8x128xf32> to vector<8x32xf32>
    %225 = math.tanh %224 : vector<8x32xf32>
    %226 = vector.extract_strided_slice %223 {offsets = [0, 32], sizes = [8, 32], strides = [1, 1]} : vector<8x96xf32> to vector<8x32xf32>
    %227 = arith.mulf %226, %191 : vector<8x32xf32>
    %228 = vector.extract_strided_slice %223 {offsets = [0, 0], sizes = [8, 32], strides = [1, 1]} : vector<8x96xf32> to vector<8x32xf32>
    %229 = arith.mulf %228, %225 : vector<8x32xf32>
    %230 = arith.addf %227, %229 : vector<8x32xf32>
    %231 = vector.extract_strided_slice %223 {offsets = [0, 64], sizes = [8, 32], strides = [1, 1]} : vector<8x96xf32> to vector<8x32xf32>
    %232 = math.tanh %230 : vector<8x32xf32>
    %233 = arith.mulf %231, %232 : vector<8x32xf32>
    %234 = vector.broadcast %181 : i32 to vector<8x1xi32>
    %235 = arith.cmpi slt, %234, %3 : vector<8x1xi32>
    %236 = vector.broadcast %182 : i32 to vector<8x1xi32>
    %237 = arith.cmpi slt, %236, %3 : vector<8x1xi32>
    %238 = vector.shape_cast %235 : vector<8x1xi1> to vector<8x1xi1>
    %239 = vector.broadcast %238 : vector<8x1xi1> to vector<8x32xi1>
    %240 = arith.select %239, %217, %188 : vector<8x32xi1>, vector<8x32xf32>
    %c0_93 = arith.constant 0 : index
    %c0_94 = arith.constant 0 : index
    %241 = vector.load %arg10[%c0_93, %c0_94] : memref<8x32xf32, #tpu.memory_space<vmem>>, vector<8x32xf32>
    tpu.vector_store %arg10[%c0_93, %c0_94], %240 {strides = array<i32>} : memref<8x32xf32, #tpu.memory_space<vmem>>, vector<8x32xf32>,
    %242 = vector.shape_cast %235 : vector<8x1xi1> to vector<8x1xi1>
    %243 = vector.broadcast %242 : vector<8x1xi1> to vector<8x32xi1>
    %244 = arith.select %243, %214, %189 : vector<8x32xi1>, vector<8x32xf32>
    %c0_95 = arith.constant 0 : index
    %c0_96 = arith.constant 0 : index
    %245 = vector.load %arg11[%c0_95, %c0_96] : memref<8x32xf32, #tpu.memory_space<vmem>>, vector<8x32xf32>
    tpu.vector_store %arg11[%c0_95, %c0_96], %244 {strides = array<i32>} : memref<8x32xf32, #tpu.memory_space<vmem>>, vector<8x32xf32>,
    %246 = vector.shape_cast %237 : vector<8x1xi1> to vector<8x1xi1>
    %247 = vector.broadcast %246 : vector<8x1xi1> to vector<8x32xi1>
    %248 = arith.select %247, %233, %190 : vector<8x32xi1>, vector<8x32xf32>
    %c0_97 = arith.constant 0 : index
    %c0_98 = arith.constant 0 : index
    %249 = vector.load %arg12[%c0_97, %c0_98] : memref<8x32xf32, #tpu.memory_space<vmem>>, vector<8x32xf32>
    tpu.vector_store %arg12[%c0_97, %c0_98], %248 {strides = array<i32>} : memref<8x32xf32, #tpu.memory_space<vmem>>, vector<8x32xf32>,
    %250 = vector.shape_cast %237 : vector<8x1xi1> to vector<8x1xi1>
    %251 = vector.broadcast %250 : vector<8x1xi1> to vector<8x32xi1>
    %252 = arith.select %251, %230, %191 : vector<8x32xi1>, vector<8x32xf32>
    %c0_99 = arith.constant 0 : index
    %c0_100 = arith.constant 0 : index
    %253 = vector.load %arg13[%c0_99, %c0_100] : memref<8x32xf32, #tpu.memory_space<vmem>>, vector<8x32xf32>
    tpu.vector_store %arg13[%c0_99, %c0_100], %252 {strides = array<i32>} : memref<8x32xf32, #tpu.memory_space<vmem>>, vector<8x32xf32>,
    %cst_101 = arith.constant 0.000000e+00 : f32
    %254 = vector.shape_cast %235 : vector<8x1xi1> to vector<8x1xi1>
    %255 = vector.broadcast %254 : vector<8x1xi1> to vector<8x32xi1>
    %256 = vector.broadcast %cst_101 : f32 to vector<8x32xf32>
    %257 = arith.select %255, %217, %256 : vector<8x32xi1>, vector<8x32xf32>
    %cst_102 = arith.constant 0.000000e+00 : f32
    %258 = vector.shape_cast %237 : vector<8x1xi1> to vector<8x1xi1>
    %259 = vector.broadcast %258 : vector<8x1xi1> to vector<8x32xi1>
    %260 = vector.broadcast %cst_102 : f32 to vector<8x32xf32>
    %261 = arith.select %259, %233, %260 : vector<8x32xi1>, vector<8x32xf32>
    %c0_103 = arith.constant 0 : index
    %c0_104 = arith.constant 0 : index
    %262 = vector.load %arg14[%c0_103, %c0_104] : memref<8x32xf32, #tpu.memory_space<vmem>>, vector<8x32xf32>
    %263 = arith.addf %262, %257 : vector<8x32xf32>
    %c0_105 = arith.constant 0 : index
    %c0_106 = arith.constant 0 : index
    %264 = vector.load %arg14[%c0_105, %c0_106] : memref<8x32xf32, #tpu.memory_space<vmem>>, vector<8x32xf32>
    tpu.vector_store %arg14[%c0_105, %c0_106], %263 {strides = array<i32>} : memref<8x32xf32, #tpu.memory_space<vmem>>, vector<8x32xf32>,
    %c0_107 = arith.constant 0 : index
    %c0_108 = arith.constant 0 : index
    %265 = vector.load %arg15[%c0_107, %c0_108] : memref<8x32xf32, #tpu.memory_space<vmem>>, vector<8x32xf32>
    %266 = arith.addf %265, %261 : vector<8x32xf32>
    %c0_109 = arith.constant 0 : index
    %c0_110 = arith.constant 0 : index
    %267 = vector.load %arg15[%c0_109, %c0_110] : memref<8x32xf32, #tpu.memory_space<vmem>>, vector<8x32xf32>
    tpu.vector_store %arg15[%c0_109, %c0_110], %266 {strides = array<i32>} : memref<8x32xf32, #tpu.memory_space<vmem>>, vector<8x32xf32>,
    %c3_i32_111 = arith.constant 3 : i32
    %268 = arith.addi %6, %c3_i32_111 : i32
    %c7_i32_112 = arith.constant 7 : i32
    %269 = arith.subi %c7_i32_112, %268 : i32
    %c8_i32_113 = arith.constant 8 : i32
    %270 = arith.muli %c3_i32_111, %c8_i32_113 : i32
    %271 = tpu.assume_multiple %270, 8 : i32
    %c3_i32_114 = arith.constant 3 : i32
    %272 = arith.subi %c3_i32_114, %c3_i32_111 : i32
    %c8_i32_115 = arith.constant 8 : i32
    %273 = arith.muli %272, %c8_i32_115 : i32
    %274 = tpu.assume_multiple %273, 8 : i32
    %c0_116 = arith.constant 0 : index
    %c0_117 = arith.constant 0 : index
    %275 = vector.load %arg10[%c0_116, %c0_117] : memref<8x32xf32, #tpu.memory_space<vmem>>, vector<8x32xf32>
    %c0_118 = arith.constant 0 : index
    %c0_119 = arith.constant 0 : index
    %276 = vector.load %arg11[%c0_118, %c0_119] : memref<8x32xf32, #tpu.memory_space<vmem>>, vector<8x32xf32>
    %c0_120 = arith.constant 0 : index
    %c0_121 = arith.constant 0 : index
    %277 = vector.load %arg12[%c0_120, %c0_121] : memref<8x32xf32, #tpu.memory_space<vmem>>, vector<8x32xf32>
    %c0_122 = arith.constant 0 : index
    %c0_123 = arith.constant 0 : index
    %278 = vector.load %arg13[%c0_122, %c0_123] : memref<8x32xf32, #tpu.memory_space<vmem>>, vector<8x32xf32>
    %279 = arith.truncf %275 : vector<8x32xf32> to vector<8x32xbf16>
    %cst_124 = arith.constant dense<0.000000e+00> : vector<8x128xf32>
    %280 = tpu.matmul %279, %4, %cst_124 {dimension_numbers = #tpu.dot_dimension_numbers<[1], [0], [0], [1], [0, 0, 1, 1], [], []>} : vector<8x32xbf16>, vector<32x128xbf16>, vector<8x128xf32> -> vector<8x128xf32>
    %281 = arith.index_cast %271 : i32 to index
    %c0_125 = arith.constant 0 : index
    %282 = vector.load %arg1[%281, %c0_125] : memref<32x128xf32, #tpu.memory_space<vmem>>, vector<8x128xf32>
    %283 = arith.addf %280, %282 : vector<8x128xf32>
    %284 = arith.truncf %277 : vector<8x32xf32> to vector<8x32xbf16>
    %cst_126 = arith.constant dense<0.000000e+00> : vector<8x128xf32>
    %285 = tpu.matmul %284, %5, %cst_126 {dimension_numbers = #tpu.dot_dimension_numbers<[1], [0], [0], [1], [0, 0, 1, 1], [], []>} : vector<8x32xbf16>, vector<32x128xbf16>, vector<8x128xf32> -> vector<8x128xf32>
    %286 = arith.index_cast %274 : i32 to index
    %c0_127 = arith.constant 0 : index
    %287 = vector.load %arg2[%286, %c0_127] : memref<32x128xf32, #tpu.memory_space<vmem>>, vector<8x128xf32>
    %288 = arith.addf %285, %287 : vector<8x128xf32>
    %289 = vector.extract_strided_slice %283 {offsets = [0, 0], sizes = [8, 96], strides = [1, 1]} : vector<8x128xf32> to vector<8x96xf32>
    %290 = arith.negf %289 : vector<8x96xf32>
    %291 = math.exp %290 : vector<8x96xf32>
    %cst_128 = arith.constant 1.000000e+00 : f32
    %292 = vector.broadcast %cst_128 : f32 to vector<8x96xf32>
    %293 = arith.addf %292, %291 : vector<8x96xf32>
    %294 = arith.divf %292, %293 : vector<8x96xf32>
    %295 = vector.extract_strided_slice %283 {offsets = [0, 96], sizes = [8, 32], strides = [1, 1]} : vector<8x128xf32> to vector<8x32xf32>
    %296 = math.tanh %295 : vector<8x32xf32>
    %297 = vector.extract_strided_slice %294 {offsets = [0, 32], sizes = [8, 32], strides = [1, 1]} : vector<8x96xf32> to vector<8x32xf32>
    %298 = arith.mulf %297, %276 : vector<8x32xf32>
    %299 = vector.extract_strided_slice %294 {offsets = [0, 0], sizes = [8, 32], strides = [1, 1]} : vector<8x96xf32> to vector<8x32xf32>
    %300 = arith.mulf %299, %296 : vector<8x32xf32>
    %301 = arith.addf %298, %300 : vector<8x32xf32>
    %302 = vector.extract_strided_slice %294 {offsets = [0, 64], sizes = [8, 32], strides = [1, 1]} : vector<8x96xf32> to vector<8x32xf32>
    %303 = math.tanh %301 : vector<8x32xf32>
    %304 = arith.mulf %302, %303 : vector<8x32xf32>
    %305 = vector.extract_strided_slice %288 {offsets = [0, 0], sizes = [8, 96], strides = [1, 1]} : vector<8x128xf32> to vector<8x96xf32>
    %306 = arith.negf %305 : vector<8x96xf32>
    %307 = math.exp %306 : vector<8x96xf32>
    %cst_129 = arith.constant 1.000000e+00 : f32
    %308 = vector.broadcast %cst_129 : f32 to vector<8x96xf32>
    %309 = arith.addf %308, %307 : vector<8x96xf32>
    %310 = arith.divf %308, %309 : vector<8x96xf32>
    %311 = vector.extract_strided_slice %288 {offsets = [0, 96], sizes = [8, 32], strides = [1, 1]} : vector<8x128xf32> to vector<8x32xf32>
    %312 = math.tanh %311 : vector<8x32xf32>
    %313 = vector.extract_strided_slice %310 {offsets = [0, 32], sizes = [8, 32], strides = [1, 1]} : vector<8x96xf32> to vector<8x32xf32>
    %314 = arith.mulf %313, %278 : vector<8x32xf32>
    %315 = vector.extract_strided_slice %310 {offsets = [0, 0], sizes = [8, 32], strides = [1, 1]} : vector<8x96xf32> to vector<8x32xf32>
    %316 = arith.mulf %315, %312 : vector<8x32xf32>
    %317 = arith.addf %314, %316 : vector<8x32xf32>
    %318 = vector.extract_strided_slice %310 {offsets = [0, 64], sizes = [8, 32], strides = [1, 1]} : vector<8x96xf32> to vector<8x32xf32>
    %319 = math.tanh %317 : vector<8x32xf32>
    %320 = arith.mulf %318, %319 : vector<8x32xf32>
    %321 = vector.broadcast %268 : i32 to vector<8x1xi32>
    %322 = arith.cmpi slt, %321, %3 : vector<8x1xi32>
    %323 = vector.broadcast %269 : i32 to vector<8x1xi32>
    %324 = arith.cmpi slt, %323, %3 : vector<8x1xi32>
    %325 = vector.shape_cast %322 : vector<8x1xi1> to vector<8x1xi1>
    %326 = vector.broadcast %325 : vector<8x1xi1> to vector<8x32xi1>
    %327 = arith.select %326, %304, %275 : vector<8x32xi1>, vector<8x32xf32>
    %c0_130 = arith.constant 0 : index
    %c0_131 = arith.constant 0 : index
    %328 = vector.load %arg10[%c0_130, %c0_131] : memref<8x32xf32, #tpu.memory_space<vmem>>, vector<8x32xf32>
    tpu.vector_store %arg10[%c0_130, %c0_131], %327 {strides = array<i32>} : memref<8x32xf32, #tpu.memory_space<vmem>>, vector<8x32xf32>,
    %329 = vector.shape_cast %322 : vector<8x1xi1> to vector<8x1xi1>
    %330 = vector.broadcast %329 : vector<8x1xi1> to vector<8x32xi1>
    %331 = arith.select %330, %301, %276 : vector<8x32xi1>, vector<8x32xf32>
    %c0_132 = arith.constant 0 : index
    %c0_133 = arith.constant 0 : index
    %332 = vector.load %arg11[%c0_132, %c0_133] : memref<8x32xf32, #tpu.memory_space<vmem>>, vector<8x32xf32>
    tpu.vector_store %arg11[%c0_132, %c0_133], %331 {strides = array<i32>} : memref<8x32xf32, #tpu.memory_space<vmem>>, vector<8x32xf32>,
    %333 = vector.shape_cast %324 : vector<8x1xi1> to vector<8x1xi1>
    %334 = vector.broadcast %333 : vector<8x1xi1> to vector<8x32xi1>
    %335 = arith.select %334, %320, %277 : vector<8x32xi1>, vector<8x32xf32>
    %c0_134 = arith.constant 0 : index
    %c0_135 = arith.constant 0 : index
    %336 = vector.load %arg12[%c0_134, %c0_135] : memref<8x32xf32, #tpu.memory_space<vmem>>, vector<8x32xf32>
    tpu.vector_store %arg12[%c0_134, %c0_135], %335 {strides = array<i32>} : memref<8x32xf32, #tpu.memory_space<vmem>>, vector<8x32xf32>,
    %337 = vector.shape_cast %324 : vector<8x1xi1> to vector<8x1xi1>
    %338 = vector.broadcast %337 : vector<8x1xi1> to vector<8x32xi1>
    %339 = arith.select %338, %317, %278 : vector<8x32xi1>, vector<8x32xf32>
    %c0_136 = arith.constant 0 : index
    %c0_137 = arith.constant 0 : index
    %340 = vector.load %arg13[%c0_136, %c0_137] : memref<8x32xf32, #tpu.memory_space<vmem>>, vector<8x32xf32>
    tpu.vector_store %arg13[%c0_136, %c0_137], %339 {strides = array<i32>} : memref<8x32xf32, #tpu.memory_space<vmem>>, vector<8x32xf32>,
    %cst_138 = arith.constant 0.000000e+00 : f32
    %341 = vector.shape_cast %322 : vector<8x1xi1> to vector<8x1xi1>
    %342 = vector.broadcast %341 : vector<8x1xi1> to vector<8x32xi1>
    %343 = vector.broadcast %cst_138 : f32 to vector<8x32xf32>
    %344 = arith.select %342, %304, %343 : vector<8x32xi1>, vector<8x32xf32>
    %cst_139 = arith.constant 0.000000e+00 : f32
    %345 = vector.shape_cast %324 : vector<8x1xi1> to vector<8x1xi1>
    %346 = vector.broadcast %345 : vector<8x1xi1> to vector<8x32xi1>
    %347 = vector.broadcast %cst_139 : f32 to vector<8x32xf32>
    %348 = arith.select %346, %320, %347 : vector<8x32xi1>, vector<8x32xf32>
    %c0_140 = arith.constant 0 : index
    %c0_141 = arith.constant 0 : index
    %349 = vector.load %arg14[%c0_140, %c0_141] : memref<8x32xf32, #tpu.memory_space<vmem>>, vector<8x32xf32>
    %350 = arith.addf %349, %344 : vector<8x32xf32>
    %c0_142 = arith.constant 0 : index
    %c0_143 = arith.constant 0 : index
    %351 = vector.load %arg14[%c0_142, %c0_143] : memref<8x32xf32, #tpu.memory_space<vmem>>, vector<8x32xf32>
    tpu.vector_store %arg14[%c0_142, %c0_143], %350 {strides = array<i32>} : memref<8x32xf32, #tpu.memory_space<vmem>>, vector<8x32xf32>,
    %c0_144 = arith.constant 0 : index
    %c0_145 = arith.constant 0 : index
    %352 = vector.load %arg15[%c0_144, %c0_145] : memref<8x32xf32, #tpu.memory_space<vmem>>, vector<8x32xf32>
    %353 = arith.addf %352, %348 : vector<8x32xf32>
    %c0_146 = arith.constant 0 : index
    %c0_147 = arith.constant 0 : index
    %354 = vector.load %arg15[%c0_146, %c0_147] : memref<8x32xf32, #tpu.memory_space<vmem>>, vector<8x32xf32>
    tpu.vector_store %arg15[%c0_146, %c0_147], %353 {strides = array<i32>} : memref<8x32xf32, #tpu.memory_space<vmem>>, vector<8x32xf32>,
    %c4_i32_148 = arith.constant 4 : i32
    %c1_i32_149 = arith.constant 1 : i32
    %355 = arith.cmpi eq, %arg0, %c1_i32_149 : i32
    %356 = arith.extui %355 : i1 to i32
    %c0_i32_150 = arith.constant 0 : i32
    %357 = arith.cmpi ne, %356, %c0_i32_150 : i32
    scf.if %357 {
      %358 = arith.sitofp %3 : vector<8x1xi32> to vector<8x1xf32>
      %cst_151 = arith.constant 1.000000e+00 : f32
      %359 = vector.broadcast %cst_151 : f32 to vector<8x1xf32>
      %360 = arith.maximumf %358, %359 : vector<8x1xf32>
      %c0_152 = arith.constant 0 : index
      %c0_153 = arith.constant 0 : index
      %361 = vector.load %arg14[%c0_152, %c0_153] : memref<8x32xf32, #tpu.memory_space<vmem>>, vector<8x32xf32>
      %362 = vector.broadcast %360 : vector<8x1xf32> to vector<8x32xf32>
      %363 = arith.divf %361, %362 : vector<8x32xf32>
      %c0_154 = arith.constant 0 : index
      %c0_155 = arith.constant 0 : index
      %364 = vector.load %arg15[%c0_154, %c0_155] : memref<8x32xf32, #tpu.memory_space<vmem>>, vector<8x32xf32>
      %365 = vector.broadcast %360 : vector<8x1xf32> to vector<8x32xf32>
      %366 = arith.divf %364, %365 : vector<8x32xf32>
      %c0_156 = arith.constant 0 : index
      %c0_157 = arith.constant 0 : index
      %367 = vector.load %arg6[%c0_156, %c0_157] : memref<32x4xf32, #tpu.memory_space<vmem>>, vector<32x4xf32>
      %cst_158 = arith.constant dense<0.000000e+00> : vector<8x4xf32>
      %368 = tpu.matmul %363, %367, %cst_158 {dimension_numbers = #tpu.dot_dimension_numbers<[1], [0], [0], [1], [0, 0, 1, 1], [], []>} : vector<8x32xf32>, vector<32x4xf32>, vector<8x4xf32> -> vector<8x4xf32>
      %c0_159 = arith.constant 0 : index
      %c0_160 = arith.constant 0 : index
      %369 = vector.load %arg7[%c0_159, %c0_160] : memref<32x4xf32, #tpu.memory_space<vmem>>, vector<32x4xf32>
      %cst_161 = arith.constant dense<0.000000e+00> : vector<8x4xf32>
      %370 = tpu.matmul %366, %369, %cst_161 {dimension_numbers = #tpu.dot_dimension_numbers<[1], [0], [0], [1], [0, 0, 1, 1], [], []>} : vector<8x32xf32>, vector<32x4xf32>, vector<8x4xf32> -> vector<8x4xf32>
      %371 = arith.addf %368, %370 : vector<8x4xf32>
      %c0_162 = arith.constant 0 : index
      %c0_163 = arith.constant 0 : index
      %372 = vector.load %arg8[%c0_162, %c0_163] : memref<1x4xf32, #tpu.memory_space<vmem>>, vector<1x4xf32>
      %373 = vector.broadcast %372 : vector<1x4xf32> to vector<8x4xf32>
      %374 = arith.addf %371, %373 : vector<8x4xf32>
      %c0_164 = arith.constant 0 : index
      %c0_165 = arith.constant 0 : index
      %375 = vector.load %arg9[%c0_164, %c0_165] : memref<8x4xf32, #tpu.memory_space<vmem>>, vector<8x4xf32>
      tpu.vector_store %arg9[%c0_164, %c0_165], %374 {strides = array<i32>} : memref<8x4xf32, #tpu.memory_space<vmem>>, vector<8x4xf32>,
    } else {
    }
    return
  }
  func.func @transform_0(%arg0: i32) -> (i32, i32) {
    %c0_i32 = arith.constant 0 : i32
    %c0_i32_0 = arith.constant 0 : i32
    return %arg0, %c0_i32 : i32, i32
  }
  func.func @transform_1(%arg0: i32) -> (i32, i32) {
    %c1_i32 = arith.constant 1 : i32
    %0 = arith.subi %c1_i32, %arg0 : i32
    %c1_i32_0 = arith.constant 1 : i32
    %c0_i32 = arith.constant 0 : i32
    return %0, %c1_i32_0 : i32, i32
  }
  func.func @transform_2(%arg0: i32) -> (i32, i32) {
    %c0_i32 = arith.constant 0 : i32
    %c0_i32_0 = arith.constant 0 : i32
    %c0_i32_1 = arith.constant 0 : i32
    return %c0_i32, %c0_i32_0 : i32, i32
  }
  func.func @transform_3(%arg0: i32) -> (i32, i32) {
    %c0_i32 = arith.constant 0 : i32
    %c0_i32_0 = arith.constant 0 : i32
    %c0_i32_1 = arith.constant 0 : i32
    return %c0_i32, %c0_i32_0 : i32, i32
  }
  func.func @transform_4(%arg0: i32) -> (i32, i32) {
    %c0_i32 = arith.constant 0 : i32
    %c0_i32_0 = arith.constant 0 : i32
    %c0_i32_1 = arith.constant 0 : i32
    return %c0_i32, %c0_i32_0 : i32, i32
  }
  func.func @transform_5(%arg0: i32) -> (i32, i32) {
    %c0_i32 = arith.constant 0 : i32
    %c0_i32_0 = arith.constant 0 : i32
    %c0_i32_1 = arith.constant 0 : i32
    return %c0_i32, %c0_i32_0 : i32, i32
  }
  func.func @transform_6(%arg0: i32) -> (i32, i32) {
    %c0_i32 = arith.constant 0 : i32
    %c0_i32_0 = arith.constant 0 : i32
    %c0_i32_1 = arith.constant 0 : i32
    return %c0_i32, %c0_i32_0 : i32, i32
  }
  func.func @transform_7(%arg0: i32) -> (i32, i32) {
    %c0_i32 = arith.constant 0 : i32
    %c0_i32_0 = arith.constant 0 : i32
    %c0_i32_1 = arith.constant 0 : i32
    return %c0_i32, %c0_i32_0 : i32, i32
  }
  func.func @transform_8(%arg0: i32) -> (i32, i32) {
    %c0_i32 = arith.constant 0 : i32
    %c0_i32_0 = arith.constant 0 : i32
    %c0_i32_1 = arith.constant 0 : i32
    return %c0_i32, %c0_i32_0 : i32, i32
  }
}

</mosaic_0001>

<llo_original>
// kernel: bilstm_forward.2
$region0: #{bilstm_forward.2}
  #allocation0 [shape = 'u32[]', space=smem, size = 0x4, offset = 0x4, fixed_abs, tag = 'smem constant byte address 0x4 - core index']
  #allocation1 [shape = 'u32[72,128]{1,0:T(1,128)}', space=vmem, size = 0x9000, scoped, tag = 'internal scratch']
  #allocation2 [shape = 'f32[8,32]{1,0:T(8,128)}', space=vmem, size = 0x1000, scoped, tag = 'scratch operand']
  #allocation3 [shape = 'f32[8,32]{1,0:T(8,128)}', space=vmem, size = 0x1000, scoped, tag = 'scratch operand']
  #allocation4 [shape = 'f32[8,32]{1,0:T(8,128)}', space=vmem, size = 0x1000, scoped, tag = 'scratch operand']
  #allocation5 [shape = 'f32[8,32]{1,0:T(8,128)}', space=vmem, size = 0x1000, scoped, tag = 'scratch operand']
  %s0 = inlined_call_operand.vmem [shape: f32[64,256], index: 0, kind: input, shape index: {}, may-alias: {0,1}]
  %s1 = inlined_call_operand.vmem [shape: f32[64,256], index: 1, kind: input, shape index: {}, may-alias: {0,1}]
  %s2 = inlined_call_operand.vmem [shape: bf16[32,128], index: 2, kind: input, shape index: {}]
  %s3 = inlined_call_operand.vmem [shape: bf16[32,128], index: 3, kind: input, shape index: {}]
  %s4 = inlined_call_operand.vmem [shape: s32[8,1], index: 4, kind: input, shape index: {}]
  %s5 = inlined_call_operand.vmem [shape: f32[64,32], index: 5, kind: output, shape index: {0}]
  %s6 = inlined_call_operand.vmem [shape: f32[64,32], index: 6, kind: output, shape index: {1}]
  %7 = xla_tuple %s5, %s6
  %s8 = sld [smem:[#allocation0]]
  $region141: #{bilstm_forward.2} parent=0
    _
  %s10 = ssub.s32 1, %s8
  %s11 = scalar_select 0, %s10, %s8
  $region1: #{bilstm_forward.2} parent=0
    #allocation6 [shape = 'u8[32768]{0}', space=vmem, size = 0x8000, scoped, tag = 'input window, operand 0']
    #allocation7 [shape = 'u8[32768]{0}', space=vmem, size = 0x8000, scoped, tag = 'input window, operand 1']
    loop: start=0, step=1, limit=4
    $region2: #{bilstm_forward.2} parent=1 // loop_pre_header
      _
    $region3: #{bilstm_forward.2} parent=1 // loop_header
      %s13 = sphi 0, %s17
      %p14 = scmp.ge.s32.totalorder %s13, 4
      %s23 = sphi 0, %s25
      %s26 = sphi 0, %s23
      %s27 = sphi 0, %s26
      %s43 = sphi 0, %s27
      %s51 = sphi 0, %s53
      %s54 = sphi 0, %s51
      %s55 = sphi 0, %s54
      %s71 = sphi 0, %s55
      %s75 = sphi 0, %s75
      %s77 = sphi 0, %s75
      %s78 = sphi 0, %s77
      %s92 = sphi 0, %s78
      %s96 = sphi 0, %s96
      %s98 = sphi 0, %s96
      %s99 = sphi 0, %s98
      %s113 = sphi 0, %s99
      %s117 = sphi 0, %s117
      %s119 = sphi 0, %s117
      %s120 = sphi 0, %s119
      %s134 = sphi 0, %s120
      %s140 = sphi 0, %s142
      %s143 = sphi 0, %s140
      %s144 = sphi 0, %s143
      %s160 = sphi 0, %s144
      %s168 = sphi 0, %s170
      %s171 = sphi 0, %s168
      %s172 = sphi 0, %s171
      %s188 = sphi 0, %s172
    $region4: #{bilstm_forward.2} parent=1 // loop_header_branch
      %16 = sbr.rel (%p14) target = $region8
    $region5: #{bilstm_forward.2} parent=1 // loop_body
      %s18 = ssub.s32 %s13, 1
      %s19 = ssub.s32 %s13, 2
      %s20 = sadd.s32 %s13, 1
      %s21 = ssub.s32 %s13, %s20
      %p22 = scmp.eq.s32.totalorder %s21, 0
      %s24 = sadd.s32 %s23, 1
      %s25 = scalar_select %p22, %s23, %s24
      %p28 = pneg %p22
      %p29 = scmp.eq.s32.totalorder %s13, 1
      %p30 = por %p28, %p29
      %p31 = scmp.ne.s32.totalorder %s23, %s26
      %p32 = scmp.eq.s32.totalorder %s13, 0
      %p33 = por %p31, %p32
      %p34 = scmp.ne.s32.totalorder %s23, %s26
      %p35 = scmp.eq.s32.totalorder %s18, 1
      %p36 = por %p34, %p35
      %p37 = scmp.ne.s32.totalorder %s26, %s27
      %p38 = scmp.eq.s32.totalorder %s18, 0
      %p39 = por %p37, %p38
      %p40 = scmp.ne.s32.totalorder %s26, %s27
      %p41 = scmp.eq.s32.totalorder %s19, 1
      %p42 = por %p40, %p41
      %p44 = scmp.ne.s32.totalorder %s27, %s43
      %p45 = scmp.eq.s32.totalorder %s19, 0
      %p46 = por %p44, %p45
      %s47 = ssub.s32 1, %s13
      %s48 = ssub.s32 1, %s20
      %s49 = ssub.s32 %s47, %s48
      %p50 = scmp.eq.s32.totalorder %s49, 0
      %s52 = sadd.s32 %s51, 1
      %s53 = scalar_select %p50, %s51, %s52
      %p56 = pneg %p50
      %p57 = scmp.eq.s32.totalorder %s13, 1
      %p58 = por %p56, %p57
      %p59 = scmp.ne.s32.totalorder %s51, %s54
      %p60 = scmp.eq.s32.totalorder %s13, 0
      %p61 = por %p59, %p60
      %p62 = scmp.ne.s32.totalorder %s51, %s54
      %p63 = scmp.eq.s32.totalorder %s18, 1
      %p64 = por %p62, %p63
      %p65 = scmp.ne.s32.totalorder %s54, %s55
      %p66 = scmp.eq.s32.totalorder %s18, 0
      %p67 = por %p65, %p66
      %p68 = scmp.ne.s32.totalorder %s54, %s55
      %p69 = scmp.eq.s32.totalorder %s19, 1
      %p70 = por %p68, %p69
      %p72 = scmp.ne.s32.totalorder %s55, %s71
      %p73 = scmp.eq.s32.totalorder %s19, 0
      %p74 = por %p72, %p73
      %s76 = sadd.s32 %s75, 1
      %p79 = scmp.eq.s32.totalorder %s13, 1
      %p80 = scmp.ne.s32.totalorder %s75, %s77
      %p81 = scmp.eq.s32.totalorder %s13, 0
      %p82 = por %p80, %p81
      %p83 = scmp.ne.s32.totalorder %s75, %s77
      %p84 = scmp.eq.s32.totalorder %s18, 1
      %p85 = por %p83, %p84
      %p86 = scmp.ne.s32.totalorder %s77, %s78
      %p87 = scmp.eq.s32.totalorder %s18, 0
      %p88 = por %p86, %p87
      %p89 = scmp.ne.s32.totalorder %s77, %s78
      %p90 = scmp.eq.s32.totalorder %s19, 1
      %p91 = por %p89, %p90
      %p93 = scmp.ne.s32.totalorder %s78, %s92
      %p94 = scmp.eq.s32.totalorder %s19, 0
      %p95 = por %p93, %p94
      %s97 = sadd.s32 %s96, 1
      %p100 = scmp.eq.s32.totalorder %s13, 1
      %p101 = scmp.ne.s32.totalorder %s96, %s98
      %p102 = scmp.eq.s32.totalorder %s13, 0
      %p103 = por %p101, %p102
      %p104 = scmp.ne.s32.totalorder %s96, %s98
      %p105 = scmp.eq.s32.totalorder %s18, 1
      %p106 = por %p104, %p105
      %p107 = scmp.ne.s32.totalorder %s98, %s99
      %p108 = scmp.eq.s32.totalorder %s18, 0
      %p109 = por %p107, %p108
      %p110 = scmp.ne.s32.totalorder %s98, %s99
      %p111 = scmp.eq.s32.totalorder %s19, 1
      %p112 = por %p110, %p111
      %p114 = scmp.ne.s32.totalorder %s99, %s113
      %p115 = scmp.eq.s32.totalorder %s19, 0
      %p116 = por %p114, %p115
      %s118 = sadd.s32 %s117, 1
      %p121 = scmp.eq.s32.totalorder %s13, 1
      %p122 = scmp.ne.s32.totalorder %s117, %s119
      %p123 = scmp.eq.s32.totalorder %s13, 0
      %p124 = por %p122, %p123
      %p125 = scmp.ne.s32.totalorder %s117, %s119
      %p126 = scmp.eq.s32.totalorder %s18, 1
      %p127 = por %p125, %p126
      %p128 = scmp.ne.s32.totalorder %s119, %s120
      %p129 = scmp.eq.s32.totalorder %s18, 0
      %p130 = por %p128, %p129
      %p131 = scmp.ne.s32.totalorder %s119, %s120
      %p132 = scmp.eq.s32.totalorder %s19, 1
      %p133 = por %p131, %p132
      %p135 = scmp.ne.s32.totalorder %s120, %s134
      %p136 = scmp.eq.s32.totalorder %s19, 0
      %p137 = por %p135, %p136
      %s138 = ssub.s32 %s13, %s20
      %p139 = scmp.eq.s32.totalorder %s138, 0
      %s141 = sadd.s32 %s140, 1
      %s142 = scalar_select %p139, %s140, %s141
      %p145 = pneg %p139
      %p146 = scmp.eq.s32.totalorder %s13, 1
      %p147 = por %p145, %p146
      %p148 = scmp.ne.s32.totalorder %s140, %s143
      %p149 = scmp.eq.s32.totalorder %s13, 0
      %p150 = por %p148, %p149
      %p151 = scmp.ne.s32.totalorder %s140, %s143
      %p152 = scmp.eq.s32.totalorder %s18, 1
      %p153 = por %p151, %p152
      %p154 = scmp.ne.s32.totalorder %s143, %s144
      %p155 = scmp.eq.s32.totalorder %s18, 0
      %p156 = por %p154, %p155
      %p157 = scmp.ne.s32.totalorder %s143, %s144
      %p158 = scmp.eq.s32.totalorder %s19, 1
      %p159 = por %p157, %p158
      %p161 = scmp.ne.s32.totalorder %s144, %s160
      %p162 = scmp.eq.s32.totalorder %s19, 0
      %p163 = por %p161, %p162
      %s164 = ssub.s32 1, %s13
      %s165 = ssub.s32 1, %s20
      %s166 = ssub.s32 %s164, %s165
      %p167 = scmp.eq.s32.totalorder %s166, 0
      %s169 = sadd.s32 %s168, 1
      %s170 = scalar_select %p167, %s168, %s169
      %p173 = pneg %p167
      %p174 = scmp.eq.s32.totalorder %s13, 1
      %p175 = por %p173, %p174
      %p176 = scmp.ne.s32.totalorder %s168, %s171
      %p177 = scmp.eq.s32.totalorder %s13, 0
      %p178 = por %p176, %p177
      %p179 = scmp.ne.s32.totalorder %s168, %s171
      %p180 = scmp.eq.s32.totalorder %s18, 1
      %p181 = por %p179, %p180
      %p182 = scmp.ne.s32.totalorder %s171, %s172
      %p183 = scmp.eq.s32.totalorder %s18, 0
      %p184 = por %p182, %p183
      %p185 = scmp.ne.s32.totalorder %s171, %s172
      %p186 = scmp.eq.s32.totalorder %s19, 1
      %p187 = por %p185, %p186
      %p189 = scmp.ne.s32.totalorder %s172, %s188
      %p190 = scmp.eq.s32.totalorder %s19, 0
      %p191 = por %p189, %p190
      %p192 = scmp.le.s32.totalorder 1, %s13
      %p193 = scmp.lt.s32.totalorder %s13, 3
      %p194 = pnand %p192, %p193
      %p195 = pneg %p194
      // Predicated region
      $region9: #{bilstm_forward.2} parent=5 // pred_check
        _
      $region10: #{bilstm_forward.2} parent=5 // pred_check_branch
        %197 = sbr.rel (%p194) target = $region12
      $region11: #{bilstm_forward.2} parent=5 // pred_region
        %s198 = ssub.s32 %s13, 1
        // Predicated region
        $region13: #{bilstm_forward.2} parent=11 // pred_check
          %p199 = pneg %p88
        $region14: #{bilstm_forward.2} parent=11 // pred_check_branch
          %201 = sbr.rel (%p199) target = $region16
        $region15: #{bilstm_forward.2} parent=11 // pred_region
          _
        $region16: #{bilstm_forward.2} parent=11 // pred_fallthru
          _
        // Predicated region
        $region17: #{bilstm_forward.2} parent=11 // pred_check
          %p202 = pneg %p109
        $region18: #{bilstm_forward.2} parent=11 // pred_check_branch
          %204 = sbr.rel (%p202) target = $region20
        $region19: #{bilstm_forward.2} parent=11 // pred_region
          _
        $region20: #{bilstm_forward.2} parent=11 // pred_fallthru
          _
        // Predicated region
        $region21: #{bilstm_forward.2} parent=11 // pred_check
          %p205 = pneg %p130
        $region22: #{bilstm_forward.2} parent=11 // pred_check_branch
          %207 = sbr.rel (%p205) target = $region24
        $region23: #{bilstm_forward.2} parent=11 // pred_region
          _
        $region24: #{bilstm_forward.2} parent=11 // pred_fallthru
          _
      $region12: #{bilstm_forward.2} parent=5 // pred_fallthru
        _
      %p208 = scmp.lt.s32.totalorder %s13, 2
      // Predicated region
      $region25: #{bilstm_forward.2} parent=5 // pred_check
        %p209 = pneg %p208
      $region26: #{bilstm_forward.2} parent=5 // pred_check_branch
        %211 = sbr.rel (%p209) target = $region28
      $region27: #{bilstm_forward.2} parent=5 // pred_region
        // Predicated region
        $region29: #{bilstm_forward.2} parent=27 // pred_check
          %p212 = pneg %p33
        $region30: #{bilstm_forward.2} parent=27 // pred_check_branch
          %214 = sbr.rel (%p212) target = $region32
        $region31: #{bilstm_forward.2} parent=27 // pred_region
          %s215 = sand.u32 %s23, 1
          %s216 = sand.u32 %s23, 1
          %s217 = smul.addr %s216, 32
          %s218 = scalar_lea.vmem [#allocation6], %s217
          %s219 = smul.u32 4, %s13
          %s220 = smul.addr %s219, 2
          %s221 = smul.addr %s220, 8
          %s222 = scalar_lea.vmem %s0, %s221
          // Predicated region
          $region33: #{bilstm_forward.2} parent=31 // pred_check
            _
          $region34: #{bilstm_forward.2} parent=31 // pred_check_branch
            %224 = sbr.rel (0) target = $region36
          $region35: #{bilstm_forward.2} parent=31 // pred_region
            // Predicated region
            $region37: #{bilstm_forward.2} parent=35 // pred_check
              _
            $region38: #{bilstm_forward.2} parent=35 // pred_check_branch
              %226 = sbr.rel (0) target = $region40
            $region39: #{bilstm_forward.2} parent=35 // pred_region
              // Predicated region
              $region52: #{bilstm_forward.2} parent=39 // pred_check
                _
              $region53: #{bilstm_forward.2} parent=39 // pred_check_branch
                %248 = sbr.rel (0) target = $region55
              $region54: #{bilstm_forward.2} parent=39 // pred_region
                loop: start=0, step=1, limit=1
                $region56: #{bilstm_forward.2} parent=54 // loop_pre_header
                  _
                $region57: #{bilstm_forward.2} parent=54 // loop_header
                  %s250 = sphi 0, %s254
                  %p251 = scmp.ge.s32.totalorder %s250, 1
                  %s255 = sphi %s222, %s222
                  %s256 = sphi %s218, %s218
                $region58: #{bilstm_forward.2} parent=54 // loop_header_branch
                  %253 = sbr.rel (%p251) target = $region62
                $region59: #{bilstm_forward.2} parent=54 // loop_body
                  %v257 = vld [vmem:[%s255] sm:$0xff]
                  %258 = vst [vmem:[%s256] sm:$0xff] %v257
                  %v259 = vld [vmem:[%s255 + $0x10] sm:$0xff]
                  %260 = vst [vmem:[%s256 + $0x8] sm:$0xff] %v259
                  %v261 = vld [vmem:[%s255 + $0x20] sm:$0xff]
                  %262 = vst [vmem:[%s256 + $0x10] sm:$0xff] %v261
                  %v263 = vld [vmem:[%s255 + $0x30] sm:$0xff]
                  %264 = vst [vmem:[%s256 + $0x18] sm:$0xff] %v263
                $region60: #{bilstm_forward.2} parent=54 // loop_footer
                  %s254 = sadd.s32 1, %s250
                $region61: #{bilstm_forward.2} parent=54 // loop_footer_branch
                  %249 = sbr.rel target = $region57
                $region62: #{bilstm_forward.2} parent=54 // loop_exit
                  _
              $region55: #{bilstm_forward.2} parent=39 // pred_fallthru
                _
              // Predicated region
              $region63: #{bilstm_forward.2} parent=39 // pred_check
                _
              $region64: #{bilstm_forward.2} parent=39 // pred_check_branch
                %266 = sbr.rel target = $region66
              $region65: #{bilstm_forward.2} parent=39 // pred_region
                _
              $region66: #{bilstm_forward.2} parent=39 // pred_fallthru
                _
            $region40: #{bilstm_forward.2} parent=35 // pred_fallthru
              _
            // Predicated region
            $region41: #{bilstm_forward.2} parent=35 // pred_check
              _
            $region42: #{bilstm_forward.2} parent=35 // pred_check_branch
              %228 = sbr.rel target = $region44
            $region43: #{bilstm_forward.2} parent=35 // pred_region
              %s230 = ssub.s32 256, 1
              loop: start=0, step=1, limit=1
              $region45: #{bilstm_forward.2} parent=43 // loop_pre_header
                _
              $region46: #{bilstm_forward.2} parent=43 // loop_header
                %s232 = sphi 0, %s236
                %p233 = scmp.ge.s32.totalorder %s232, 1
                %s237 = sphi %s222, %s222
                %s238 = sphi %s218, %s218
              $region47: #{bilstm_forward.2} parent=43 // loop_header_branch
                %235 = sbr.rel (%p233) target = $region51
              $region48: #{bilstm_forward.2} parent=43 // loop_body
                %v239 = vld [vmem:[%s237] sm:%s230]
                %240 = vst [vmem:[%s238] sm:%s230] %v239
                %v241 = vld [vmem:[%s237 + $0x10] sm:%s230]
                %242 = vst [vmem:[%s238 + $0x8] sm:%s230] %v241
                %v243 = vld [vmem:[%s237 + $0x20] sm:%s230]
                %244 = vst [vmem:[%s238 + $0x10] sm:%s230] %v243
                %v245 = vld [vmem:[%s237 + $0x30] sm:%s230]
                %246 = vst [vmem:[%s238 + $0x18] sm:%s230] %v245
              $region49: #{bilstm_forward.2} parent=43 // loop_footer
                %s236 = sadd.s32 1, %s232
              $region50: #{bilstm_forward.2} parent=43 // loop_footer_branch
                %231 = sbr.rel target = $region46
              $region51: #{bilstm_forward.2} parent=43 // loop_exit
                _
            $region44: #{bilstm_forward.2} parent=35 // pred_fallthru
              _
          $region36: #{bilstm_forward.2} parent=31 // pred_fallthru
            _
          %267 = vnop
        $region32: #{bilstm_forward.2} parent=27 // pred_fallthru
          _
        // Predicated region
        $region67: #{bilstm_forward.2} parent=27 // pred_check
          %p268 = pneg %p61
        $region68: #{bilstm_forward.2} parent=27 // pred_check_branch
          %270 = sbr.rel (%p268) target = $region70
        $region69: #{bilstm_forward.2} parent=27 // pred_region
          %s271 = sand.u32 %s51, 1
          %s272 = sand.u32 %s51, 1
          %s273 = smul.addr %s272, 32
          %s274 = scalar_lea.vmem [#allocation7], %s273
          %s275 = ssub.s32 1, %s13
          %s276 = smul.u32 4, %s275
          %s277 = smul.addr %s276, 2
          %s278 = sadd.s32 1, %s277
          %s279 = smul.addr %s278, 8
          %s280 = scalar_lea.vmem %s1, %s279
          // Predicated region
          $region71: #{bilstm_forward.2} parent=69 // pred_check
            _
          $region72: #{bilstm_forward.2} parent=69 // pred_check_branch
            %282 = sbr.rel (0) target = $region74
          $region73: #{bilstm_forward.2} parent=69 // pred_region
            // Predicated region
            $region75: #{bilstm_forward.2} parent=73 // pred_check
              _
            $region76: #{bilstm_forward.2} parent=73 // pred_check_branch
              %284 = sbr.rel (0) target = $region78
            $region77: #{bilstm_forward.2} parent=73 // pred_region
              // Predicated region
              $region90: #{bilstm_forward.2} parent=77 // pred_check
                _
              $region91: #{bilstm_forward.2} parent=77 // pred_check_branch
                %306 = sbr.rel (0) target = $region93
              $region92: #{bilstm_forward.2} parent=77 // pred_region
                loop: start=0, step=1, limit=1
                $region94: #{bilstm_forward.2} parent=92 // loop_pre_header
                  _
                $region95: #{bilstm_forward.2} parent=92 // loop_header
                  %s308 = sphi 0, %s312
                  %p309 = scmp.ge.s32.totalorder %s308, 1
                  %s313 = sphi %s280, %s280
                  %s314 = sphi %s274, %s274
                $region96: #{bilstm_forward.2} parent=92 // loop_header_branch
                  %311 = sbr.rel (%p309) target = $region100
                $region97: #{bilstm_forward.2} parent=92 // loop_body
                  %v315 = vld [vmem:[%s313] sm:$0xff]
                  %316 = vst [vmem:[%s314] sm:$0xff] %v315
                  %v317 = vld [vmem:[%s313 + $0x10] sm:$0xff]
                  %318 = vst [vmem:[%s314 + $0x8] sm:$0xff] %v317
                  %v319 = vld [vmem:[%s313 + $0x20] sm:$0xff]
                  %320 = vst [vmem:[%s314 + $0x10] sm:$0xff] %v319
                  %v321 = vld [vmem:[%s313 + $0x30] sm:$0xff]
                  %322 = vst [vmem:[%s314 + $0x18] sm:$0xff] %v321
                $region98: #{bilstm_forward.2} parent=92 // loop_footer
                  %s312 = sadd.s32 1, %s308
                $region99: #{bilstm_forward.2} parent=92 // loop_footer_branch
                  %307 = sbr.rel target = $region95
                $region100: #{bilstm_forward.2} parent=92 // loop_exit
                  _
              $region93: #{bilstm_forward.2} parent=77 // pred_fallthru
                _
              // Predicated region
              $region101: #{bilstm_forward.2} parent=77 // pred_check
                _
              $region102: #{bilstm_forward.2} parent=77 // pred_check_branch
                %324 = sbr.rel target = $region104
              $region103: #{bilstm_forward.2} parent=77 // pred_region
                _
              $region104: #{bilstm_forward.2} parent=77 // pred_fallthru
                _
            $region78: #{bilstm_forward.2} parent=73 // pred_fallthru
              _
            // Predicated region
            $region79: #{bilstm_forward.2} parent=73 // pred_check
              _
            $region80: #{bilstm_forward.2} parent=73 // pred_check_branch
              %286 = sbr.rel target = $region82
            $region81: #{bilstm_forward.2} parent=73 // pred_region
              %s288 = ssub.s32 256, 1
              loop: start=0, step=1, limit=1
              $region83: #{bilstm_forward.2} parent=81 // loop_pre_header
                _
              $region84: #{bilstm_forward.2} parent=81 // loop_header
                %s290 = sphi 0, %s294
                %p291 = scmp.ge.s32.totalorder %s290, 1
                %s295 = sphi %s280, %s280
                %s296 = sphi %s274, %s274
              $region85: #{bilstm_forward.2} parent=81 // loop_header_branch
                %293 = sbr.rel (%p291) target = $region89
              $region86: #{bilstm_forward.2} parent=81 // loop_body
                %v297 = vld [vmem:[%s295] sm:%s288]
                %298 = vst [vmem:[%s296] sm:%s288] %v297
                %v299 = vld [vmem:[%s295 + $0x10] sm:%s288]
                %300 = vst [vmem:[%s296 + $0x8] sm:%s288] %v299
                %v301 = vld [vmem:[%s295 + $0x20] sm:%s288]
                %302 = vst [vmem:[%s296 + $0x10] sm:%s288] %v301
                %v303 = vld [vmem:[%s295 + $0x30] sm:%s288]
                %304 = vst [vmem:[%s296 + $0x18] sm:%s288] %v303
              $region87: #{bilstm_forward.2} parent=81 // loop_footer
                %s294 = sadd.s32 1, %s290
              $region88: #{bilstm_forward.2} parent=81 // loop_footer_branch
                %289 = sbr.rel target = $region84
              $region89: #{bilstm_forward.2} parent=81 // loop_exit
                _
            $region82: #{bilstm_forward.2} parent=73 // pred_fallthru
              _
          $region74: #{bilstm_forward.2} parent=69 // pred_fallthru
            _
          %325 = vnop
        $region70: #{bilstm_forward.2} parent=27 // pred_fallthru
          _
      $region28: #{bilstm_forward.2} parent=5 // pred_fallthru
        _
      %p326 = scmp.le.s32.totalorder 1, %s13
      %p327 = scmp.lt.s32.totalorder %s13, 3
      %p328 = pnand %p326, %p327
      %p329 = pneg %p328
      // Predicated region
      $region105: #{bilstm_forward.2} parent=5 // pred_check
        _
      $region106: #{bilstm_forward.2} parent=5 // pred_check_branch
        %331 = sbr.rel (%p328) target = $region108
      $region107: #{bilstm_forward.2} parent=5 // pred_region
        %s332 = ssub.s32 %s13, 1
        %s333 = sand.u32 %s26, 1
        %s334 = sand.u32 %s26, 1
        %s335 = smul.addr %s334, 32
        %s336 = scalar_lea.vmem [#allocation6], %s335
        // Predicated region
        $region109: #{bilstm_forward.2} parent=107 // pred_check
          %p337 = pneg %p39
        $region110: #{bilstm_forward.2} parent=107 // pred_check_branch
          %339 = sbr.rel (%p337) target = $region112
        $region111: #{bilstm_forward.2} parent=107 // pred_region
          _
        $region112: #{bilstm_forward.2} parent=107 // pred_fallthru
          _
        %s340 = sand.u32 %s54, 1
        %s341 = sand.u32 %s54, 1
        %s342 = smul.addr %s341, 32
        %s343 = scalar_lea.vmem [#allocation7], %s342
        // Predicated region
        $region113: #{bilstm_forward.2} parent=107 // pred_check
          %p344 = pneg %p67
        $region114: #{bilstm_forward.2} parent=107 // pred_check_branch
          %346 = sbr.rel (%p344) target = $region116
        $region115: #{bilstm_forward.2} parent=107 // pred_region
          _
        $region116: #{bilstm_forward.2} parent=107 // pred_fallthru
          _
        %s347 = sand.u32 %s26, 1
        %s348 = sand.u32 %s26, 1
        %s349 = smul.addr %s348, 32
        %s350 = scalar_lea.vmem [#allocation6], %s349
        %p351 = pneg %p39
        %p352 = pneg %p36
        %s353 = sand.u32 %s54, 1
        %s354 = sand.u32 %s54, 1
        %s355 = smul.addr %s354, 32
        %s356 = scalar_lea.vmem [#allocation7], %s355
        %p357 = pneg %p67
        %p358 = pneg %p64
        %p359 = pneg %p88
        %p360 = pneg %p85
        %p361 = pneg %p109
        %p362 = pneg %p106
        %p363 = pneg %p130
        %p364 = pneg %p127
        %p365 = pneg %p156
        %p366 = pneg %p153
        %s367 = smul.u32 4, %s18
        %p368 = scmp.lt.s32.totalorder %s367, 7
        %s369 = scalar_select %p368, %s367, 7
        %s370 = smul.addr %s369, 8
        %s371 = scalar_lea.vmem %s5, %s370
        %p372 = pneg %p184
        %p373 = pneg %p181
        %s374 = ssub.s32 1, %s18
        %s375 = smul.u32 4, %s374
        %p376 = scmp.lt.s32.totalorder %s375, 7
        %s377 = scalar_select %p376, %s375, 7
        %s378 = smul.addr %s377, 8
        %s379 = scalar_lea.vmem %s6, %s378
        %s380 = smul.u32 4, %s18
        %s381 = ssub.s32 1, %s18
        %s382 = smul.u32 4, %s381
        %s383 = smul.u32 4, %s18
        %p384 = scmp.lt.s32.totalorder %s383, 7
        %s385 = scalar_select %p384, %s383, 7
        %s386 = smul.addr %s385, 8
        %s387 = scalar_lea.vmem %s5, %s386
        %s388 = smul.u32 4, %s18
        %s389 = ssub.s32 1, %s18
        %s390 = smul.u32 4, %s389
        %p391 = scmp.lt.s32.totalorder %s390, 7
        %s392 = scalar_select %p391, %s390, 7
        %s393 = smul.addr %s392, 8
        %s394 = scalar_lea.vmem %s6, %s393
        %s395 = ssub.s32 1, %s18
        %s396 = smul.u32 4, %s395
        %p398 = scmp.eq.s32.totalorder %s18, 0
        // Predicated region
        $region117: #{bilstm_forward.2} parent=107 // pred_check
          %p399 = pneg %p398
        $region118: #{bilstm_forward.2} parent=107 // pred_check_branch
          %401 = sbr.rel (%p399) target = $region120
        $region119: #{bilstm_forward.2} parent=107 // pred_region
          %vm402 = vcmask 261120
          %403 = vst.msk [vmem:[#allocation2] sm:$0xff] %vm402, 0.0
          %404 = vst.msk [vmem:[#allocation3] sm:$0xff] %vm402, 0.0
          %405 = vst.msk [vmem:[#allocation4] sm:$0xff] %vm402, 0.0
          %406 = vst.msk [vmem:[#allocation5] sm:$0xff] %vm402, 0.0
        $region120: #{bilstm_forward.2} parent=107 // pred_fallthru
          _
        %v407 = vld [vmem:[%s4] sm:$0xff]
        %v408 = vld [vmem:[%s2] sm:$0xf]
        %v409 = vld [vmem:[%s2 + $0x4] sm:$0xf]
        %v410 = vld [vmem:[%s2 + $0x8] sm:$0xf]
        %v411 = vld [vmem:[%s2 + $0xc] sm:$0xf]
        %v412 = vld [vmem:[%s3] sm:$0xf]
        %v413 = vld [vmem:[%s3 + $0x4] sm:$0xf]
        %v414 = vld [vmem:[%s3 + $0x8] sm:$0xf]
        %v415 = vld [vmem:[%s3 + $0xc] sm:$0xf]
        %s416 = smul.u32 %s18, 4
        %s417 = ssub.s32 7, %s416
        %v418 = vld [vmem:[#allocation2] sm:$0xff]
        %v419 = vld [vmem:[#allocation3] sm:$0xff]
        %v420 = vld [vmem:[#allocation4] sm:$0xff]
        %v421 = vld [vmem:[#allocation5] sm:$0xff]
        %v422 = vpack.c.bf16 %v418, %v418
        %v423 = vld [vmem:[%s336] sm:$0xff]
        %v428 = vunpack.c.l.b16 %v408
        %v429 = vunpack.c.l.b16 %v409
        %v430 = vunpack.c.l.b16 %v410
        %v431 = vunpack.c.l.b16 %v411
        %v432 = vpack.c.b16 %v429, %v428
        %v433 = vpack.c.b16 %v431, %v430
        %vm436 = vcmask 261120
        %v438 = vsel %vm436, %v422, 0
        %440 = vmatpush.bf16.msra.mxu0 0
        %441 = vmatpush.bf16.msra.mxu0 0
        %442 = vmatpush.bf16.msra.mxu0 0
        %443 = vmatpush.bf16.msra.mxu0 0
        %444 = vmatpush.bf16.msra.mxu0 0
        %445 = vmatpush.bf16.msra.mxu0 0
        %446 = vmatpush.bf16.msra.mxu0 %v433
        %447 = vmatpush.bf16.msra.mxu0 %v432
        %448 = vmatmul.bf16.gmra.mxu0 %v438
        %v449 = vpop.f32.mrf.mxu0
        %v450 = vadd.f32 %v423, %v449
        %v451 = vpop.f32.mrf.mxu0
        %452 = vdwg.mxu0
        %v453 = vpack.c.bf16 %v420, %v420
        %s454 = scalar_lea.vmem %s343, 24 [#allocation7]
        %v455 = vld [vmem:[%s454] sm:$0xff]
        %v460 = vunpack.c.l.b16 %v412
        %v461 = vunpack.c.l.b16 %v413
        %v462 = vunpack.c.l.b16 %v414
        %v463 = vunpack.c.l.b16 %v415
        %v464 = vpack.c.b16 %v461, %v460
        %v465 = vpack.c.b16 %v463, %v462
        %v469 = vsel %vm436, %v453, 0
        %471 = vmatpush.bf16.msra.mxu0 0
        %472 = vmatpush.bf16.msra.mxu0 0
        %473 = vmatpush.bf16.msra.mxu0 0
        %474 = vmatpush.bf16.msra.mxu0 0
        %475 = vmatpush.bf16.msra.mxu0 0
        %476 = vmatpush.bf16.msra.mxu0 0
        %477 = vmatpush.bf16.msra.mxu0 %v465
        %478 = vmatpush.bf16.msra.mxu0 %v464
        %479 = vmatmul.bf16.gmra.mxu0 %v469
        %v480 = vpop.f32.mrf.mxu0
        %v481 = vadd.f32 %v455, %v480
        %v482 = vpop.f32.mrf.mxu0
        %483 = vdwg.mxu0
        %v484 = vxor.u32 %v450, 2147483648
        %v485 = vmul.f32 %v484, 1.442695
        %v486 = vpow.pop %v485
        %v487 = vadd.f32 %v486, 1.0
        %v488 = vrcp.pop %v487
        %v489 = vmul.f32 %v487, %v488
        %v490 = vsub.f32 1.0, %v489
        %v491 = vmul.f32 %v488, %v490
        %v492 = vadd.f32 %v488, %v491
        %vm493 = vweird.f32 %v487
        %vm494 = vweird.f32 %v488
        %vm495 = vmor %vm493, %vm494
        %v496 = vsel %vm495, %v488, %v492
        %v497 = vand.u32 2147483647, %v487
        %vm498 = vcmp.eq.f32.partialorder %v497, 8.507059e+37
        %v499 = vand.u32 %v487, 2147483648
        %v500 = vor.u32 1.1754944e-38, %v499
        %v501 = vsel %vm498, %v500, %v496
        %v502 = vmul.f32 1.0, %v501
        %v503 = vtanh.pop %v450
        %505 = vrot.lane.b32.xlu0 %v419, 32
        %v506 = vpop.permute.xlu0 %505
        %v508 = vmul.f32 %v502, %v506
        %510 = vrot.lane.b32.xlu0 %v503, 32
        %v511 = vpop.permute.xlu0 %510
        %v513 = vmul.f32 %v502, %v511
        %515 = vrot.lane.b32.xlu0 %v513, 32
        %v516 = vpop.permute.xlu0 %515
        %v518 = vadd.f32 %v508, %v516
        %v519 = vtanh.pop %v518
        %521 = vrot.lane.b32.xlu0 %v519, 32
        %v522 = vpop.permute.xlu0 %521
        %v524 = vmul.f32 %v502, %v522
        %v525 = vxor.u32 %v481, 2147483648
        %v526 = vmul.f32 %v525, 1.442695
        %v527 = vpow.pop %v526
        %v528 = vadd.f32 %v527, 1.0
        %v529 = vrcp.pop %v528
        %v530 = vmul.f32 %v528, %v529
        %v531 = vsub.f32 1.0, %v530
        %v532 = vmul.f32 %v529, %v531
        %v533 = vadd.f32 %v529, %v532
        %vm534 = vweird.f32 %v528
        %vm535 = vweird.f32 %v529
        %vm536 = vmor %vm534, %vm535
        %v537 = vsel %vm536, %v529, %v533
        %v538 = vand.u32 2147483647, %v528
        %vm539 = vcmp.eq.f32.partialorder %v538, 8.507059e+37
        %v540 = vand.u32 %v528, 2147483648
        %v541 = vor.u32 1.1754944e-38, %v540
        %v542 = vsel %vm539, %v541, %v537
        %v543 = vmul.f32 1.0, %v542
        %v544 = vtanh.pop %v481
        %546 = vrot.lane.b32.xlu0 %v421, 32
        %v547 = vpop.permute.xlu0 %546
        %v549 = vmul.f32 %v543, %v547
        %551 = vrot.lane.b32.xlu0 %v544, 32
        %v552 = vpop.permute.xlu0 %551
        %v554 = vmul.f32 %v543, %v552
        %556 = vrot.lane.b32.xlu0 %v554, 32
        %v557 = vpop.permute.xlu0 %556
        %v559 = vadd.f32 %v549, %v557
        %v560 = vtanh.pop %v559
        %562 = vrot.lane.b32.xlu0 %v560, 32
        %v563 = vpop.permute.xlu0 %562
        %v565 = vmul.f32 %v543, %v563
        %v566 = vstv %s416
        %vm567 = vcmp.lt.s32.totalorder %v566, %v407
        %v568 = vstv %s417
        %vm569 = vcmp.lt.s32.totalorder %v568, %v407
        %v570 = vsel %vm567, 1, 0
        %571 = vset.pattern.permute.xlu0 0
        %572 = vperm.xlu0 %571, %v570
        %v573 = vpop.permute.xlu0 %572
        %vm574 = vcmp.eq.s32.totalorder %v573, 1
        %576 = vrot.lane.b32.xlu0 %v418, 64
        %v577 = vpop.permute.xlu0 %576
        %v579 = vsel %vm574, %v524, %v577
        %581 = vrot.lane.b32.xlu0 %v579, 64
        %v582 = vpop.permute.xlu0 %581
        %584 = vst.msk [vmem:[#allocation2] sm:$0xff] %vm436, %v582
        %v585 = vsel %vm574, %v518, %v506
        %587 = vrot.lane.b32.xlu0 %v585, 96
        %v588 = vpop.permute.xlu0 %587
        %590 = vst.msk [vmem:[#allocation3] sm:$0xff] %vm436, %v588
        %v591 = vsel %vm569, 1, 0
        %592 = vset.pattern.permute.xlu0 0
        %593 = vperm.xlu0 %592, %v591
        %v594 = vpop.permute.xlu0 %593
        %vm595 = vcmp.eq.s32.totalorder %v594, 1
        %597 = vrot.lane.b32.xlu0 %v420, 64
        %v598 = vpop.permute.xlu0 %597
        %v600 = vsel %vm595, %v565, %v598
        %602 = vrot.lane.b32.xlu0 %v600, 64
        %v603 = vpop.permute.xlu0 %602
        %605 = vst.msk [vmem:[#allocation4] sm:$0xff] %vm436, %v603
        %v606 = vsel %vm595, %v559, %v547
        %608 = vrot.lane.b32.xlu0 %v606, 96
        %v609 = vpop.permute.xlu0 %608
        %611 = vst.msk [vmem:[#allocation5] sm:$0xff] %vm436, %v609
        %v612 = vsel %vm574, %v524, 0.0
        %v613 = vsel %vm595, %v565, 0.0
        %615 = vrot.lane.b32.xlu0 %v612, 64
        %v616 = vpop.permute.xlu0 %615
        %618 = vst.msk [vmem:[%s387] sm:$0xff] %vm436, %v616
        %620 = vrot.lane.b32.xlu0 %v613, 64
        %v621 = vpop.permute.xlu0 %620
        %s623 = scalar_lea.vmem %s394, 24
        %624 = vst.msk [vmem:[%s623] sm:$0xff] %vm436, %v621
        %s625 = sadd.s32 %s416, 1
        %s626 = ssub.s32 6, %s416
        %v627 = vld [vmem:[#allocation2] sm:$0xff]
        %v628 = vld [vmem:[#allocation3] sm:$0xff]
        %v629 = vld [vmem:[#allocation4] sm:$0xff]
        %v630 = vld [vmem:[#allocation5] sm:$0xff]
        %v631 = vpack.c.bf16 %v627, %v627
        %s632 = scalar_lea.vmem %s336, 8 [#allocation6]
        %v633 = vld [vmem:[%s632] sm:$0xff]
        %v635 = vsel %vm436, %v631, 0
        %637 = vmatpush.bf16.msra.mxu0 0
        %638 = vmatpush.bf16.msra.mxu0 0
        %639 = vmatpush.bf16.msra.mxu0 0
        %640 = vmatpush.bf16.msra.mxu0 0
        %641 = vmatpush.bf16.msra.mxu0 0
        %642 = vmatpush.bf16.msra.mxu0 0
        %643 = vmatpush.bf16.msra.mxu0 %v433
        %644 = vmatpush.bf16.msra.mxu0 %v432
        %645 = vmatmul.bf16.gmra.mxu0 %v635
        %v646 = vpop.f32.mrf.mxu0
        %v647 = vadd.f32 %v633, %v646
        %v648 = vpop.f32.mrf.mxu0
        %649 = vdwg.mxu0
        %v650 = vpack.c.bf16 %v629, %v629
        %s651 = scalar_lea.vmem %s343, 16 [#allocation7]
        %v652 = vld [vmem:[%s651] sm:$0xff]
        %v654 = vsel %vm436, %v650, 0
        %656 = vmatpush.bf16.msra.mxu0 0
        %657 = vmatpush.bf16.msra.mxu0 0
        %658 = vmatpush.bf16.msra.mxu0 0
        %659 = vmatpush.bf16.msra.mxu0 0
        %660 = vmatpush.bf16.msra.mxu0 0
        %661 = vmatpush.bf16.msra.mxu0 0
        %662 = vmatpush.bf16.msra.mxu0 %v465
        %663 = vmatpush.bf16.msra.mxu0 %v464
        %664 = vmatmul.bf16.gmra.mxu0 %v654
        %v665 = vpop.f32.mrf.mxu0
        %v666 = vadd.f32 %v652, %v665
        %v667 = vpop.f32.mrf.mxu0
        %668 = vdwg.mxu0
        %v669 = vxor.u32 %v647, 2147483648
        %v670 = vmul.f32 %v669, 1.442695
        %v671 = vpow.pop %v670
        %v672 = vadd.f32 %v671, 1.0
        %v673 = vrcp.pop %v672
        %v674 = vmul.f32 %v672, %v673
        %v675 = vsub.f32 1.0, %v674
        %v676 = vmul.f32 %v673, %v675
        %v677 = vadd.f32 %v673, %v676
        %vm678 = vweird.f32 %v672
        %vm679 = vweird.f32 %v673
        %vm680 = vmor %vm678, %vm679
        %v681 = vsel %vm680, %v673, %v677
        %v682 = vand.u32 2147483647, %v672
        %vm683 = vcmp.eq.f32.partialorder %v682, 8.507059e+37
        %v684 = vand.u32 %v672, 2147483648
        %v685 = vor.u32 1.1754944e-38, %v684
        %v686 = vsel %vm683, %v685, %v681
        %v687 = vmul.f32 1.0, %v686
        %v688 = vtanh.pop %v647
        %690 = vrot.lane.b32.xlu0 %v628, 32
        %v691 = vpop.permute.xlu0 %690
        %v693 = vmul.f32 %v687, %v691
        %695 = vrot.lane.b32.xlu0 %v688, 32
        %v696 = vpop.permute.xlu0 %695
        %v698 = vmul.f32 %v687, %v696
        %700 = vrot.lane.b32.xlu0 %v698, 32
        %v701 = vpop.permute.xlu0 %700
        %v703 = vadd.f32 %v693, %v701
        %v704 = vtanh.pop %v703
        %706 = vrot.lane.b32.xlu0 %v704, 32
        %v707 = vpop.permute.xlu0 %706
        %v709 = vmul.f32 %v687, %v707
        %v710 = vxor.u32 %v666, 2147483648
        %v711 = vmul.f32 %v710, 1.442695
        %v712 = vpow.pop %v711
        %v713 = vadd.f32 %v712, 1.0
        %v714 = vrcp.pop %v713
        %v715 = vmul.f32 %v713, %v714
        %v716 = vsub.f32 1.0, %v715
        %v717 = vmul.f32 %v714, %v716
        %v718 = vadd.f32 %v714, %v717
        %vm719 = vweird.f32 %v713
        %vm720 = vweird.f32 %v714
        %vm721 = vmor %vm719, %vm720
        %v722 = vsel %vm721, %v714, %v718
        %v723 = vand.u32 2147483647, %v713
        %vm724 = vcmp.eq.f32.partialorder %v723, 8.507059e+37
        %v725 = vand.u32 %v713, 2147483648
        %v726 = vor.u32 1.1754944e-38, %v725
        %v727 = vsel %vm724, %v726, %v722
        %v728 = vmul.f32 1.0, %v727
        %v729 = vtanh.pop %v666
        %731 = vrot.lane.b32.xlu0 %v630, 32
        %v732 = vpop.permute.xlu0 %731
        %v734 = vmul.f32 %v728, %v732
        %736 = vrot.lane.b32.xlu0 %v729, 32
        %v737 = vpop.permute.xlu0 %736
        %v739 = vmul.f32 %v728, %v737
        %741 = vrot.lane.b32.xlu0 %v739, 32
        %v742 = vpop.permute.xlu0 %741
        %v744 = vadd.f32 %v734, %v742
        %v745 = vtanh.pop %v744
        %747 = vrot.lane.b32.xlu0 %v745, 32
        %v748 = vpop.permute.xlu0 %747
        %v750 = vmul.f32 %v728, %v748
        %v751 = vstv %s625
        %vm752 = vcmp.lt.s32.totalorder %v751, %v407
        %v753 = vstv %s626
        %vm754 = vcmp.lt.s32.totalorder %v753, %v407
        %v755 = vsel %vm752, 1, 0
        %756 = vset.pattern.permute.xlu0 0
        %757 = vperm.xlu0 %756, %v755
        %v758 = vpop.permute.xlu0 %757
        %vm759 = vcmp.eq.s32.totalorder %v758, 1
        %761 = vrot.lane.b32.xlu0 %v627, 64
        %v762 = vpop.permute.xlu0 %761
        %v764 = vsel %vm759, %v709, %v762
        %766 = vrot.lane.b32.xlu0 %v764, 64
        %v767 = vpop.permute.xlu0 %766
        %769 = vst.msk [vmem:[#allocation2] sm:$0xff] %vm436, %v767
        %v770 = vsel %vm759, %v703, %v691
        %772 = vrot.lane.b32.xlu0 %v770, 96
        %v773 = vpop.permute.xlu0 %772
        %775 = vst.msk [vmem:[#allocation3] sm:$0xff] %vm436, %v773
        %v776 = vsel %vm754, 1, 0
        %777 = vset.pattern.permute.xlu0 0
        %778 = vperm.xlu0 %777, %v776
        %v779 = vpop.permute.xlu0 %778
        %vm780 = vcmp.eq.s32.totalorder %v779, 1
        %782 = vrot.lane.b32.xlu0 %v629, 64
        %v783 = vpop.permute.xlu0 %782
        %v785 = vsel %vm780, %v750, %v783
        %787 = vrot.lane.b32.xlu0 %v785, 64
        %v788 = vpop.permute.xlu0 %787
        %790 = vst.msk [vmem:[#allocation4] sm:$0xff] %vm436, %v788
        %v791 = vsel %vm780, %v744, %v732
        %793 = vrot.lane.b32.xlu0 %v791, 96
        %v794 = vpop.permute.xlu0 %793
        %796 = vst.msk [vmem:[#allocation5] sm:$0xff] %vm436, %v794
        %v797 = vsel %vm759, %v709, 0.0
        %v798 = vsel %vm780, %v750, 0.0
        %800 = vrot.lane.b32.xlu0 %v797, 64
        %v801 = vpop.permute.xlu0 %800
        %s803 = scalar_lea.vmem %s387, 8
        %804 = vst.msk [vmem:[%s803] sm:$0xff] %vm436, %v801
        %806 = vrot.lane.b32.xlu0 %v798, 64
        %v807 = vpop.permute.xlu0 %806
        %s809 = scalar_lea.vmem %s394, 16
        %810 = vst.msk [vmem:[%s809] sm:$0xff] %vm436, %v807
        %s811 = sadd.s32 %s416, 2
        %s812 = ssub.s32 5, %s416
        %v813 = vld [vmem:[#allocation2] sm:$0xff]
        %v814 = vld [vmem:[#allocation3] sm:$0xff]
        %v815 = vld [vmem:[#allocation4] sm:$0xff]
        %v816 = vld [vmem:[#allocation5] sm:$0xff]
        %v817 = vpack.c.bf16 %v813, %v813
        %s818 = scalar_lea.vmem %s336, 16 [#allocation6]
        %v819 = vld [vmem:[%s818] sm:$0xff]
        %v821 = vsel %vm436, %v817, 0
        %823 = vmatpush.bf16.msra.mxu0 0
        %824 = vmatpush.bf16.msra.mxu0 0
        %825 = vmatpush.bf16.msra.mxu0 0
        %826 = vmatpush.bf16.msra.mxu0 0
        %827 = vmatpush.bf16.msra.mxu0 0
        %828 = vmatpush.bf16.msra.mxu0 0
        %829 = vmatpush.bf16.msra.mxu0 %v433
        %830 = vmatpush.bf16.msra.mxu0 %v432
        %831 = vmatmul.bf16.gmra.mxu0 %v821
        %v832 = vpop.f32.mrf.mxu0
        %v833 = vadd.f32 %v819, %v832
        %v834 = vpop.f32.mrf.mxu0
        %835 = vdwg.mxu0
        %v836 = vpack.c.bf16 %v815, %v815
        %s837 = scalar_lea.vmem %s343, 8 [#allocation7]
        %v838 = vld [vmem:[%s837] sm:$0xff]
        %v840 = vsel %vm436, %v836, 0
        %842 = vmatpush.bf16.msra.mxu0 0
        %843 = vmatpush.bf16.msra.mxu0 0
        %844 = vmatpush.bf16.msra.mxu0 0
        %845 = vmatpush.bf16.msra.mxu0 0
        %846 = vmatpush.bf16.msra.mxu0 0
        %847 = vmatpush.bf16.msra.mxu0 0
        %848 = vmatpush.bf16.msra.mxu0 %v465
        %849 = vmatpush.bf16.msra.mxu0 %v464
        %850 = vmatmul.bf16.gmra.mxu0 %v840
        %v851 = vpop.f32.mrf.mxu0
        %v852 = vadd.f32 %v838, %v851
        %v853 = vpop.f32.mrf.mxu0
        %854 = vdwg.mxu0
        %v855 = vxor.u32 %v833, 2147483648
        %v856 = vmul.f32 %v855, 1.442695
        %v857 = vpow.pop %v856
        %v858 = vadd.f32 %v857, 1.0
        %v859 = vrcp.pop %v858
        %v860 = vmul.f32 %v858, %v859
        %v861 = vsub.f32 1.0, %v860
        %v862 = vmul.f32 %v859, %v861
        %v863 = vadd.f32 %v859, %v862
        %vm864 = vweird.f32 %v858
        %vm865 = vweird.f32 %v859
        %vm866 = vmor %vm864, %vm865
        %v867 = vsel %vm866, %v859, %v863
        %v868 = vand.u32 2147483647, %v858
        %vm869 = vcmp.eq.f32.partialorder %v868, 8.507059e+37
        %v870 = vand.u32 %v858, 2147483648
        %v871 = vor.u32 1.1754944e-38, %v870
        %v872 = vsel %vm869, %v871, %v867
        %v873 = vmul.f32 1.0, %v872
        %v874 = vtanh.pop %v833
        %876 = vrot.lane.b32.xlu0 %v814, 32
        %v877 = vpop.permute.xlu0 %876
        %v879 = vmul.f32 %v873, %v877
        %881 = vrot.lane.b32.xlu0 %v874, 32
        %v882 = vpop.permute.xlu0 %881
        %v884 = vmul.f32 %v873, %v882
        %886 = vrot.lane.b32.xlu0 %v884, 32
        %v887 = vpop.permute.xlu0 %886
        %v889 = vadd.f32 %v879, %v887
        %v890 = vtanh.pop %v889
        %892 = vrot.lane.b32.xlu0 %v890, 32
        %v893 = vpop.permute.xlu0 %892
        %v895 = vmul.f32 %v873, %v893
        %v896 = vxor.u32 %v852, 2147483648
        %v897 = vmul.f32 %v896, 1.442695
        %v898 = vpow.pop %v897
        %v899 = vadd.f32 %v898, 1.0
        %v900 = vrcp.pop %v899
        %v901 = vmul.f32 %v899, %v900
        %v902 = vsub.f32 1.0, %v901
        %v903 = vmul.f32 %v900, %v902
        %v904 = vadd.f32 %v900, %v903
        %vm905 = vweird.f32 %v899
        %vm906 = vweird.f32 %v900
        %vm907 = vmor %vm905, %vm906
        %v908 = vsel %vm907, %v900, %v904
        %v909 = vand.u32 2147483647, %v899
        %vm910 = vcmp.eq.f32.partialorder %v909, 8.507059e+37
        %v911 = vand.u32 %v899, 2147483648
        %v912 = vor.u32 1.1754944e-38, %v911
        %v913 = vsel %vm910, %v912, %v908
        %v914 = vmul.f32 1.0, %v913
        %v915 = vtanh.pop %v852
        %917 = vrot.lane.b32.xlu0 %v816, 32
        %v918 = vpop.permute.xlu0 %917
        %v920 = vmul.f32 %v914, %v918
        %922 = vrot.lane.b32.xlu0 %v915, 32
        %v923 = vpop.permute.xlu0 %922
        %v925 = vmul.f32 %v914, %v923
        %927 = vrot.lane.b32.xlu0 %v925, 32
        %v928 = vpop.permute.xlu0 %927
        %v930 = vadd.f32 %v920, %v928
        %v931 = vtanh.pop %v930
        %933 = vrot.lane.b32.xlu0 %v931, 32
        %v934 = vpop.permute.xlu0 %933
        %v936 = vmul.f32 %v914, %v934
        %v937 = vstv %s811
        %vm938 = vcmp.lt.s32.totalorder %v937, %v407
        %v939 = vstv %s812
        %vm940 = vcmp.lt.s32.totalorder %v939, %v407
        %v941 = vsel %vm938, 1, 0
        %942 = vset.pattern.permute.xlu0 0
        %943 = vperm.xlu0 %942, %v941
        %v944 = vpop.permute.xlu0 %943
        %vm945 = vcmp.eq.s32.totalorder %v944, 1
        %947 = vrot.lane.b32.xlu0 %v813, 64
        %v948 = vpop.permute.xlu0 %947
        %v950 = vsel %vm945, %v895, %v948
        %952 = vrot.lane.b32.xlu0 %v950, 64
        %v953 = vpop.permute.xlu0 %952
        %955 = vst.msk [vmem:[#allocation2] sm:$0xff] %vm436, %v953
        %v956 = vsel %vm945, %v889, %v877
        %958 = vrot.lane.b32.xlu0 %v956, 96
        %v959 = vpop.permute.xlu0 %958
        %961 = vst.msk [vmem:[#allocation3] sm:$0xff] %vm436, %v959
        %v962 = vsel %vm940, 1, 0
        %963 = vset.pattern.permute.xlu0 0
        %964 = vperm.xlu0 %963, %v962
        %v965 = vpop.permute.xlu0 %964
        %vm966 = vcmp.eq.s32.totalorder %v965, 1
        %968 = vrot.lane.b32.xlu0 %v815, 64
        %v969 = vpop.permute.xlu0 %968
        %v971 = vsel %vm966, %v936, %v969
        %973 = vrot.lane.b32.xlu0 %v971, 64
        %v974 = vpop.permute.xlu0 %973
        %976 = vst.msk [vmem:[#allocation4] sm:$0xff] %vm436, %v974
        %v977 = vsel %vm966, %v930, %v918
        %979 = vrot.lane.b32.xlu0 %v977, 96
        %v980 = vpop.permute.xlu0 %979
        %982 = vst.msk [vmem:[#allocation5] sm:$0xff] %vm436, %v980
        %v983 = vsel %vm945, %v895, 0.0
        %v984 = vsel %vm966, %v936, 0.0
        %986 = vrot.lane.b32.xlu0 %v983, 64
        %v987 = vpop.permute.xlu0 %986
        %s989 = scalar_lea.vmem %s387, 16
        %990 = vst.msk [vmem:[%s989] sm:$0xff] %vm436, %v987
        %992 = vrot.lane.b32.xlu0 %v984, 64
        %v993 = vpop.permute.xlu0 %992
        %s995 = scalar_lea.vmem %s394, 8
        %996 = vst.msk [vmem:[%s995] sm:$0xff] %vm436, %v993
        %s997 = sadd.s32 %s416, 3
        %s998 = ssub.s32 4, %s416
        %v999 = vld [vmem:[#allocation2] sm:$0xff]
        %v1000 = vld [vmem:[#allocation3] sm:$0xff]
        %v1001 = vld [vmem:[#allocation4] sm:$0xff]
        %v1002 = vld [vmem:[#allocation5] sm:$0xff]
        %v1003 = vpack.c.bf16 %v999, %v999
        %s1004 = scalar_lea.vmem %s336, 24 [#allocation6]
        %v1005 = vld [vmem:[%s1004] sm:$0xff]
        %v1007 = vsel %vm436, %v1003, 0
        %1009 = vmatpush.bf16.msra.mxu0 0
        %1010 = vmatpush.bf16.msra.mxu0 0
        %1011 = vmatpush.bf16.msra.mxu0 0
        %1012 = vmatpush.bf16.msra.mxu0 0
        %1013 = vmatpush.bf16.msra.mxu0 0
        %1014 = vmatpush.bf16.msra.mxu0 0
        %1015 = vmatpush.bf16.msra.mxu0 %v433
        %1016 = vmatpush.bf16.msra.mxu0 %v432
        %1017 = vmatmul.bf16.gmra.mxu0 %v1007
        %v1018 = vpop.f32.mrf.mxu0
        %v1019 = vadd.f32 %v1005, %v1018
        %v1020 = vpop.f32.mrf.mxu0
        %1021 = vdwg.mxu0
        %v1022 = vpack.c.bf16 %v1001, %v1001
        %v1023 = vld [vmem:[%s343] sm:$0xff]
        %v1025 = vsel %vm436, %v1022, 0
        %1027 = vmatpush.bf16.msra.mxu0 0
        %1028 = vmatpush.bf16.msra.mxu0 0
        %1029 = vmatpush.bf16.msra.mxu0 0
        %1030 = vmatpush.bf16.msra.mxu0 0
        %1031 = vmatpush.bf16.msra.mxu0 0
        %1032 = vmatpush.bf16.msra.mxu0 0
        %1033 = vmatpush.bf16.msra.mxu0 %v465
        %1034 = vmatpush.bf16.msra.mxu0 %v464
        %1035 = vmatmul.bf16.gmra.mxu0 %v1025
        %v1036 = vpop.f32.mrf.mxu0
        %v1037 = vadd.f32 %v1023, %v1036
        %v1038 = vpop.f32.mrf.mxu0
        %1039 = vdwg.mxu0
        %v1040 = vxor.u32 %v1019, 2147483648
        %v1041 = vmul.f32 %v1040, 1.442695
        %v1042 = vpow.pop %v1041
        %v1043 = vadd.f32 %v1042, 1.0
        %v1044 = vrcp.pop %v1043
        %v1045 = vmul.f32 %v1043, %v1044
        %v1046 = vsub.f32 1.0, %v1045
        %v1047 = vmul.f32 %v1044, %v1046
        %v1048 = vadd.f32 %v1044, %v1047
        %vm1049 = vweird.f32 %v1043
        %vm1050 = vweird.f32 %v1044
        %vm1051 = vmor %vm1049, %vm1050
        %v1052 = vsel %vm1051, %v1044, %v1048
        %v1053 = vand.u32 2147483647, %v1043
        %vm1054 = vcmp.eq.f32.partialorder %v1053, 8.507059e+37
        %v1055 = vand.u32 %v1043, 2147483648
        %v1056 = vor.u32 1.1754944e-38, %v1055
        %v1057 = vsel %vm1054, %v1056, %v1052
        %v1058 = vmul.f32 1.0, %v1057
        %v1059 = vtanh.pop %v1019
        %1061 = vrot.lane.b32.xlu0 %v1000, 32
        %v1062 = vpop.permute.xlu0 %1061
        %v1064 = vmul.f32 %v1058, %v1062
        %1066 = vrot.lane.b32.xlu0 %v1059, 32
        %v1067 = vpop.permute.xlu0 %1066
        %v1069 = vmul.f32 %v1058, %v1067
        %1071 = vrot.lane.b32.xlu0 %v1069, 32
        %v1072 = vpop.permute.xlu0 %1071
        %v1074 = vadd.f32 %v1064, %v1072
        %v1075 = vtanh.pop %v1074
        %1077 = vrot.lane.b32.xlu0 %v1075, 32
        %v1078 = vpop.permute.xlu0 %1077
        %v1080 = vmul.f32 %v1058, %v1078
        %v1081 = vxor.u32 %v1037, 2147483648
        %v1082 = vmul.f32 %v1081, 1.442695
        %v1083 = vpow.pop %v1082
        %v1084 = vadd.f32 %v1083, 1.0
        %v1085 = vrcp.pop %v1084
        %v1086 = vmul.f32 %v1084, %v1085
        %v1087 = vsub.f32 1.0, %v1086
        %v1088 = vmul.f32 %v1085, %v1087
        %v1089 = vadd.f32 %v1085, %v1088
        %vm1090 = vweird.f32 %v1084
        %vm1091 = vweird.f32 %v1085
        %vm1092 = vmor %vm1090, %vm1091
        %v1093 = vsel %vm1092, %v1085, %v1089
        %v1094 = vand.u32 2147483647, %v1084
        %vm1095 = vcmp.eq.f32.partialorder %v1094, 8.507059e+37
        %v1096 = vand.u32 %v1084, 2147483648
        %v1097 = vor.u32 1.1754944e-38, %v1096
        %v1098 = vsel %vm1095, %v1097, %v1093
        %v1099 = vmul.f32 1.0, %v1098
        %v1100 = vtanh.pop %v1037
        %1102 = vrot.lane.b32.xlu0 %v1002, 32
        %v1103 = vpop.permute.xlu0 %1102
        %v1105 = vmul.f32 %v1099, %v1103
        %1107 = vrot.lane.b32.xlu0 %v1100, 32
        %v1108 = vpop.permute.xlu0 %1107
        %v1110 = vmul.f32 %v1099, %v1108
        %1112 = vrot.lane.b32.xlu0 %v1110, 32
        %v1113 = vpop.permute.xlu0 %1112
        %v1115 = vadd.f32 %v1105, %v1113
        %v1116 = vtanh.pop %v1115
        %1118 = vrot.lane.b32.xlu0 %v1116, 32
        %v1119 = vpop.permute.xlu0 %1118
        %v1121 = vmul.f32 %v1099, %v1119
        %v1122 = vstv %s997
        %vm1123 = vcmp.lt.s32.totalorder %v1122, %v407
        %v1124 = vstv %s998
        %vm1125 = vcmp.lt.s32.totalorder %v1124, %v407
        %v1126 = vsel %vm1123, 1, 0
        %1127 = vset.pattern.permute.xlu0 0
        %1128 = vperm.xlu0 %1127, %v1126
        %v1129 = vpop.permute.xlu0 %1128
        %vm1130 = vcmp.eq.s32.totalorder %v1129, 1
        %1132 = vrot.lane.b32.xlu0 %v999, 64
        %v1133 = vpop.permute.xlu0 %1132
        %v1135 = vsel %vm1130, %v1080, %v1133
        %1137 = vrot.lane.b32.xlu0 %v1135, 64
        %v1138 = vpop.permute.xlu0 %1137
        %1140 = vst.msk [vmem:[#allocation2] sm:$0xff] %vm436, %v1138
        %v1141 = vsel %vm1130, %v1074, %v1062
        %1143 = vrot.lane.b32.xlu0 %v1141, 96
        %v1144 = vpop.permute.xlu0 %1143
        %1146 = vst.msk [vmem:[#allocation3] sm:$0xff] %vm436, %v1144
        %v1147 = vsel %vm1125, 1, 0
        %1148 = vset.pattern.permute.xlu0 0
        %1149 = vperm.xlu0 %1148, %v1147
        %v1150 = vpop.permute.xlu0 %1149
        %vm1151 = vcmp.eq.s32.totalorder %v1150, 1
        %1153 = vrot.lane.b32.xlu0 %v1001, 64
        %v1154 = vpop.permute.xlu0 %1153
        %v1156 = vsel %vm1151, %v1121, %v1154
        %1158 = vrot.lane.b32.xlu0 %v1156, 64
        %v1159 = vpop.permute.xlu0 %1158
        %1161 = vst.msk [vmem:[#allocation4] sm:$0xff] %vm436, %v1159
        %v1162 = vsel %vm1151, %v1115, %v1103
        %1164 = vrot.lane.b32.xlu0 %v1162, 96
        %v1165 = vpop.permute.xlu0 %1164
        %1167 = vst.msk [vmem:[#allocation5] sm:$0xff] %vm436, %v1165
        %v1168 = vsel %vm1130, %v1080, 0.0
        %v1169 = vsel %vm1151, %v1121, 0.0
        %1171 = vrot.lane.b32.xlu0 %v1168, 64
        %v1172 = vpop.permute.xlu0 %1171
        %s1174 = scalar_lea.vmem %s387, 24
        %1175 = vst.msk [vmem:[%s1174] sm:$0xff] %vm436, %v1172
        %1177 = vrot.lane.b32.xlu0 %v1169, 64
        %v1178 = vpop.permute.xlu0 %1177
        %1180 = vst.msk [vmem:[%s394] sm:$0xff] %vm436, %v1178
        %s1181 = smul.u32 4, %s18
        %p1182 = scmp.lt.s32.totalorder %s1181, 7
        %s1183 = scalar_select %p1182, %s1181, 7
        %s1184 = smul.addr %s1183, 8
        %s1185 = scalar_lea.vmem %s5, %s1184
        %s1186 = ssub.s32 1, %s18
        %s1187 = smul.u32 4, %s1186
        %p1188 = scmp.lt.s32.totalorder %s1187, 7
        %s1189 = scalar_select %p1188, %s1187, 7
        %s1190 = smul.addr %s1189, 8
        %s1191 = scalar_lea.vmem %s6, %s1190
        // Predicated region
        $region121: #{bilstm_forward.2} parent=107 // pred_check
          %p1192 = pneg %p153
        $region122: #{bilstm_forward.2} parent=107 // pred_check_branch
          %1194 = sbr.rel (%p1192) target = $region124
        $region123: #{bilstm_forward.2} parent=107 // pred_region
          %s1195 = smul.u32 4, %s18
        $region124: #{bilstm_forward.2} parent=107 // pred_fallthru
          _
        // Predicated region
        $region125: #{bilstm_forward.2} parent=107 // pred_check
          %p1196 = pneg %p181
        $region126: #{bilstm_forward.2} parent=107 // pred_check_branch
          %1198 = sbr.rel (%p1196) target = $region128
        $region127: #{bilstm_forward.2} parent=107 // pred_region
          %s1199 = ssub.s32 1, %s18
          %s1200 = smul.u32 4, %s1199
        $region128: #{bilstm_forward.2} parent=107 // pred_fallthru
          _
      $region108: #{bilstm_forward.2} parent=5 // pred_fallthru
        _
      %p1201 = scmp.le.s32.totalorder 2, %s13
      // Predicated region
      $region129: #{bilstm_forward.2} parent=5 // pred_check
        %p1202 = pneg %p1201
      $region130: #{bilstm_forward.2} parent=5 // pred_check_branch
        %1204 = sbr.rel (%p1202) target = $region132
      $region131: #{bilstm_forward.2} parent=5 // pred_region
        %s1205 = ssub.s32 %s13, 2
        // Predicated region
        $region133: #{bilstm_forward.2} parent=131 // pred_check
          %p1206 = pneg %p159
        $region134: #{bilstm_forward.2} parent=131 // pred_check_branch
          %1208 = sbr.rel (%p1206) target = $region136
        $region135: #{bilstm_forward.2} parent=131 // pred_region
          %s1209 = smul.u32 4, %s19
          %p1210 = scmp.lt.s32.totalorder %s1209, 7
          %s1211 = scalar_select %p1210, %s1209, 7
          %s1212 = smul.addr %s1211, 8
          %s1213 = scalar_lea.vmem %s5, %s1212
        $region136: #{bilstm_forward.2} parent=131 // pred_fallthru
          _
        // Predicated region
        $region137: #{bilstm_forward.2} parent=131 // pred_check
          %p1214 = pneg %p187
        $region138: #{bilstm_forward.2} parent=131 // pred_check_branch
          %1216 = sbr.rel (%p1214) target = $region140
        $region139: #{bilstm_forward.2} parent=131 // pred_region
          %s1217 = ssub.s32 1, %s19
          %s1218 = smul.u32 4, %s1217
          %p1219 = scmp.lt.s32.totalorder %s1218, 7
          %s1220 = scalar_select %p1219, %s1218, 7
          %s1221 = smul.addr %s1220, 8
          %s1222 = scalar_lea.vmem %s6, %s1221
        $region140: #{bilstm_forward.2} parent=131 // pred_fallthru
          _
      $region132: #{bilstm_forward.2} parent=5 // pred_fallthru
        _
    $region6: #{bilstm_forward.2} parent=1 // loop_footer
      %s17 = sadd.s32 1, %s13
    $region7: #{bilstm_forward.2} parent=1 // loop_footer_branch
      %12 = sbr.rel target = $region3
    $region8: #{bilstm_forward.2} parent=1 // loop_exit
      _

// kernel: bilstm_forward.3
$region0: #{bilstm_forward.3}
  #allocation0 [shape = 'u32[]', space=smem, size = 0x4, offset = 0x4, fixed_abs, tag = 'smem constant byte address 0x4 - core index']
  #allocation1 [shape = 'u32[72,128]{1,0:T(1,128)}', space=vmem, size = 0x9000, scoped, tag = 'internal scratch']
  #allocation2 [shape = 'f32[8,32]{1,0:T(8,128)}', space=vmem, size = 0x1000, scoped, tag = 'scratch operand']
  #allocation3 [shape = 'f32[8,32]{1,0:T(8,128)}', space=vmem, size = 0x1000, scoped, tag = 'scratch operand']
  #allocation4 [shape = 'f32[8,32]{1,0:T(8,128)}', space=vmem, size = 0x1000, scoped, tag = 'scratch operand']
  #allocation5 [shape = 'f32[8,32]{1,0:T(8,128)}', space=vmem, size = 0x1000, scoped, tag = 'scratch operand']
  #allocation6 [shape = 'f32[8,32]{1,0:T(8,128)}', space=vmem, size = 0x1000, scoped, tag = 'scratch operand']
  #allocation7 [shape = 'f32[8,32]{1,0:T(8,128)}', space=vmem, size = 0x1000, scoped, tag = 'scratch operand']
  %s0 = inlined_call_operand.vmem [shape: f32[64,256], index: 0, kind: input, shape index: {}, may-alias: {0,1}]
  %s1 = inlined_call_operand.vmem [shape: f32[64,256], index: 1, kind: input, shape index: {}, may-alias: {0,1}]
  %s2 = inlined_call_operand.vmem [shape: bf16[32,128], index: 2, kind: input, shape index: {}]
  %s3 = inlined_call_operand.vmem [shape: bf16[32,128], index: 3, kind: input, shape index: {}]
  %s4 = inlined_call_operand.vmem [shape: s32[8,1], index: 4, kind: input, shape index: {}]
  %s5 = inlined_call_operand.vmem [shape: f32[32,4], index: 5, kind: input, shape index: {}]
  %s6 = inlined_call_operand.vmem [shape: f32[32,4], index: 6, kind: input, shape index: {}]
  %s7 = inlined_call_operand.vmem [shape: f32[1,4], index: 7, kind: input, shape index: {}]
  %s8 = inlined_call_operand.vmem [shape: f32[8,4], index: 8, kind: output, shape index: {}]
  %s9 = sld [smem:[#allocation0]]
  $region149: #{bilstm_forward.3} parent=0
    _
  %s11 = ssub.s32 1, %s9
  %s12 = scalar_select 0, %s11, %s9
  $region1: #{bilstm_forward.3} parent=0
    #allocation8 [shape = 'u8[32768]{0}', space=vmem, size = 0x8000, scoped, tag = 'input window, operand 0']
    #allocation9 [shape = 'u8[32768]{0}', space=vmem, size = 0x8000, scoped, tag = 'input window, operand 1']
    loop: start=0, step=1, limit=4
    $region2: #{bilstm_forward.3} parent=1 // loop_pre_header
      _
    $region3: #{bilstm_forward.3} parent=1 // loop_header
      %s14 = sphi 0, %s18
      %p15 = scmp.ge.s32.totalorder %s14, 4
      %s24 = sphi 0, %s26
      %s27 = sphi 0, %s24
      %s28 = sphi 0, %s27
      %s44 = sphi 0, %s28
      %s52 = sphi 0, %s54
      %s55 = sphi 0, %s52
      %s56 = sphi 0, %s55
      %s72 = sphi 0, %s56
      %s76 = sphi 0, %s76
      %s78 = sphi 0, %s76
      %s79 = sphi 0, %s78
      %s93 = sphi 0, %s79
      %s97 = sphi 0, %s97
      %s99 = sphi 0, %s97
      %s100 = sphi 0, %s99
      %s114 = sphi 0, %s100
      %s118 = sphi 0, %s118
      %s120 = sphi 0, %s118
      %s121 = sphi 0, %s120
      %s135 = sphi 0, %s121
      %s139 = sphi 0, %s139
      %s141 = sphi 0, %s139
      %s142 = sphi 0, %s141
      %s156 = sphi 0, %s142
      %s160 = sphi 0, %s160
      %s162 = sphi 0, %s160
      %s163 = sphi 0, %s162
      %s177 = sphi 0, %s163
      %s181 = sphi 0, %s181
      %s183 = sphi 0, %s181
      %s184 = sphi 0, %s183
      %s198 = sphi 0, %s184
      %s202 = sphi 0, %s202
      %s204 = sphi 0, %s202
      %s205 = sphi 0, %s204
      %s219 = sphi 0, %s205
    $region4: #{bilstm_forward.3} parent=1 // loop_header_branch
      %17 = sbr.rel (%p15) target = $region8
    $region5: #{bilstm_forward.3} parent=1 // loop_body
      %s19 = ssub.s32 %s14, 1
      %s20 = ssub.s32 %s14, 2
      %s21 = sadd.s32 %s14, 1
      %s22 = ssub.s32 %s14, %s21
      %p23 = scmp.eq.s32.totalorder %s22, 0
      %s25 = sadd.s32 %s24, 1
      %s26 = scalar_select %p23, %s24, %s25
      %p29 = pneg %p23
      %p30 = scmp.eq.s32.totalorder %s14, 1
      %p31 = por %p29, %p30
      %p32 = scmp.ne.s32.totalorder %s24, %s27
      %p33 = scmp.eq.s32.totalorder %s14, 0
      %p34 = por %p32, %p33
      %p35 = scmp.ne.s32.totalorder %s24, %s27
      %p36 = scmp.eq.s32.totalorder %s19, 1
      %p37 = por %p35, %p36
      %p38 = scmp.ne.s32.totalorder %s27, %s28
      %p39 = scmp.eq.s32.totalorder %s19, 0
      %p40 = por %p38, %p39
      %p41 = scmp.ne.s32.totalorder %s27, %s28
      %p42 = scmp.eq.s32.totalorder %s20, 1
      %p43 = por %p41, %p42
      %p45 = scmp.ne.s32.totalorder %s28, %s44
      %p46 = scmp.eq.s32.totalorder %s20, 0
      %p47 = por %p45, %p46
      %s48 = ssub.s32 1, %s14
      %s49 = ssub.s32 1, %s21
      %s50 = ssub.s32 %s48, %s49
      %p51 = scmp.eq.s32.totalorder %s50, 0
      %s53 = sadd.s32 %s52, 1
      %s54 = scalar_select %p51, %s52, %s53
      %p57 = pneg %p51
      %p58 = scmp.eq.s32.totalorder %s14, 1
      %p59 = por %p57, %p58
      %p60 = scmp.ne.s32.totalorder %s52, %s55
      %p61 = scmp.eq.s32.totalorder %s14, 0
      %p62 = por %p60, %p61
      %p63 = scmp.ne.s32.totalorder %s52, %s55
      %p64 = scmp.eq.s32.totalorder %s19, 1
      %p65 = por %p63, %p64
      %p66 = scmp.ne.s32.totalorder %s55, %s56
      %p67 = scmp.eq.s32.totalorder %s19, 0
      %p68 = por %p66, %p67
      %p69 = scmp.ne.s32.totalorder %s55, %s56
      %p70 = scmp.eq.s32.totalorder %s20, 1
      %p71 = por %p69, %p70
      %p73 = scmp.ne.s32.totalorder %s56, %s72
      %p74 = scmp.eq.s32.totalorder %s20, 0
      %p75 = por %p73, %p74
      %s77 = sadd.s32 %s76, 1
      %p80 = scmp.eq.s32.totalorder %s14, 1
      %p81 = scmp.ne.s32.totalorder %s76, %s78
      %p82 = scmp.eq.s32.totalorder %s14, 0
      %p83 = por %p81, %p82
      %p84 = scmp.ne.s32.totalorder %s76, %s78
      %p85 = scmp.eq.s32.totalorder %s19, 1
      %p86 = por %p84, %p85
      %p87 = scmp.ne.s32.totalorder %s78, %s79
      %p88 = scmp.eq.s32.totalorder %s19, 0
      %p89 = por %p87, %p88
      %p90 = scmp.ne.s32.totalorder %s78, %s79
      %p91 = scmp.eq.s32.totalorder %s20, 1
      %p92 = por %p90, %p91
      %p94 = scmp.ne.s32.totalorder %s79, %s93
      %p95 = scmp.eq.s32.totalorder %s20, 0
      %p96 = por %p94, %p95
      %s98 = sadd.s32 %s97, 1
      %p101 = scmp.eq.s32.totalorder %s14, 1
      %p102 = scmp.ne.s32.totalorder %s97, %s99
      %p103 = scmp.eq.s32.totalorder %s14, 0
      %p104 = por %p102, %p103
      %p105 = scmp.ne.s32.totalorder %s97, %s99
      %p106 = scmp.eq.s32.totalorder %s19, 1
      %p107 = por %p105, %p106
      %p108 = scmp.ne.s32.totalorder %s99, %s100
      %p109 = scmp.eq.s32.totalorder %s19, 0
      %p110 = por %p108, %p109
      %p111 = scmp.ne.s32.totalorder %s99, %s100
      %p112 = scmp.eq.s32.totalorder %s20, 1
      %p113 = por %p111, %p112
      %p115 = scmp.ne.s32.totalorder %s100, %s114
      %p116 = scmp.eq.s32.totalorder %s20, 0
      %p117 = por %p115, %p116
      %s119 = sadd.s32 %s118, 1
      %p122 = scmp.eq.s32.totalorder %s14, 1
      %p123 = scmp.ne.s32.totalorder %s118, %s120
      %p124 = scmp.eq.s32.totalorder %s14, 0
      %p125 = por %p123, %p124
      %p126 = scmp.ne.s32.totalorder %s118, %s120
      %p127 = scmp.eq.s32.totalorder %s19, 1
      %p128 = por %p126, %p127
      %p129 = scmp.ne.s32.totalorder %s120, %s121
      %p130 = scmp.eq.s32.totalorder %s19, 0
      %p131 = por %p129, %p130
      %p132 = scmp.ne.s32.totalorder %s120, %s121
      %p133 = scmp.eq.s32.totalorder %s20, 1
      %p134 = por %p132, %p133
      %p136 = scmp.ne.s32.totalorder %s121, %s135
      %p137 = scmp.eq.s32.totalorder %s20, 0
      %p138 = por %p136, %p137
      %s140 = sadd.s32 %s139, 1
      %p143 = scmp.eq.s32.totalorder %s14, 1
      %p144 = scmp.ne.s32.totalorder %s139, %s141
      %p145 = scmp.eq.s32.totalorder %s14, 0
      %p146 = por %p144, %p145
      %p147 = scmp.ne.s32.totalorder %s139, %s141
      %p148 = scmp.eq.s32.totalorder %s19, 1
      %p149 = por %p147, %p148
      %p150 = scmp.ne.s32.totalorder %s141, %s142
      %p151 = scmp.eq.s32.totalorder %s19, 0
      %p152 = por %p150, %p151
      %p153 = scmp.ne.s32.totalorder %s141, %s142
      %p154 = scmp.eq.s32.totalorder %s20, 1
      %p155 = por %p153, %p154
      %p157 = scmp.ne.s32.totalorder %s142, %s156
      %p158 = scmp.eq.s32.totalorder %s20, 0
      %p159 = por %p157, %p158
      %s161 = sadd.s32 %s160, 1
      %p164 = scmp.eq.s32.totalorder %s14, 1
      %p165 = scmp.ne.s32.totalorder %s160, %s162
      %p166 = scmp.eq.s32.totalorder %s14, 0
      %p167 = por %p165, %p166
      %p168 = scmp.ne.s32.totalorder %s160, %s162
      %p169 = scmp.eq.s32.totalorder %s19, 1
      %p170 = por %p168, %p169
      %p171 = scmp.ne.s32.totalorder %s162, %s163
      %p172 = scmp.eq.s32.totalorder %s19, 0
      %p173 = por %p171, %p172
      %p174 = scmp.ne.s32.totalorder %s162, %s163
      %p175 = scmp.eq.s32.totalorder %s20, 1
      %p176 = por %p174, %p175
      %p178 = scmp.ne.s32.totalorder %s163, %s177
      %p179 = scmp.eq.s32.totalorder %s20, 0
      %p180 = por %p178, %p179
      %s182 = sadd.s32 %s181, 1
      %p185 = scmp.eq.s32.totalorder %s14, 1
      %p186 = scmp.ne.s32.totalorder %s181, %s183
      %p187 = scmp.eq.s32.totalorder %s14, 0
      %p188 = por %p186, %p187
      %p189 = scmp.ne.s32.totalorder %s181, %s183
      %p190 = scmp.eq.s32.totalorder %s19, 1
      %p191 = por %p189, %p190
      %p192 = scmp.ne.s32.totalorder %s183, %s184
      %p193 = scmp.eq.s32.totalorder %s19, 0
      %p194 = por %p192, %p193
      %p195 = scmp.ne.s32.totalorder %s183, %s184
      %p196 = scmp.eq.s32.totalorder %s20, 1
      %p197 = por %p195, %p196
      %p199 = scmp.ne.s32.totalorder %s184, %s198
      %p200 = scmp.eq.s32.totalorder %s20, 0
      %p201 = por %p199, %p200
      %s203 = sadd.s32 %s202, 1
      %p206 = scmp.eq.s32.totalorder %s14, 1
      %p207 = scmp.ne.s32.totalorder %s202, %s204
      %p208 = scmp.eq.s32.totalorder %s14, 0
      %p209 = por %p207, %p208
      %p210 = scmp.ne.s32.totalorder %s202, %s204
      %p211 = scmp.eq.s32.totalorder %s19, 1
      %p212 = por %p210, %p211
      %p213 = scmp.ne.s32.totalorder %s204, %s205
      %p214 = scmp.eq.s32.totalorder %s19, 0
      %p215 = por %p213, %p214
      %p216 = scmp.ne.s32.totalorder %s204, %s205
      %p217 = scmp.eq.s32.totalorder %s20, 1
      %p218 = por %p216, %p217
      %p220 = scmp.ne.s32.totalorder %s205, %s219
      %p221 = scmp.eq.s32.totalorder %s20, 0
      %p222 = por %p220, %p221
      %p223 = scmp.le.s32.totalorder 1, %s14
      %p224 = scmp.lt.s32.totalorder %s14, 3
      %p225 = pnand %p223, %p224
      %p226 = pneg %p225
      // Predicated region
      $region9: #{bilstm_forward.3} parent=5 // pred_check
        _
      $region10: #{bilstm_forward.3} parent=5 // pred_check_branch
        %228 = sbr.rel (%p225) target = $region12
      $region11: #{bilstm_forward.3} parent=5 // pred_region
        %s229 = ssub.s32 %s14, 1
        // Predicated region
        $region13: #{bilstm_forward.3} parent=11 // pred_check
          %p230 = pneg %p89
        $region14: #{bilstm_forward.3} parent=11 // pred_check_branch
          %232 = sbr.rel (%p230) target = $region16
        $region15: #{bilstm_forward.3} parent=11 // pred_region
          _
        $region16: #{bilstm_forward.3} parent=11 // pred_fallthru
          _
        // Predicated region
        $region17: #{bilstm_forward.3} parent=11 // pred_check
          %p233 = pneg %p110
        $region18: #{bilstm_forward.3} parent=11 // pred_check_branch
          %235 = sbr.rel (%p233) target = $region20
        $region19: #{bilstm_forward.3} parent=11 // pred_region
          _
        $region20: #{bilstm_forward.3} parent=11 // pred_fallthru
          _
        // Predicated region
        $region21: #{bilstm_forward.3} parent=11 // pred_check
          %p236 = pneg %p131
        $region22: #{bilstm_forward.3} parent=11 // pred_check_branch
          %238 = sbr.rel (%p236) target = $region24
        $region23: #{bilstm_forward.3} parent=11 // pred_region
          _
        $region24: #{bilstm_forward.3} parent=11 // pred_fallthru
          _
        // Predicated region
        $region25: #{bilstm_forward.3} parent=11 // pred_check
          %p239 = pneg %p152
        $region26: #{bilstm_forward.3} parent=11 // pred_check_branch
          %241 = sbr.rel (%p239) target = $region28
        $region27: #{bilstm_forward.3} parent=11 // pred_region
          _
        $region28: #{bilstm_forward.3} parent=11 // pred_fallthru
          _
        // Predicated region
        $region29: #{bilstm_forward.3} parent=11 // pred_check
          %p242 = pneg %p173
        $region30: #{bilstm_forward.3} parent=11 // pred_check_branch
          %244 = sbr.rel (%p242) target = $region32
        $region31: #{bilstm_forward.3} parent=11 // pred_region
          _
        $region32: #{bilstm_forward.3} parent=11 // pred_fallthru
          _
        // Predicated region
        $region33: #{bilstm_forward.3} parent=11 // pred_check
          %p245 = pneg %p194
        $region34: #{bilstm_forward.3} parent=11 // pred_check_branch
          %247 = sbr.rel (%p245) target = $region36
        $region35: #{bilstm_forward.3} parent=11 // pred_region
          _
        $region36: #{bilstm_forward.3} parent=11 // pred_fallthru
          _
      $region12: #{bilstm_forward.3} parent=5 // pred_fallthru
        _
      %p248 = scmp.lt.s32.totalorder %s14, 2
      // Predicated region
      $region37: #{bilstm_forward.3} parent=5 // pred_check
        %p249 = pneg %p248
      $region38: #{bilstm_forward.3} parent=5 // pred_check_branch
        %251 = sbr.rel (%p249) target = $region40
      $region39: #{bilstm_forward.3} parent=5 // pred_region
        // Predicated region
        $region41: #{bilstm_forward.3} parent=39 // pred_check
          %p252 = pneg %p34
        $region42: #{bilstm_forward.3} parent=39 // pred_check_branch
          %254 = sbr.rel (%p252) target = $region44
        $region43: #{bilstm_forward.3} parent=39 // pred_region
          %s255 = sand.u32 %s24, 1
          %s256 = sand.u32 %s24, 1
          %s257 = smul.addr %s256, 32
          %s258 = scalar_lea.vmem [#allocation8], %s257
          %s259 = smul.u32 4, %s14
          %s260 = smul.addr %s259, 2
          %s261 = smul.addr %s260, 8
          %s262 = scalar_lea.vmem %s0, %s261
          // Predicated region
          $region45: #{bilstm_forward.3} parent=43 // pred_check
            _
          $region46: #{bilstm_forward.3} parent=43 // pred_check_branch
            %264 = sbr.rel (0) target = $region48
          $region47: #{bilstm_forward.3} parent=43 // pred_region
            // Predicated region
            $region49: #{bilstm_forward.3} parent=47 // pred_check
              _
            $region50: #{bilstm_forward.3} parent=47 // pred_check_branch
              %266 = sbr.rel (0) target = $region52
            $region51: #{bilstm_forward.3} parent=47 // pred_region
              // Predicated region
              $region64: #{bilstm_forward.3} parent=51 // pred_check
                _
              $region65: #{bilstm_forward.3} parent=51 // pred_check_branch
                %288 = sbr.rel (0) target = $region67
              $region66: #{bilstm_forward.3} parent=51 // pred_region
                loop: start=0, step=1, limit=1
                $region68: #{bilstm_forward.3} parent=66 // loop_pre_header
                  _
                $region69: #{bilstm_forward.3} parent=66 // loop_header
                  %s290 = sphi 0, %s294
                  %p291 = scmp.ge.s32.totalorder %s290, 1
                  %s295 = sphi %s262, %s262
                  %s296 = sphi %s258, %s258
                $region70: #{bilstm_forward.3} parent=66 // loop_header_branch
                  %293 = sbr.rel (%p291) target = $region74
                $region71: #{bilstm_forward.3} parent=66 // loop_body
                  %v297 = vld [vmem:[%s295] sm:$0xff]
                  %298 = vst [vmem:[%s296] sm:$0xff] %v297
                  %v299 = vld [vmem:[%s295 + $0x10] sm:$0xff]
                  %300 = vst [vmem:[%s296 + $0x8] sm:$0xff] %v299
                  %v301 = vld [vmem:[%s295 + $0x20] sm:$0xff]
                  %302 = vst [vmem:[%s296 + $0x10] sm:$0xff] %v301
                  %v303 = vld [vmem:[%s295 + $0x30] sm:$0xff]
                  %304 = vst [vmem:[%s296 + $0x18] sm:$0xff] %v303
                $region72: #{bilstm_forward.3} parent=66 // loop_footer
                  %s294 = sadd.s32 1, %s290
                $region73: #{bilstm_forward.3} parent=66 // loop_footer_branch
                  %289 = sbr.rel target = $region69
                $region74: #{bilstm_forward.3} parent=66 // loop_exit
                  _
              $region67: #{bilstm_forward.3} parent=51 // pred_fallthru
                _
              // Predicated region
              $region75: #{bilstm_forward.3} parent=51 // pred_check
                _
              $region76: #{bilstm_forward.3} parent=51 // pred_check_branch
                %306 = sbr.rel target = $region78
              $region77: #{bilstm_forward.3} parent=51 // pred_region
                _
              $region78: #{bilstm_forward.3} parent=51 // pred_fallthru
                _
            $region52: #{bilstm_forward.3} parent=47 // pred_fallthru
              _
            // Predicated region
            $region53: #{bilstm_forward.3} parent=47 // pred_check
              _
            $region54: #{bilstm_forward.3} parent=47 // pred_check_branch
              %268 = sbr.rel target = $region56
            $region55: #{bilstm_forward.3} parent=47 // pred_region
              %s270 = ssub.s32 256, 1
              loop: start=0, step=1, limit=1
              $region57: #{bilstm_forward.3} parent=55 // loop_pre_header
                _
              $region58: #{bilstm_forward.3} parent=55 // loop_header
                %s272 = sphi 0, %s276
                %p273 = scmp.ge.s32.totalorder %s272, 1
                %s277 = sphi %s262, %s262
                %s278 = sphi %s258, %s258
              $region59: #{bilstm_forward.3} parent=55 // loop_header_branch
                %275 = sbr.rel (%p273) target = $region63
              $region60: #{bilstm_forward.3} parent=55 // loop_body
                %v279 = vld [vmem:[%s277] sm:%s270]
                %280 = vst [vmem:[%s278] sm:%s270] %v279
                %v281 = vld [vmem:[%s277 + $0x10] sm:%s270]
                %282 = vst [vmem:[%s278 + $0x8] sm:%s270] %v281
                %v283 = vld [vmem:[%s277 + $0x20] sm:%s270]
                %284 = vst [vmem:[%s278 + $0x10] sm:%s270] %v283
                %v285 = vld [vmem:[%s277 + $0x30] sm:%s270]
                %286 = vst [vmem:[%s278 + $0x18] sm:%s270] %v285
              $region61: #{bilstm_forward.3} parent=55 // loop_footer
                %s276 = sadd.s32 1, %s272
              $region62: #{bilstm_forward.3} parent=55 // loop_footer_branch
                %271 = sbr.rel target = $region58
              $region63: #{bilstm_forward.3} parent=55 // loop_exit
                _
            $region56: #{bilstm_forward.3} parent=47 // pred_fallthru
              _
          $region48: #{bilstm_forward.3} parent=43 // pred_fallthru
            _
          %307 = vnop
        $region44: #{bilstm_forward.3} parent=39 // pred_fallthru
          _
        // Predicated region
        $region79: #{bilstm_forward.3} parent=39 // pred_check
          %p308 = pneg %p62
        $region80: #{bilstm_forward.3} parent=39 // pred_check_branch
          %310 = sbr.rel (%p308) target = $region82
        $region81: #{bilstm_forward.3} parent=39 // pred_region
          %s311 = sand.u32 %s52, 1
          %s312 = sand.u32 %s52, 1
          %s313 = smul.addr %s312, 32
          %s314 = scalar_lea.vmem [#allocation9], %s313
          %s315 = ssub.s32 1, %s14
          %s316 = smul.u32 4, %s315
          %s317 = smul.addr %s316, 2
          %s318 = sadd.s32 1, %s317
          %s319 = smul.addr %s318, 8
          %s320 = scalar_lea.vmem %s1, %s319
          // Predicated region
          $region83: #{bilstm_forward.3} parent=81 // pred_check
            _
          $region84: #{bilstm_forward.3} parent=81 // pred_check_branch
            %322 = sbr.rel (0) target = $region86
          $region85: #{bilstm_forward.3} parent=81 // pred_region
            // Predicated region
            $region87: #{bilstm_forward.3} parent=85 // pred_check
              _
            $region88: #{bilstm_forward.3} parent=85 // pred_check_branch
              %324 = sbr.rel (0) target = $region90
            $region89: #{bilstm_forward.3} parent=85 // pred_region
              // Predicated region
              $region102: #{bilstm_forward.3} parent=89 // pred_check
                _
              $region103: #{bilstm_forward.3} parent=89 // pred_check_branch
                %346 = sbr.rel (0) target = $region105
              $region104: #{bilstm_forward.3} parent=89 // pred_region
                loop: start=0, step=1, limit=1
                $region106: #{bilstm_forward.3} parent=104 // loop_pre_header
                  _
                $region107: #{bilstm_forward.3} parent=104 // loop_header
                  %s348 = sphi 0, %s352
                  %p349 = scmp.ge.s32.totalorder %s348, 1
                  %s353 = sphi %s320, %s320
                  %s354 = sphi %s314, %s314
                $region108: #{bilstm_forward.3} parent=104 // loop_header_branch
                  %351 = sbr.rel (%p349) target = $region112
                $region109: #{bilstm_forward.3} parent=104 // loop_body
                  %v355 = vld [vmem:[%s353] sm:$0xff]
                  %356 = vst [vmem:[%s354] sm:$0xff] %v355
                  %v357 = vld [vmem:[%s353 + $0x10] sm:$0xff]
                  %358 = vst [vmem:[%s354 + $0x8] sm:$0xff] %v357
                  %v359 = vld [vmem:[%s353 + $0x20] sm:$0xff]
                  %360 = vst [vmem:[%s354 + $0x10] sm:$0xff] %v359
                  %v361 = vld [vmem:[%s353 + $0x30] sm:$0xff]
                  %362 = vst [vmem:[%s354 + $0x18] sm:$0xff] %v361
                $region110: #{bilstm_forward.3} parent=104 // loop_footer
                  %s352 = sadd.s32 1, %s348
                $region111: #{bilstm_forward.3} parent=104 // loop_footer_branch
                  %347 = sbr.rel target = $region107
                $region112: #{bilstm_forward.3} parent=104 // loop_exit
                  _
              $region105: #{bilstm_forward.3} parent=89 // pred_fallthru
                _
              // Predicated region
              $region113: #{bilstm_forward.3} parent=89 // pred_check
                _
              $region114: #{bilstm_forward.3} parent=89 // pred_check_branch
                %364 = sbr.rel target = $region116
              $region115: #{bilstm_forward.3} parent=89 // pred_region
                _
              $region116: #{bilstm_forward.3} parent=89 // pred_fallthru
                _
            $region90: #{bilstm_forward.3} parent=85 // pred_fallthru
              _
            // Predicated region
            $region91: #{bilstm_forward.3} parent=85 // pred_check
              _
            $region92: #{bilstm_forward.3} parent=85 // pred_check_branch
              %326 = sbr.rel target = $region94
            $region93: #{bilstm_forward.3} parent=85 // pred_region
              %s328 = ssub.s32 256, 1
              loop: start=0, step=1, limit=1
              $region95: #{bilstm_forward.3} parent=93 // loop_pre_header
                _
              $region96: #{bilstm_forward.3} parent=93 // loop_header
                %s330 = sphi 0, %s334
                %p331 = scmp.ge.s32.totalorder %s330, 1
                %s335 = sphi %s320, %s320
                %s336 = sphi %s314, %s314
              $region97: #{bilstm_forward.3} parent=93 // loop_header_branch
                %333 = sbr.rel (%p331) target = $region101
              $region98: #{bilstm_forward.3} parent=93 // loop_body
                %v337 = vld [vmem:[%s335] sm:%s328]
                %338 = vst [vmem:[%s336] sm:%s328] %v337
                %v339 = vld [vmem:[%s335 + $0x10] sm:%s328]
                %340 = vst [vmem:[%s336 + $0x8] sm:%s328] %v339
                %v341 = vld [vmem:[%s335 + $0x20] sm:%s328]
                %342 = vst [vmem:[%s336 + $0x10] sm:%s328] %v341
                %v343 = vld [vmem:[%s335 + $0x30] sm:%s328]
                %344 = vst [vmem:[%s336 + $0x18] sm:%s328] %v343
              $region99: #{bilstm_forward.3} parent=93 // loop_footer
                %s334 = sadd.s32 1, %s330
              $region100: #{bilstm_forward.3} parent=93 // loop_footer_branch
                %329 = sbr.rel target = $region96
              $region101: #{bilstm_forward.3} parent=93 // loop_exit
                _
            $region94: #{bilstm_forward.3} parent=85 // pred_fallthru
              _
          $region86: #{bilstm_forward.3} parent=81 // pred_fallthru
            _
          %365 = vnop
        $region82: #{bilstm_forward.3} parent=39 // pred_fallthru
          _
      $region40: #{bilstm_forward.3} parent=5 // pred_fallthru
        _
      %p366 = scmp.le.s32.totalorder 1, %s14
      %p367 = scmp.lt.s32.totalorder %s14, 3
      %p368 = pnand %p366, %p367
      %p369 = pneg %p368
      // Predicated region
      $region117: #{bilstm_forward.3} parent=5 // pred_check
        _
      $region118: #{bilstm_forward.3} parent=5 // pred_check_branch
        %371 = sbr.rel (%p368) target = $region120
      $region119: #{bilstm_forward.3} parent=5 // pred_region
        %s372 = ssub.s32 %s14, 1
        %s373 = sand.u32 %s27, 1
        %s374 = sand.u32 %s27, 1
        %s375 = smul.addr %s374, 32
        %s376 = scalar_lea.vmem [#allocation8], %s375
        // Predicated region
        $region121: #{bilstm_forward.3} parent=119 // pred_check
          %p377 = pneg %p40
        $region122: #{bilstm_forward.3} parent=119 // pred_check_branch
          %379 = sbr.rel (%p377) target = $region124
        $region123: #{bilstm_forward.3} parent=119 // pred_region
          _
        $region124: #{bilstm_forward.3} parent=119 // pred_fallthru
          _
        %s380 = sand.u32 %s55, 1
        %s381 = sand.u32 %s55, 1
        %s382 = smul.addr %s381, 32
        %s383 = scalar_lea.vmem [#allocation9], %s382
        // Predicated region
        $region125: #{bilstm_forward.3} parent=119 // pred_check
          %p384 = pneg %p68
        $region126: #{bilstm_forward.3} parent=119 // pred_check_branch
          %386 = sbr.rel (%p384) target = $region128
        $region127: #{bilstm_forward.3} parent=119 // pred_region
          _
        $region128: #{bilstm_forward.3} parent=119 // pred_fallthru
          _
        %s387 = sand.u32 %s27, 1
        %s388 = sand.u32 %s27, 1
        %s389 = smul.addr %s388, 32
        %s390 = scalar_lea.vmem [#allocation8], %s389
        %p391 = pneg %p40
        %p392 = pneg %p37
        %s393 = sand.u32 %s55, 1
        %s394 = sand.u32 %s55, 1
        %s395 = smul.addr %s394, 32
        %s396 = scalar_lea.vmem [#allocation9], %s395
        %p397 = pneg %p68
        %p398 = pneg %p65
        %p399 = pneg %p89
        %p400 = pneg %p86
        %p401 = pneg %p110
        %p402 = pneg %p107
        %p403 = pneg %p131
        %p404 = pneg %p128
        %p405 = pneg %p152
        %p406 = pneg %p149
        %p407 = pneg %p173
        %p408 = pneg %p170
        %p409 = pneg %p194
        %p410 = pneg %p191
        %p411 = pneg %p215
        %p412 = pneg %p212
        %s413 = smul.u32 4, %s19
        %s414 = ssub.s32 1, %s19
        %s415 = smul.u32 4, %s414
        %p417 = scmp.eq.s32.totalorder %s19, 0
        // Predicated region
        $region129: #{bilstm_forward.3} parent=119 // pred_check
          %p418 = pneg %p417
        $region130: #{bilstm_forward.3} parent=119 // pred_check_branch
          %420 = sbr.rel (%p418) target = $region132
        $region131: #{bilstm_forward.3} parent=119 // pred_region
          %vm421 = vcmask 261120
          %422 = vst.msk [vmem:[#allocation2] sm:$0xff] %vm421, 0.0
          %423 = vst.msk [vmem:[#allocation3] sm:$0xff] %vm421, 0.0
          %424 = vst.msk [vmem:[#allocation4] sm:$0xff] %vm421, 0.0
          %425 = vst.msk [vmem:[#allocation5] sm:$0xff] %vm421, 0.0
          %426 = vst.msk [vmem:[#allocation6] sm:$0xff] %vm421, 0.0
          %427 = vst.msk [vmem:[#allocation7] sm:$0xff] %vm421, 0.0
        $region132: #{bilstm_forward.3} parent=119 // pred_fallthru
          _
        %v428 = vld [vmem:[%s4] sm:$0xff]
        %v429 = vld [vmem:[%s2] sm:$0xf]
        %v430 = vld [vmem:[%s2 + $0x4] sm:$0xf]
        %v431 = vld [vmem:[%s2 + $0x8] sm:$0xf]
        %v432 = vld [vmem:[%s2 + $0xc] sm:$0xf]
        %v433 = vld [vmem:[%s3] sm:$0xf]
        %v434 = vld [vmem:[%s3 + $0x4] sm:$0xf]
        %v435 = vld [vmem:[%s3 + $0x8] sm:$0xf]
        %v436 = vld [vmem:[%s3 + $0xc] sm:$0xf]
        %s437 = smul.u32 %s19, 4
        %s438 = ssub.s32 7, %s437
        %v439 = vld [vmem:[#allocation2] sm:$0xff]
        %v440 = vld [vmem:[#allocation3] sm:$0xff]
        %v441 = vld [vmem:[#allocation4] sm:$0xff]
        %v442 = vld [vmem:[#allocation5] sm:$0xff]
        %v443 = vpack.c.bf16 %v439, %v439
        %v444 = vld [vmem:[%s376] sm:$0xff]
        %v449 = vunpack.c.l.b16 %v429
        %v450 = vunpack.c.l.b16 %v430
        %v451 = vunpack.c.l.b16 %v431
        %v452 = vunpack.c.l.b16 %v432
        %v453 = vpack.c.b16 %v450, %v449
        %v454 = vpack.c.b16 %v452, %v451
        %vm457 = vcmask 261120
        %v459 = vsel %vm457, %v443, 0
        %461 = vmatpush.bf16.msra.mxu0 0
        %462 = vmatpush.bf16.msra.mxu0 0
        %463 = vmatpush.bf16.msra.mxu0 0
        %464 = vmatpush.bf16.msra.mxu0 0
        %465 = vmatpush.bf16.msra.mxu0 0
        %466 = vmatpush.bf16.msra.mxu0 0
        %467 = vmatpush.bf16.msra.mxu0 %v454
        %468 = vmatpush.bf16.msra.mxu0 %v453
        %469 = vmatmul.bf16.gmra.mxu0 %v459
        %v470 = vpop.f32.mrf.mxu0
        %v471 = vadd.f32 %v444, %v470
        %v472 = vpop.f32.mrf.mxu0
        %473 = vdwg.mxu0
        %v474 = vpack.c.bf16 %v441, %v441
        %s475 = scalar_lea.vmem %s383, 24 [#allocation9]
        %v476 = vld [vmem:[%s475] sm:$0xff]
        %v481 = vunpack.c.l.b16 %v433
        %v482 = vunpack.c.l.b16 %v434
        %v483 = vunpack.c.l.b16 %v435
        %v484 = vunpack.c.l.b16 %v436
        %v485 = vpack.c.b16 %v482, %v481
        %v486 = vpack.c.b16 %v484, %v483
        %v490 = vsel %vm457, %v474, 0
        %492 = vmatpush.bf16.msra.mxu0 0
        %493 = vmatpush.bf16.msra.mxu0 0
        %494 = vmatpush.bf16.msra.mxu0 0
        %495 = vmatpush.bf16.msra.mxu0 0
        %496 = vmatpush.bf16.msra.mxu0 0
        %497 = vmatpush.bf16.msra.mxu0 0
        %498 = vmatpush.bf16.msra.mxu0 %v486
        %499 = vmatpush.bf16.msra.mxu0 %v485
        %500 = vmatmul.bf16.gmra.mxu0 %v490
        %v501 = vpop.f32.mrf.mxu0
        %v502 = vadd.f32 %v476, %v501
        %v503 = vpop.f32.mrf.mxu0
        %504 = vdwg.mxu0
        %v505 = vxor.u32 %v471, 2147483648
        %v506 = vmul.f32 %v505, 1.442695
        %v507 = vpow.pop %v506
        %v508 = vadd.f32 %v507, 1.0
        %v509 = vrcp.pop %v508
        %v510 = vmul.f32 %v508, %v509
        %v511 = vsub.f32 1.0, %v510
        %v512 = vmul.f32 %v509, %v511
        %v513 = vadd.f32 %v509, %v512
        %vm514 = vweird.f32 %v508
        %vm515 = vweird.f32 %v509
        %vm516 = vmor %vm514, %vm515
        %v517 = vsel %vm516, %v509, %v513
        %v518 = vand.u32 2147483647, %v508
        %vm519 = vcmp.eq.f32.partialorder %v518, 8.507059e+37
        %v520 = vand.u32 %v508, 2147483648
        %v521 = vor.u32 1.1754944e-38, %v520
        %v522 = vsel %vm519, %v521, %v517
        %v523 = vmul.f32 1.0, %v522
        %v524 = vtanh.pop %v471
        %526 = vrot.lane.b32.xlu0 %v440, 32
        %v527 = vpop.permute.xlu0 %526
        %v529 = vmul.f32 %v523, %v527
        %531 = vrot.lane.b32.xlu0 %v524, 32
        %v532 = vpop.permute.xlu0 %531
        %v534 = vmul.f32 %v523, %v532
        %536 = vrot.lane.b32.xlu0 %v534, 32
        %v537 = vpop.permute.xlu0 %536
        %v539 = vadd.f32 %v529, %v537
        %v540 = vtanh.pop %v539
        %542 = vrot.lane.b32.xlu0 %v540, 32
        %v543 = vpop.permute.xlu0 %542
        %v545 = vmul.f32 %v523, %v543
        %v546 = vxor.u32 %v502, 2147483648
        %v547 = vmul.f32 %v546, 1.442695
        %v548 = vpow.pop %v547
        %v549 = vadd.f32 %v548, 1.0
        %v550 = vrcp.pop %v549
        %v551 = vmul.f32 %v549, %v550
        %v552 = vsub.f32 1.0, %v551
        %v553 = vmul.f32 %v550, %v552
        %v554 = vadd.f32 %v550, %v553
        %vm555 = vweird.f32 %v549
        %vm556 = vweird.f32 %v550
        %vm557 = vmor %vm555, %vm556
        %v558 = vsel %vm557, %v550, %v554
        %v559 = vand.u32 2147483647, %v549
        %vm560 = vcmp.eq.f32.partialorder %v559, 8.507059e+37
        %v561 = vand.u32 %v549, 2147483648
        %v562 = vor.u32 1.1754944e-38, %v561
        %v563 = vsel %vm560, %v562, %v558
        %v564 = vmul.f32 1.0, %v563
        %v565 = vtanh.pop %v502
        %567 = vrot.lane.b32.xlu0 %v442, 32
        %v568 = vpop.permute.xlu0 %567
        %v570 = vmul.f32 %v564, %v568
        %572 = vrot.lane.b32.xlu0 %v565, 32
        %v573 = vpop.permute.xlu0 %572
        %v575 = vmul.f32 %v564, %v573
        %577 = vrot.lane.b32.xlu0 %v575, 32
        %v578 = vpop.permute.xlu0 %577
        %v580 = vadd.f32 %v570, %v578
        %v581 = vtanh.pop %v580
        %583 = vrot.lane.b32.xlu0 %v581, 32
        %v584 = vpop.permute.xlu0 %583
        %v586 = vmul.f32 %v564, %v584
        %v587 = vstv %s437
        %vm588 = vcmp.lt.s32.totalorder %v587, %v428
        %v589 = vstv %s438
        %vm590 = vcmp.lt.s32.totalorder %v589, %v428
        %v591 = vsel %vm588, 1, 0
        %592 = vset.pattern.permute.xlu0 0
        %593 = vperm.xlu0 %592, %v591
        %v594 = vpop.permute.xlu0 %593
        %vm595 = vcmp.eq.s32.totalorder %v594, 1
        %597 = vrot.lane.b32.xlu0 %v439, 64
        %v598 = vpop.permute.xlu0 %597
        %v600 = vsel %vm595, %v545, %v598
        %602 = vrot.lane.b32.xlu0 %v600, 64
        %v603 = vpop.permute.xlu0 %602
        %605 = vst.msk [vmem:[#allocation2] sm:$0xff] %vm457, %v603
        %v606 = vsel %vm595, %v539, %v527
        %608 = vrot.lane.b32.xlu0 %v606, 96
        %v609 = vpop.permute.xlu0 %608
        %611 = vst.msk [vmem:[#allocation3] sm:$0xff] %vm457, %v609
        %v612 = vsel %vm590, 1, 0
        %613 = vset.pattern.permute.xlu0 0
        %614 = vperm.xlu0 %613, %v612
        %v615 = vpop.permute.xlu0 %614
        %vm616 = vcmp.eq.s32.totalorder %v615, 1
        %618 = vrot.lane.b32.xlu0 %v441, 64
        %v619 = vpop.permute.xlu0 %618
        %v621 = vsel %vm616, %v586, %v619
        %623 = vrot.lane.b32.xlu0 %v621, 64
        %v624 = vpop.permute.xlu0 %623
        %626 = vst.msk [vmem:[#allocation4] sm:$0xff] %vm457, %v624
        %v627 = vsel %vm616, %v580, %v568
        %629 = vrot.lane.b32.xlu0 %v627, 96
        %v630 = vpop.permute.xlu0 %629
        %632 = vst.msk [vmem:[#allocation5] sm:$0xff] %vm457, %v630
        %v633 = vsel %vm595, %v545, 0.0
        %v634 = vsel %vm616, %v586, 0.0
        %v635 = vld [vmem:[#allocation6] sm:$0xff]
        %637 = vrot.lane.b32.xlu0 %v633, 64
        %v638 = vpop.permute.xlu0 %637
        %v640 = vadd.f32 %v635, %v638
        %641 = vst.msk [vmem:[#allocation6] sm:$0xff] %vm457, %v640
        %v642 = vld [vmem:[#allocation7] sm:$0xff]
        %644 = vrot.lane.b32.xlu0 %v634, 64
        %v645 = vpop.permute.xlu0 %644
        %v647 = vadd.f32 %v642, %v645
        %648 = vst.msk [vmem:[#allocation7] sm:$0xff] %vm457, %v647
        %s649 = sadd.s32 %s437, 1
        %s650 = ssub.s32 6, %s437
        %v651 = vld [vmem:[#allocation2] sm:$0xff]
        %v652 = vld [vmem:[#allocation3] sm:$0xff]
        %v653 = vld [vmem:[#allocation4] sm:$0xff]
        %v654 = vld [vmem:[#allocation5] sm:$0xff]
        %v655 = vpack.c.bf16 %v651, %v651
        %s656 = scalar_lea.vmem %s376, 8 [#allocation8]
        %v657 = vld [vmem:[%s656] sm:$0xff]
        %v659 = vsel %vm457, %v655, 0
        %661 = vmatpush.bf16.msra.mxu0 0
        %662 = vmatpush.bf16.msra.mxu0 0
        %663 = vmatpush.bf16.msra.mxu0 0
        %664 = vmatpush.bf16.msra.mxu0 0
        %665 = vmatpush.bf16.msra.mxu0 0
        %666 = vmatpush.bf16.msra.mxu0 0
        %667 = vmatpush.bf16.msra.mxu0 %v454
        %668 = vmatpush.bf16.msra.mxu0 %v453
        %669 = vmatmul.bf16.gmra.mxu0 %v659
        %v670 = vpop.f32.mrf.mxu0
        %v671 = vadd.f32 %v657, %v670
        %v672 = vpop.f32.mrf.mxu0
        %673 = vdwg.mxu0
        %v674 = vpack.c.bf16 %v653, %v653
        %s675 = scalar_lea.vmem %s383, 16 [#allocation9]
        %v676 = vld [vmem:[%s675] sm:$0xff]
        %v678 = vsel %vm457, %v674, 0
        %680 = vmatpush.bf16.msra.mxu0 0
        %681 = vmatpush.bf16.msra.mxu0 0
        %682 = vmatpush.bf16.msra.mxu0 0
        %683 = vmatpush.bf16.msra.mxu0 0
        %684 = vmatpush.bf16.msra.mxu0 0
        %685 = vmatpush.bf16.msra.mxu0 0
        %686 = vmatpush.bf16.msra.mxu0 %v486
        %687 = vmatpush.bf16.msra.mxu0 %v485
        %688 = vmatmul.bf16.gmra.mxu0 %v678
        %v689 = vpop.f32.mrf.mxu0
        %v690 = vadd.f32 %v676, %v689
        %v691 = vpop.f32.mrf.mxu0
        %692 = vdwg.mxu0
        %v693 = vxor.u32 %v671, 2147483648
        %v694 = vmul.f32 %v693, 1.442695
        %v695 = vpow.pop %v694
        %v696 = vadd.f32 %v695, 1.0
        %v697 = vrcp.pop %v696
        %v698 = vmul.f32 %v696, %v697
        %v699 = vsub.f32 1.0, %v698
        %v700 = vmul.f32 %v697, %v699
        %v701 = vadd.f32 %v697, %v700
        %vm702 = vweird.f32 %v696
        %vm703 = vweird.f32 %v697
        %vm704 = vmor %vm702, %vm703
        %v705 = vsel %vm704, %v697, %v701
        %v706 = vand.u32 2147483647, %v696
        %vm707 = vcmp.eq.f32.partialorder %v706, 8.507059e+37
        %v708 = vand.u32 %v696, 2147483648
        %v709 = vor.u32 1.1754944e-38, %v708
        %v710 = vsel %vm707, %v709, %v705
        %v711 = vmul.f32 1.0, %v710
        %v712 = vtanh.pop %v671
        %714 = vrot.lane.b32.xlu0 %v652, 32
        %v715 = vpop.permute.xlu0 %714
        %v717 = vmul.f32 %v711, %v715
        %719 = vrot.lane.b32.xlu0 %v712, 32
        %v720 = vpop.permute.xlu0 %719
        %v722 = vmul.f32 %v711, %v720
        %724 = vrot.lane.b32.xlu0 %v722, 32
        %v725 = vpop.permute.xlu0 %724
        %v727 = vadd.f32 %v717, %v725
        %v728 = vtanh.pop %v727
        %730 = vrot.lane.b32.xlu0 %v728, 32
        %v731 = vpop.permute.xlu0 %730
        %v733 = vmul.f32 %v711, %v731
        %v734 = vxor.u32 %v690, 2147483648
        %v735 = vmul.f32 %v734, 1.442695
        %v736 = vpow.pop %v735
        %v737 = vadd.f32 %v736, 1.0
        %v738 = vrcp.pop %v737
        %v739 = vmul.f32 %v737, %v738
        %v740 = vsub.f32 1.0, %v739
        %v741 = vmul.f32 %v738, %v740
        %v742 = vadd.f32 %v738, %v741
        %vm743 = vweird.f32 %v737
        %vm744 = vweird.f32 %v738
        %vm745 = vmor %vm743, %vm744
        %v746 = vsel %vm745, %v738, %v742
        %v747 = vand.u32 2147483647, %v737
        %vm748 = vcmp.eq.f32.partialorder %v747, 8.507059e+37
        %v749 = vand.u32 %v737, 2147483648
        %v750 = vor.u32 1.1754944e-38, %v749
        %v751 = vsel %vm748, %v750, %v746
        %v752 = vmul.f32 1.0, %v751
        %v753 = vtanh.pop %v690
        %755 = vrot.lane.b32.xlu0 %v654, 32
        %v756 = vpop.permute.xlu0 %755
        %v758 = vmul.f32 %v752, %v756
        %760 = vrot.lane.b32.xlu0 %v753, 32
        %v761 = vpop.permute.xlu0 %760
        %v763 = vmul.f32 %v752, %v761
        %765 = vrot.lane.b32.xlu0 %v763, 32
        %v766 = vpop.permute.xlu0 %765
        %v768 = vadd.f32 %v758, %v766
        %v769 = vtanh.pop %v768
        %771 = vrot.lane.b32.xlu0 %v769, 32
        %v772 = vpop.permute.xlu0 %771
        %v774 = vmul.f32 %v752, %v772
        %v775 = vstv %s649
        %vm776 = vcmp.lt.s32.totalorder %v775, %v428
        %v777 = vstv %s650
        %vm778 = vcmp.lt.s32.totalorder %v777, %v428
        %v779 = vsel %vm776, 1, 0
        %780 = vset.pattern.permute.xlu0 0
        %781 = vperm.xlu0 %780, %v779
        %v782 = vpop.permute.xlu0 %781
        %vm783 = vcmp.eq.s32.totalorder %v782, 1
        %785 = vrot.lane.b32.xlu0 %v651, 64
        %v786 = vpop.permute.xlu0 %785
        %v788 = vsel %vm783, %v733, %v786
        %790 = vrot.lane.b32.xlu0 %v788, 64
        %v791 = vpop.permute.xlu0 %790
        %793 = vst.msk [vmem:[#allocation2] sm:$0xff] %vm457, %v791
        %v794 = vsel %vm783, %v727, %v715
        %796 = vrot.lane.b32.xlu0 %v794, 96
        %v797 = vpop.permute.xlu0 %796
        %799 = vst.msk [vmem:[#allocation3] sm:$0xff] %vm457, %v797
        %v800 = vsel %vm778, 1, 0
        %801 = vset.pattern.permute.xlu0 0
        %802 = vperm.xlu0 %801, %v800
        %v803 = vpop.permute.xlu0 %802
        %vm804 = vcmp.eq.s32.totalorder %v803, 1
        %806 = vrot.lane.b32.xlu0 %v653, 64
        %v807 = vpop.permute.xlu0 %806
        %v809 = vsel %vm804, %v774, %v807
        %811 = vrot.lane.b32.xlu0 %v809, 64
        %v812 = vpop.permute.xlu0 %811
        %814 = vst.msk [vmem:[#allocation4] sm:$0xff] %vm457, %v812
        %v815 = vsel %vm804, %v768, %v756
        %817 = vrot.lane.b32.xlu0 %v815, 96
        %v818 = vpop.permute.xlu0 %817
        %820 = vst.msk [vmem:[#allocation5] sm:$0xff] %vm457, %v818
        %v821 = vsel %vm783, %v733, 0.0
        %v822 = vsel %vm804, %v774, 0.0
        %v823 = vld [vmem:[#allocation6] sm:$0xff]
        %825 = vrot.lane.b32.xlu0 %v821, 64
        %v826 = vpop.permute.xlu0 %825
        %v828 = vadd.f32 %v823, %v826
        %829 = vst.msk [vmem:[#allocation6] sm:$0xff] %vm457, %v828
        %v830 = vld [vmem:[#allocation7] sm:$0xff]
        %832 = vrot.lane.b32.xlu0 %v822, 64
        %v833 = vpop.permute.xlu0 %832
        %v835 = vadd.f32 %v830, %v833
        %836 = vst.msk [vmem:[#allocation7] sm:$0xff] %vm457, %v835
        %s837 = sadd.s32 %s437, 2
        %s838 = ssub.s32 5, %s437
        %v839 = vld [vmem:[#allocation2] sm:$0xff]
        %v840 = vld [vmem:[#allocation3] sm:$0xff]
        %v841 = vld [vmem:[#allocation4] sm:$0xff]
        %v842 = vld [vmem:[#allocation5] sm:$0xff]
        %v843 = vpack.c.bf16 %v839, %v839
        %s844 = scalar_lea.vmem %s376, 16 [#allocation8]
        %v845 = vld [vmem:[%s844] sm:$0xff]
        %v847 = vsel %vm457, %v843, 0
        %849 = vmatpush.bf16.msra.mxu0 0
        %850 = vmatpush.bf16.msra.mxu0 0
        %851 = vmatpush.bf16.msra.mxu0 0
        %852 = vmatpush.bf16.msra.mxu0 0
        %853 = vmatpush.bf16.msra.mxu0 0
        %854 = vmatpush.bf16.msra.mxu0 0
        %855 = vmatpush.bf16.msra.mxu0 %v454
        %856 = vmatpush.bf16.msra.mxu0 %v453
        %857 = vmatmul.bf16.gmra.mxu0 %v847
        %v858 = vpop.f32.mrf.mxu0
        %v859 = vadd.f32 %v845, %v858
        %v860 = vpop.f32.mrf.mxu0
        %861 = vdwg.mxu0
        %v862 = vpack.c.bf16 %v841, %v841
        %s863 = scalar_lea.vmem %s383, 8 [#allocation9]
        %v864 = vld [vmem:[%s863] sm:$0xff]
        %v866 = vsel %vm457, %v862, 0
        %868 = vmatpush.bf16.msra.mxu0 0
        %869 = vmatpush.bf16.msra.mxu0 0
        %870 = vmatpush.bf16.msra.mxu0 0
        %871 = vmatpush.bf16.msra.mxu0 0
        %872 = vmatpush.bf16.msra.mxu0 0
        %873 = vmatpush.bf16.msra.mxu0 0
        %874 = vmatpush.bf16.msra.mxu0 %v486
        %875 = vmatpush.bf16.msra.mxu0 %v485
        %876 = vmatmul.bf16.gmra.mxu0 %v866
        %v877 = vpop.f32.mrf.mxu0
        %v878 = vadd.f32 %v864, %v877
        %v879 = vpop.f32.mrf.mxu0
        %880 = vdwg.mxu0
        %v881 = vxor.u32 %v859, 2147483648
        %v882 = vmul.f32 %v881, 1.442695
        %v883 = vpow.pop %v882
        %v884 = vadd.f32 %v883, 1.0
        %v885 = vrcp.pop %v884
        %v886 = vmul.f32 %v884, %v885
        %v887 = vsub.f32 1.0, %v886
        %v888 = vmul.f32 %v885, %v887
        %v889 = vadd.f32 %v885, %v888
        %vm890 = vweird.f32 %v884
        %vm891 = vweird.f32 %v885
        %vm892 = vmor %vm890, %vm891
        %v893 = vsel %vm892, %v885, %v889
        %v894 = vand.u32 2147483647, %v884
        %vm895 = vcmp.eq.f32.partialorder %v894, 8.507059e+37
        %v896 = vand.u32 %v884, 2147483648
        %v897 = vor.u32 1.1754944e-38, %v896
        %v898 = vsel %vm895, %v897, %v893
        %v899 = vmul.f32 1.0, %v898
        %v900 = vtanh.pop %v859
        %902 = vrot.lane.b32.xlu0 %v840, 32
        %v903 = vpop.permute.xlu0 %902
        %v905 = vmul.f32 %v899, %v903
        %907 = vrot.lane.b32.xlu0 %v900, 32
        %v908 = vpop.permute.xlu0 %907
        %v910 = vmul.f32 %v899, %v908
        %912 = vrot.lane.b32.xlu0 %v910, 32
        %v913 = vpop.permute.xlu0 %912
        %v915 = vadd.f32 %v905, %v913
        %v916 = vtanh.pop %v915
        %918 = vrot.lane.b32.xlu0 %v916, 32
        %v919 = vpop.permute.xlu0 %918
        %v921 = vmul.f32 %v899, %v919
        %v922 = vxor.u32 %v878, 2147483648
        %v923 = vmul.f32 %v922, 1.442695
        %v924 = vpow.pop %v923
        %v925 = vadd.f32 %v924, 1.0
        %v926 = vrcp.pop %v925
        %v927 = vmul.f32 %v925, %v926
        %v928 = vsub.f32 1.0, %v927
        %v929 = vmul.f32 %v926, %v928
        %v930 = vadd.f32 %v926, %v929
        %vm931 = vweird.f32 %v925
        %vm932 = vweird.f32 %v926
        %vm933 = vmor %vm931, %vm932
        %v934 = vsel %vm933, %v926, %v930
        %v935 = vand.u32 2147483647, %v925
        %vm936 = vcmp.eq.f32.partialorder %v935, 8.507059e+37
        %v937 = vand.u32 %v925, 2147483648
        %v938 = vor.u32 1.1754944e-38, %v937
        %v939 = vsel %vm936, %v938, %v934
        %v940 = vmul.f32 1.0, %v939
        %v941 = vtanh.pop %v878
        %943 = vrot.lane.b32.xlu0 %v842, 32
        %v944 = vpop.permute.xlu0 %943
        %v946 = vmul.f32 %v940, %v944
        %948 = vrot.lane.b32.xlu0 %v941, 32
        %v949 = vpop.permute.xlu0 %948
        %v951 = vmul.f32 %v940, %v949
        %953 = vrot.lane.b32.xlu0 %v951, 32
        %v954 = vpop.permute.xlu0 %953
        %v956 = vadd.f32 %v946, %v954
        %v957 = vtanh.pop %v956
        %959 = vrot.lane.b32.xlu0 %v957, 32
        %v960 = vpop.permute.xlu0 %959
        %v962 = vmul.f32 %v940, %v960
        %v963 = vstv %s837
        %vm964 = vcmp.lt.s32.totalorder %v963, %v428
        %v965 = vstv %s838
        %vm966 = vcmp.lt.s32.totalorder %v965, %v428
        %v967 = vsel %vm964, 1, 0
        %968 = vset.pattern.permute.xlu0 0
        %969 = vperm.xlu0 %968, %v967
        %v970 = vpop.permute.xlu0 %969
        %vm971 = vcmp.eq.s32.totalorder %v970, 1
        %973 = vrot.lane.b32.xlu0 %v839, 64
        %v974 = vpop.permute.xlu0 %973
        %v976 = vsel %vm971, %v921, %v974
        %978 = vrot.lane.b32.xlu0 %v976, 64
        %v979 = vpop.permute.xlu0 %978
        %981 = vst.msk [vmem:[#allocation2] sm:$0xff] %vm457, %v979
        %v982 = vsel %vm971, %v915, %v903
        %984 = vrot.lane.b32.xlu0 %v982, 96
        %v985 = vpop.permute.xlu0 %984
        %987 = vst.msk [vmem:[#allocation3] sm:$0xff] %vm457, %v985
        %v988 = vsel %vm966, 1, 0
        %989 = vset.pattern.permute.xlu0 0
        %990 = vperm.xlu0 %989, %v988
        %v991 = vpop.permute.xlu0 %990
        %vm992 = vcmp.eq.s32.totalorder %v991, 1
        %994 = vrot.lane.b32.xlu0 %v841, 64
        %v995 = vpop.permute.xlu0 %994
        %v997 = vsel %vm992, %v962, %v995
        %999 = vrot.lane.b32.xlu0 %v997, 64
        %v1000 = vpop.permute.xlu0 %999
        %1002 = vst.msk [vmem:[#allocation4] sm:$0xff] %vm457, %v1000
        %v1003 = vsel %vm992, %v956, %v944
        %1005 = vrot.lane.b32.xlu0 %v1003, 96
        %v1006 = vpop.permute.xlu0 %1005
        %1008 = vst.msk [vmem:[#allocation5] sm:$0xff] %vm457, %v1006
        %v1009 = vsel %vm971, %v921, 0.0
        %v1010 = vsel %vm992, %v962, 0.0
        %v1011 = vld [vmem:[#allocation6] sm:$0xff]
        %1013 = vrot.lane.b32.xlu0 %v1009, 64
        %v1014 = vpop.permute.xlu0 %1013
        %v1016 = vadd.f32 %v1011, %v1014
        %1017 = vst.msk [vmem:[#allocation6] sm:$0xff] %vm457, %v1016
        %v1018 = vld [vmem:[#allocation7] sm:$0xff]
        %1020 = vrot.lane.b32.xlu0 %v1010, 64
        %v1021 = vpop.permute.xlu0 %1020
        %v1023 = vadd.f32 %v1018, %v1021
        %1024 = vst.msk [vmem:[#allocation7] sm:$0xff] %vm457, %v1023
        %s1025 = sadd.s32 %s437, 3
        %s1026 = ssub.s32 4, %s437
        %v1027 = vld [vmem:[#allocation2] sm:$0xff]
        %v1028 = vld [vmem:[#allocation3] sm:$0xff]
        %v1029 = vld [vmem:[#allocation4] sm:$0xff]
        %v1030 = vld [vmem:[#allocation5] sm:$0xff]
        %v1031 = vpack.c.bf16 %v1027, %v1027
        %s1032 = scalar_lea.vmem %s376, 24 [#allocation8]
        %v1033 = vld [vmem:[%s1032] sm:$0xff]
        %v1035 = vsel %vm457, %v1031, 0
        %1037 = vmatpush.bf16.msra.mxu0 0
        %1038 = vmatpush.bf16.msra.mxu0 0
        %1039 = vmatpush.bf16.msra.mxu0 0
        %1040 = vmatpush.bf16.msra.mxu0 0
        %1041 = vmatpush.bf16.msra.mxu0 0
        %1042 = vmatpush.bf16.msra.mxu0 0
        %1043 = vmatpush.bf16.msra.mxu0 %v454
        %1044 = vmatpush.bf16.msra.mxu0 %v453
        %1045 = vmatmul.bf16.gmra.mxu0 %v1035
        %v1046 = vpop.f32.mrf.mxu0
        %v1047 = vadd.f32 %v1033, %v1046
        %v1048 = vpop.f32.mrf.mxu0
        %1049 = vdwg.mxu0
        %v1050 = vpack.c.bf16 %v1029, %v1029
        %v1051 = vld [vmem:[%s383] sm:$0xff]
        %v1053 = vsel %vm457, %v1050, 0
        %1055 = vmatpush.bf16.msra.mxu0 0
        %1056 = vmatpush.bf16.msra.mxu0 0
        %1057 = vmatpush.bf16.msra.mxu0 0
        %1058 = vmatpush.bf16.msra.mxu0 0
        %1059 = vmatpush.bf16.msra.mxu0 0
        %1060 = vmatpush.bf16.msra.mxu0 0
        %1061 = vmatpush.bf16.msra.mxu0 %v486
        %1062 = vmatpush.bf16.msra.mxu0 %v485
        %1063 = vmatmul.bf16.gmra.mxu0 %v1053
        %v1064 = vpop.f32.mrf.mxu0
        %v1065 = vadd.f32 %v1051, %v1064
        %v1066 = vpop.f32.mrf.mxu0
        %1067 = vdwg.mxu0
        %v1068 = vxor.u32 %v1047, 2147483648
        %v1069 = vmul.f32 %v1068, 1.442695
        %v1070 = vpow.pop %v1069
        %v1071 = vadd.f32 %v1070, 1.0
        %v1072 = vrcp.pop %v1071
        %v1073 = vmul.f32 %v1071, %v1072
        %v1074 = vsub.f32 1.0, %v1073
        %v1075 = vmul.f32 %v1072, %v1074
        %v1076 = vadd.f32 %v1072, %v1075
        %vm1077 = vweird.f32 %v1071
        %vm1078 = vweird.f32 %v1072
        %vm1079 = vmor %vm1077, %vm1078
        %v1080 = vsel %vm1079, %v1072, %v1076
        %v1081 = vand.u32 2147483647, %v1071
        %vm1082 = vcmp.eq.f32.partialorder %v1081, 8.507059e+37
        %v1083 = vand.u32 %v1071, 2147483648
        %v1084 = vor.u32 1.1754944e-38, %v1083
        %v1085 = vsel %vm1082, %v1084, %v1080
        %v1086 = vmul.f32 1.0, %v1085
        %v1087 = vtanh.pop %v1047
        %1089 = vrot.lane.b32.xlu0 %v1028, 32
        %v1090 = vpop.permute.xlu0 %1089
        %v1092 = vmul.f32 %v1086, %v1090
        %1094 = vrot.lane.b32.xlu0 %v1087, 32
        %v1095 = vpop.permute.xlu0 %1094
        %v1097 = vmul.f32 %v1086, %v1095
        %1099 = vrot.lane.b32.xlu0 %v1097, 32
        %v1100 = vpop.permute.xlu0 %1099
        %v1102 = vadd.f32 %v1092, %v1100
        %v1103 = vtanh.pop %v1102
        %1105 = vrot.lane.b32.xlu0 %v1103, 32
        %v1106 = vpop.permute.xlu0 %1105
        %v1108 = vmul.f32 %v1086, %v1106
        %v1109 = vxor.u32 %v1065, 2147483648
        %v1110 = vmul.f32 %v1109, 1.442695
        %v1111 = vpow.pop %v1110
        %v1112 = vadd.f32 %v1111, 1.0
        %v1113 = vrcp.pop %v1112
        %v1114 = vmul.f32 %v1112, %v1113
        %v1115 = vsub.f32 1.0, %v1114
        %v1116 = vmul.f32 %v1113, %v1115
        %v1117 = vadd.f32 %v1113, %v1116
        %vm1118 = vweird.f32 %v1112
        %vm1119 = vweird.f32 %v1113
        %vm1120 = vmor %vm1118, %vm1119
        %v1121 = vsel %vm1120, %v1113, %v1117
        %v1122 = vand.u32 2147483647, %v1112
        %vm1123 = vcmp.eq.f32.partialorder %v1122, 8.507059e+37
        %v1124 = vand.u32 %v1112, 2147483648
        %v1125 = vor.u32 1.1754944e-38, %v1124
        %v1126 = vsel %vm1123, %v1125, %v1121
        %v1127 = vmul.f32 1.0, %v1126
        %v1128 = vtanh.pop %v1065
        %1130 = vrot.lane.b32.xlu0 %v1030, 32
        %v1131 = vpop.permute.xlu0 %1130
        %v1133 = vmul.f32 %v1127, %v1131
        %1135 = vrot.lane.b32.xlu0 %v1128, 32
        %v1136 = vpop.permute.xlu0 %1135
        %v1138 = vmul.f32 %v1127, %v1136
        %1140 = vrot.lane.b32.xlu0 %v1138, 32
        %v1141 = vpop.permute.xlu0 %1140
        %v1143 = vadd.f32 %v1133, %v1141
        %v1144 = vtanh.pop %v1143
        %1146 = vrot.lane.b32.xlu0 %v1144, 32
        %v1147 = vpop.permute.xlu0 %1146
        %v1149 = vmul.f32 %v1127, %v1147
        %v1150 = vstv %s1025
        %vm1151 = vcmp.lt.s32.totalorder %v1150, %v428
        %v1152 = vstv %s1026
        %vm1153 = vcmp.lt.s32.totalorder %v1152, %v428
        %v1154 = vsel %vm1151, 1, 0
        %1155 = vset.pattern.permute.xlu0 0
        %1156 = vperm.xlu0 %1155, %v1154
        %v1157 = vpop.permute.xlu0 %1156
        %vm1158 = vcmp.eq.s32.totalorder %v1157, 1
        %1160 = vrot.lane.b32.xlu0 %v1027, 64
        %v1161 = vpop.permute.xlu0 %1160
        %v1163 = vsel %vm1158, %v1108, %v1161
        %1165 = vrot.lane.b32.xlu0 %v1163, 64
        %v1166 = vpop.permute.xlu0 %1165
        %1168 = vst.msk [vmem:[#allocation2] sm:$0xff] %vm457, %v1166
        %v1169 = vsel %vm1158, %v1102, %v1090
        %1171 = vrot.lane.b32.xlu0 %v1169, 96
        %v1172 = vpop.permute.xlu0 %1171
        %1174 = vst.msk [vmem:[#allocation3] sm:$0xff] %vm457, %v1172
        %v1175 = vsel %vm1153, 1, 0
        %1176 = vset.pattern.permute.xlu0 0
        %1177 = vperm.xlu0 %1176, %v1175
        %v1178 = vpop.permute.xlu0 %1177
        %vm1179 = vcmp.eq.s32.totalorder %v1178, 1
        %1181 = vrot.lane.b32.xlu0 %v1029, 64
        %v1182 = vpop.permute.xlu0 %1181
        %v1184 = vsel %vm1179, %v1149, %v1182
        %1186 = vrot.lane.b32.xlu0 %v1184, 64
        %v1187 = vpop.permute.xlu0 %1186
        %1189 = vst.msk [vmem:[#allocation4] sm:$0xff] %vm457, %v1187
        %v1190 = vsel %vm1179, %v1143, %v1131
        %1192 = vrot.lane.b32.xlu0 %v1190, 96
        %v1193 = vpop.permute.xlu0 %1192
        %1195 = vst.msk [vmem:[#allocation5] sm:$0xff] %vm457, %v1193
        %v1196 = vsel %vm1158, %v1108, 0.0
        %v1197 = vsel %vm1179, %v1149, 0.0
        %v1198 = vld [vmem:[#allocation6] sm:$0xff]
        %1200 = vrot.lane.b32.xlu0 %v1196, 64
        %v1201 = vpop.permute.xlu0 %1200
        %v1203 = vadd.f32 %v1198, %v1201
        %1204 = vst.msk [vmem:[#allocation6] sm:$0xff] %vm457, %v1203
        %v1205 = vld [vmem:[#allocation7] sm:$0xff]
        %1207 = vrot.lane.b32.xlu0 %v1197, 64
        %v1208 = vpop.permute.xlu0 %1207
        %v1210 = vadd.f32 %v1205, %v1208
        %1211 = vst.msk [vmem:[#allocation7] sm:$0xff] %vm457, %v1210
        %p1212 = scmp.eq.s32.totalorder %s19, 1
        // Predicated region
        $region133: #{bilstm_forward.3} parent=119 // pred_check
          %p1213 = pneg %p1212
        $region134: #{bilstm_forward.3} parent=119 // pred_check_branch
          %1215 = sbr.rel (%p1213) target = $region136
        $region135: #{bilstm_forward.3} parent=119 // pred_region
          %v1216 = vcvt.s32.f32 %v428
          %v1217 = vmax.f32 %v1216, 1.0
          %v1218 = vld [vmem:[#allocation6] sm:$0xff]
          %1220 = vset.pattern.permute.xlu0 0
          %1221 = vperm.xlu0 %1220, %v1217
          %v1222 = vpop.permute.xlu0 %1221
          %v1224 = vrcp.pop %v1222
          %v1225 = vmul.f32 %v1222, %v1224
          %v1226 = vsub.f32 1.0, %v1225
          %v1227 = vmul.f32 %v1224, %v1226
          %v1228 = vadd.f32 %v1224, %v1227
          %vm1229 = vweird.f32 %v1222
          %vm1230 = vweird.f32 %v1224
          %vm1231 = vmor %vm1229, %vm1230
          %v1232 = vsel %vm1231, %v1224, %v1228
          %v1233 = vand.u32 2147483647, %v1222
          %vm1234 = vcmp.eq.f32.partialorder %v1233, 8.507059e+37
          %v1235 = vand.u32 %v1222, 2147483648
          %v1236 = vor.u32 1.1754944e-38, %v1235
          %v1237 = vsel %vm1234, %v1236, %v1232
          %v1238 = vmul.f32 %v1218, %v1237
          %v1239 = vld [vmem:[#allocation7] sm:$0xff]
          %v1240 = vmul.f32 %v1239, %v1237
          %v1241 = vld [vmem:[%s5] sm:$0xff]
          %v1242 = vld [vmem:[%s5 + $0x8] sm:$0xff]
          %v1243 = vld [vmem:[%s5 + $0x10] sm:$0xff]
          %v1244 = vld [vmem:[%s5 + $0x18] sm:$0xff]
          %v1245 = vld [vmem:[%s6] sm:$0xff]
          %v1246 = vld [vmem:[%s6 + $0x8] sm:$0xff]
          %v1247 = vld [vmem:[%s6 + $0x10] sm:$0xff]
          %v1248 = vld [vmem:[%s6 + $0x18] sm:$0xff]
          %v1250 = vsel %vm457, %v1240, 0
          %1252 = vmatpush.msra.mxu0 0.0
          %1253 = vmatpush.msra.mxu0 0.0
          %1254 = vmatpush.msra.mxu0 0.0
          %1255 = vmatpush.msra.mxu0 0.0
          %1256 = vmatpush.msra.mxu0 0.0
          %1257 = vmatpush.msra.mxu0 0.0
          %1258 = vmatpush.msra.mxu0 0.0
          %1259 = vmatpush.msra.mxu0 0.0
          %1260 = vmatpush.msra.mxu0 0.0
          %1261 = vmatpush.msra.mxu0 0.0
          %1262 = vmatpush.msra.mxu0 0.0
          %1263 = vmatpush.msra.mxu0 0.0
          %1264 = vmatpush.msra.mxu0 %v1248
          %1265 = vmatpush.msra.mxu0 %v1247
          %1266 = vmatpush.msra.mxu0 %v1246
          %1267 = vmatpush.msra.mxu0 %v1245
          %1268 = vmatmul.f32.gmra.mxu0 %v1250
          %v1269 = vpop.f32.mrf.mxu0
          %v1270 = vadd.f32 0.0, %v1269
          %1271 = vdwg.mxu0
          %v1273 = vsel %vm457, %v1238, 0
          %1275 = vmatpush.msra.mxu0 0.0
          %1276 = vmatpush.msra.mxu0 0.0
          %1277 = vmatpush.msra.mxu0 0.0
          %1278 = vmatpush.msra.mxu0 0.0
          %1279 = vmatpush.msra.mxu0 0.0
          %1280 = vmatpush.msra.mxu0 0.0
          %1281 = vmatpush.msra.mxu0 0.0
          %1282 = vmatpush.msra.mxu0 0.0
          %1283 = vmatpush.msra.mxu0 0.0
          %1284 = vmatpush.msra.mxu0 0.0
          %1285 = vmatpush.msra.mxu0 0.0
          %1286 = vmatpush.msra.mxu0 0.0
          %1287 = vmatpush.msra.mxu0 %v1244
          %1288 = vmatpush.msra.mxu0 %v1243
          %1289 = vmatpush.msra.mxu0 %v1242
          %1290 = vmatpush.msra.mxu0 %v1241
          %1291 = vmatmul.f32.gmra.mxu0 %v1273
          %v1292 = vpop.f32.mrf.mxu0
          %v1293 = vadd.f32 %v1270, %v1292
          %1294 = vdwg.mxu0
          %v1295 = vld [vmem:[%s7] sm:$0x1]
          %v1297 = vperm.slane %v1295, 0
          %v1299 = vadd.f32 %v1293, %v1297
          %vm1300 = vcmask 31744
          %1301 = vst.msk [vmem:[%s8] sm:$0xff] %vm1300, %v1299
        $region136: #{bilstm_forward.3} parent=119 // pred_fallthru
          _
        // Predicated region
        $region137: #{bilstm_forward.3} parent=119 // pred_check
          %p1302 = pneg %p212
        $region138: #{bilstm_forward.3} parent=119 // pred_check_branch
          %1304 = sbr.rel (%p1302) target = $region140
        $region139: #{bilstm_forward.3} parent=119 // pred_region
          _
        $region140: #{bilstm_forward.3} parent=119 // pred_fallthru
          _
        // Predicated region
        $region141: #{bilstm_forward.3} parent=119 // pred_check
          %p1305 = pneg %p212
        $region142: #{bilstm_forward.3} parent=119 // pred_check_branch
          %1307 = sbr.rel (%p1305) target = $region144
        $region143: #{bilstm_forward.3} parent=119 // pred_region
          _
        $region144: #{bilstm_forward.3} parent=119 // pred_fallthru
          _
      $region120: #{bilstm_forward.3} parent=5 // pred_fallthru
        _
      %p1308 = scmp.le.s32.totalorder 2, %s14
      // Predicated region
      $region145: #{bilstm_forward.3} parent=5 // pred_check
        %p1309 = pneg %p1308
      $region146: #{bilstm_forward.3} parent=5 // pred_check_branch
        %1311 = sbr.rel (%p1309) target = $region148
      $region147: #{bilstm_forward.3} parent=5 // pred_region
        %s1312 = ssub.s32 %s14, 2
      $region148: #{bilstm_forward.3} parent=5 // pred_fallthru
        _
    $region6: #{bilstm_forward.3} parent=1 // loop_footer
      %s18 = sadd.s32 1, %s14
    $region7: #{bilstm_forward.3} parent=1 // loop_footer_branch
      %13 = sbr.rel target = $region3
    $region8: #{bilstm_forward.3} parent=1 // loop_exit
      _

</llo_original>
